<compile_context>
chip_gen: v7x
topology: tpu7x:2x2x1
jax: 0.10.0
libtpu: 0.0.40
codegen_flags: <defaults>
</compile_context>

<pallas_src>
import functools
import math

import jax
import jax.numpy as jnp
from jax.experimental import pallas as pl
from jax.experimental.pallas import tpu as pltpu


def _layernorm_f32(v, w_row, b_row, eps=1e-5):
    # torch LayerNorm semantics, computed in float32 (matches the LayerNorm subclass).
    v32 = v.astype(jnp.float32)
    mu = jnp.mean(v32, axis=-1, keepdims=True)
    var = jnp.mean((v32 - mu) ** 2, axis=-1, keepdims=True)
    return (v32 - mu) * jax.lax.rsqrt(var + eps) * w_row + b_row


def _residual_attn_block_kernel(
    x_ref,                   # (BB, S, D)  f32
    ln1w_ref, ln1b_ref,      # (1, D)  f32
    ln2w_ref, ln2b_ref,      # (1, D)  f32
    wqkv_ref, bqkv_ref,      # (D, 3D) bf16 (q third pre-scaled by 1/sqrt(hd)), (1, 3D) f32
    wo_ref, bo_ref,          # (H, hd, D) bf16, (1, D) f32
    wfc_ref, bfc_ref,        # (D, 4D) bf16, (1, 4D) f32
    wproj_ref, bproj_ref,    # (4D, D) bf16, (1, D) f32
    out_ref,                 # (BB, S, D)
    *,
    n_head: int,
    mlp_chunk: int,
):
    BB, S, D = x_ref.shape
    H = n_head
    hd = D // H
    M = BB * S                      # all GEMMs below see M = BB*S rows
    cdt = wqkv_ref.dtype            # bf16 MXU-input dtype (f32 accumulation)

    x = x_ref[...].astype(jnp.float32).reshape(M, D)

    # Hoisted bias loads (avoid re-emitting broadcasts inside loops).
    bqkv = bqkv_ref[...]
    bo = bo_ref[...]
    bproj = bproj_ref[...]

    # ---- LN1 + fused QKV projection over all BB*S rows (one big-M GEMM) -----------
    h = _layernorm_f32(x, ln1w_ref[...], ln1b_ref[...]).astype(cdt)
    qkv = (jnp.dot(h, wqkv_ref[...], preferred_element_type=jnp.float32)
           + bqkv).astype(cdt)                          # (M, 3D) bf16
    qkv3 = qkv.reshape(BB, S, 3 * D)                    # leading-dim split: free

    # ---- multi-head self-attention -------------------------------------------------
    # Heads are a short static loop; each head is a zero-relayout 64-lane column
    # slice of qkv, each matmul is batched over the BB sequences of this block.
    # The 1/sqrt(hd) scale is already folded into the q weights; the per-head
    # output projection (wo_ref[h] is (hd, D)) folds the head concat into the
    # MXU contraction, so ctx is never transposed or concatenated.
    attn_acc = jnp.zeros((M, D), jnp.float32)
    for hh in range(H):
        q_h = qkv3[:, :, 0 * D + hh * hd: 0 * D + (hh + 1) * hd]   # (BB, S, hd)
        k_h = qkv3[:, :, 1 * D + hh * hd: 1 * D + (hh + 1) * hd]
        v_h = qkv3[:, :, 2 * D + hh * hd: 2 * D + (hh + 1) * hd]

        s = jnp.einsum("bqd,bkd->bqk", q_h, k_h,
                       preferred_element_type=jnp.float32)          # (BB, S, S) f32
        s = s - jnp.max(s, axis=-1, keepdims=True)
        e = jnp.exp(s)
        p = e * pl.reciprocal(jnp.sum(e, axis=-1, keepdims=True), approx=True)
        ctx = jnp.einsum("bqk,bkd->bqd", p.astype(cdt), v_h,
                         preferred_element_type=jnp.float32)         # (BB, S, hd) f32

        attn_acc = attn_acc + jnp.dot(ctx.reshape(M, hd).astype(cdt), wo_ref[hh],
                                      preferred_element_type=jnp.float32)
    x1 = x + attn_acc + bo

    # ---- LN2 + MLP (c_fc -> QuickGELU -> c_proj) + residual ------------------------
    h2 = _layernorm_f32(x1, ln2w_ref[...], ln2b_ref[...]).astype(cdt)
    hidden = wfc_ref.shape[1]
    nchunks = hidden // mlp_chunk

    def mlp_step(lo, acc):
        fc = (jnp.dot(h2, wfc_ref[:, pl.ds(lo, mlp_chunk)],
                      preferred_element_type=jnp.float32)
              + bfc_ref[:, pl.ds(lo, mlp_chunk)])
        g = fc * jax.nn.sigmoid(1.702 * fc)              # QuickGELU in f32
        return acc + jnp.dot(g.astype(cdt), wproj_ref[pl.ds(lo, mlp_chunk), :],
                             preferred_element_type=jnp.float32)

    mlp_acc = jnp.zeros((M, D), jnp.float32)
    if nchunks <= 8:
        for c in range(nchunks):                         # few chunks -> static unroll
            mlp_acc = mlp_step(c * mlp_chunk, mlp_acc)
    else:
        # Many chunks (large D): bound vreg live ranges with a fori_loop.
        def body(c, acc):
            return mlp_step(pl.multiple_of(c * mlp_chunk, 128), acc)
        mlp_acc = jax.lax.fori_loop(0, nchunks, body, mlp_acc, unroll=2)

    out = x1 + mlp_acc + bproj
    out_ref[...] = out.reshape(BB, S, D).astype(out_ref.dtype)


def _pick_batch_block(B, S, target_rows=256):
    """#sequences per grid step so the GEMM M dimension is ~target_rows (256 fills
    the v6e/v7x 256-wide MXU; also fine on v5e's 128-wide array)."""
    if S >= target_rows:
        return 1
    bb = max(1, min(B, target_rows // max(S, 1)))
    while B % bb:
        bb -= 1
    return bb


@functools.lru_cache(maxsize=None)
def _build_block_fn(B, S, D, n_head, bb, mlp_chunk, out_dtype_name, vmem_limit):
    hd = D // n_head
    hidden = 4 * D
    w_shapes = [
        (1, D), (1, D), (1, D), (1, D),               # ln1 w/b, ln2 w/b
        (D, 3 * D), (1, 3 * D),                       # w_qkv^T, b_qkv
        (n_head, hd, D), (1, D),                      # w_out^T split per head, b_out
        (D, hidden), (1, hidden),                     # w_fc^T, b_fc
        (hidden, D), (1, D),                          # w_proj^T, b_proj
    ]

    def const_spec(shape):
        # Constant index_map across the grid: the pipeline fetches these once.
        if len(shape) == 2:
            return pl.BlockSpec(shape, lambda i: (0, 0))
        return pl.BlockSpec(shape, lambda i: (0, 0, 0))

    grid_spec = pltpu.PrefetchScalarGridSpec(
        num_scalar_prefetch=0,
        grid=(B // bb,),                               # M-tile (batch-block) axis, parallel
        in_specs=[pl.BlockSpec((bb, S, D), lambda i: (i, 0, 0))]
        + [const_spec(s) for s in w_shapes],
        out_specs=pl.BlockSpec((bb, S, D), lambda i: (i, 0, 0)),
    )
    kernel = functools.partial(_residual_attn_block_kernel,
                               n_head=n_head, mlp_chunk=mlp_chunk)
    return pl.pallas_call(
        kernel,
        out_shape=jax.ShapeDtypeStruct((B, S, D), jnp.dtype(out_dtype_name)),
        grid_spec=grid_spec,
        compiler_params=pltpu.CompilerParams(
            dimension_semantics=("parallel",),
            vmem_limit_bytes=vmem_limit),
    )


def residual_attention_block(x, params, n_head, compute_dtype=jnp.bfloat16):
    """x: [B, S, D] float32 (batch_first).  attn_mask=None path only.
    Returns the [B, S, D] tensor output of the torch block's forward."""
    B, S, D = x.shape
    assert D % n_head == 0
    hd = D // n_head
    hidden = params["w_fc"].shape[0]                       # 4*D
    mlp_chunk = 512 if (hidden > 512 and hidden % 512 == 0) else hidden

    def row(p):                                            # 1D -> (1, N), f32
        return jnp.asarray(p).reshape(1, -1).astype(jnp.float32)

    # Fold the 1/sqrt(hd) attention scale into the q third of the qkv projection.
    scale = 1.0 / math.sqrt(hd)
    w_qkv_t = jnp.asarray(params["w_qkv"]).astype(jnp.float32).T          # (D, 3D)
    w_qkv_t = jnp.concatenate([w_qkv_t[:, :D] * scale, w_qkv_t[:, D:]], axis=1)
    b_qkv = jnp.asarray(params["b_qkv"]).astype(jnp.float32)
    b_qkv = jnp.concatenate([b_qkv[:D] * scale, b_qkv[D:]])

    # Output projection pre-split per head -> (H, hd, D) so the head concat is
    # folded into per-head GEMMs inside the kernel.
    w_out_h = jnp.asarray(params["w_out"]).astype(jnp.float32).T.reshape(n_head, hd, D)

    weights = [
        row(params["ln1_w"]), row(params["ln1_b"]),
        row(params["ln2_w"]), row(params["ln2_b"]),
        w_qkv_t.astype(compute_dtype), b_qkv.reshape(1, -1),
        w_out_h.astype(compute_dtype), row(params["b_out"]),
        jnp.asarray(params["w_fc"]).T.astype(compute_dtype), row(params["b_fc"]),
        jnp.asarray(params["w_proj"]).T.astype(compute_dtype), row(params["b_proj"]),
    ]

    bb = _pick_batch_block(B, S)

    # ---- chip-aware scoped-VMEM sizing ---------------------------------------------
    m_rows = bb * S
    weight_bytes = 2 * sum(int(w.size) * w.dtype.itemsize for w in weights)  # dbl-buffered
    io_bytes = 2 * 2 * bb * S * D * 4                        # x/out tiles, dbl-buffered
    score_bytes = 3 * bb * n_head * S * S * 4                # s / e / p (f32)
    act_bytes = (8 * m_rows * D * 4                          # x, x1, attn, mlp acc, ...
                 + m_rows * 3 * D * 2                        # fused qkv (bf16)
                 + 2 * m_rows * mlp_chunk * 4)               # fc / gelu chunk (f32)
    est = weight_bytes + io_bytes + score_bytes + act_bytes

    try:
        vmem_cap = int(getattr(pltpu.get_tpu_info(), "vmem_capacity_bytes", 64 << 20))
    except Exception:
        vmem_cap = 64 << 20                                  # conservative: v7x per-TC VMEM
    # Never below the largest default scoped limit (32 MiB; v5e default is only
    # 16 MiB), never above ~85% of physical VMEM (64 MiB/TC on v7x).
    vmem_limit = int(min(max(est * 3 // 2, 32 << 20), vmem_cap * 85 // 100))

    fn = _build_block_fn(B, S, D, n_head, bb, mlp_chunk,
                         jnp.dtype(x.dtype).name, vmem_limit)
    return fn(x, *weights)


# ------------------------------- pure-JAX reference -------------------------------
def reference(x, params, n_head):
    B, S, D = x.shape
    hd = D // n_head

    def ln(v, w, b):
        mu = jnp.mean(v, axis=-1, keepdims=True)
        var = jnp.mean((v - mu) ** 2, axis=-1, keepdims=True)
        return (v - mu) / jnp.sqrt(var + 1e-5) * w + b

    h = ln(x, params["ln1_w"], params["ln1_b"])
    qkv = h @ params["w_qkv"].T + params["b_qkv"]
    q, k, v = jnp.split(qkv, 3, axis=-1)
    q = q.reshape(B, S, n_head, hd).transpose(0, 2, 1, 3)
    k = k.reshape(B, S, n_head, hd).transpose(0, 2, 1, 3)
    v = v.reshape(B, S, n_head, hd).transpose(0, 2, 1, 3)
    scores = jnp.einsum("bhqd,bhkd->bhqk", q, k) / (hd ** 0.5)
    p = jax.nn.softmax(scores, axis=-1)
    attn = jnp.einsum("bhqk,bhkd->bhqd", p, v).transpose(0, 2, 1, 3).reshape(B, S, D)
    attn = attn @ params["w_out"].T + params["b_out"]
    x1 = x + attn
    h2 = ln(x1, params["ln2_w"], params["ln2_b"])
    fc = h2 @ params["w_fc"].T + params["b_fc"]
    g = fc * jax.nn.sigmoid(1.702 * fc)
    return x1 + g @ params["w_proj"].T + params["b_proj"]


if __name__ == "__main__":
    B, S, D, n_head = 2, 16, 256, 4   # hd = 64, 4*D = 1024

    key = jax.random.PRNGKey(0)
    keys = jax.random.split(key, 10)
    params = {
        "ln1_w": jnp.ones((D,), jnp.float32),
        "ln1_b": jnp.zeros((D,), jnp.float32),
        "ln2_w": jnp.ones((D,), jnp.float32),
        "ln2_b": jnp.zeros((D,), jnp.float32),
        "w_qkv": 0.05 * jax.random.normal(keys[0], (3 * D, D), jnp.float32),
        "b_qkv": 0.01 * jax.random.normal(keys[1], (3 * D,), jnp.float32),
        "w_out": 0.05 * jax.random.normal(keys[2], (D, D), jnp.float32),
        "b_out": 0.01 * jax.random.normal(keys[3], (D,), jnp.float32),
        "w_fc":  0.05 * jax.random.normal(keys[4], (4 * D, D), jnp.float32),
        "b_fc":  0.01 * jax.random.normal(keys[5], (4 * D,), jnp.float32),
        "w_proj": 0.05 * jax.random.normal(keys[6], (D, 4 * D), jnp.float32),
        "b_proj": 0.01 * jax.random.normal(keys[7], (D,), jnp.float32),
    }
    x = jax.random.normal(keys[8], (B, S, D), jnp.float32)

    out = jax.block_until_ready(residual_attention_block(x, params, n_head))

    ref = reference(x, params, n_head)
    assert out.shape == (B, S, D)
    # bf16 MXU inputs vs fp32 reference -> loosened tolerance.
    max_err = float(jnp.max(jnp.abs(out - ref)))
    assert jnp.allclose(out, ref, atol=5e-2, rtol=5e-2), \
        f"mismatch vs reference (max abs err {max_err})"

    print("KERNEL_OK")
</pallas_src>

<mosaic_0001>
module attributes {stable_mosaic.version = 11 : i64} {
  func.func @_residual_attn_block_kernel(%arg0: i32, %arg1: memref<2x16x256xf32, #tpu.memory_space<vmem>>, %arg2: memref<1x256xf32, #tpu.memory_space<vmem>>, %arg3: memref<1x256xf32, #tpu.memory_space<vmem>>, %arg4: memref<1x256xf32, #tpu.memory_space<vmem>>, %arg5: memref<1x256xf32, #tpu.memory_space<vmem>>, %arg6: memref<256x768xbf16, #tpu.memory_space<vmem>>, %arg7: memref<1x768xf32, #tpu.memory_space<vmem>>, %arg8: memref<4x64x256xbf16, #tpu.memory_space<vmem>>, %arg9: memref<1x256xf32, #tpu.memory_space<vmem>>, %arg10: memref<256x1024xbf16, #tpu.memory_space<vmem>>, %arg11: memref<1x1024xf32, #tpu.memory_space<vmem>>, %arg12: memref<1024x256xbf16, #tpu.memory_space<vmem>>, %arg13: memref<1x256xf32, #tpu.memory_space<vmem>>, %arg14: memref<2x16x256xf32, #tpu.memory_space<vmem>>) attributes {dimension_semantics = [#tpu.dimension_semantics<parallel>], iteration_bounds = array<i64: 1>, scalar_prefetch = 0 : i64, scratch_operands = 0 : i64, tpu.core_type = #tpu.core_type<tc>, window_params = [{transform_indices = @transform_0, window_bounds = array<i64: 2, 16, 256>}, {pipeline_mode = #tpu.pipeline_mode<synchronous>, transform_indices = @transform_1, window_bounds = array<i64: 1, 256>}, {pipeline_mode = #tpu.pipeline_mode<synchronous>, transform_indices = @transform_2, window_bounds = array<i64: 1, 256>}, {pipeline_mode = #tpu.pipeline_mode<synchronous>, transform_indices = @transform_3, window_bounds = array<i64: 1, 256>}, {pipeline_mode = #tpu.pipeline_mode<synchronous>, transform_indices = @transform_4, window_bounds = array<i64: 1, 256>}, {pipeline_mode = #tpu.pipeline_mode<synchronous>, transform_indices = @transform_5, window_bounds = array<i64: 256, 768>}, {pipeline_mode = #tpu.pipeline_mode<synchronous>, transform_indices = @transform_6, window_bounds = array<i64: 1, 768>}, {pipeline_mode = #tpu.pipeline_mode<synchronous>, transform_indices = @transform_7, window_bounds = array<i64: 4, 64, 256>}, {pipeline_mode = #tpu.pipeline_mode<synchronous>, transform_indices = @transform_8, window_bounds = array<i64: 1, 256>}, {pipeline_mode = #tpu.pipeline_mode<synchronous>, transform_indices = @transform_9, window_bounds = array<i64: 256, 1024>}, {pipeline_mode = #tpu.pipeline_mode<synchronous>, transform_indices = @transform_10, window_bounds = array<i64: 1, 1024>}, {pipeline_mode = #tpu.pipeline_mode<synchronous>, transform_indices = @transform_11, window_bounds = array<i64: 1024, 256>}, {pipeline_mode = #tpu.pipeline_mode<synchronous>, transform_indices = @transform_12, window_bounds = array<i64: 1, 256>}, {transform_indices = @transform_13, window_bounds = array<i64: 2, 16, 256>}]} {
    %c0 = arith.constant 0 : index
    %c0_0 = arith.constant 0 : index
    %c0_1 = arith.constant 0 : index
    %0 = vector.load %arg1[%c0, %c0_0, %c0_1] : memref<2x16x256xf32, #tpu.memory_space<vmem>>, vector<2x16x256xf32>
    %1 = vector.shape_cast %0 : vector<2x16x256xf32> to vector<32x256xf32>
    %c0_2 = arith.constant 0 : index
    %c0_3 = arith.constant 0 : index
    %2 = vector.load %arg7[%c0_2, %c0_3] : memref<1x768xf32, #tpu.memory_space<vmem>>, vector<1x768xf32>
    %c0_4 = arith.constant 0 : index
    %c0_5 = arith.constant 0 : index
    %3 = vector.load %arg9[%c0_4, %c0_5] : memref<1x256xf32, #tpu.memory_space<vmem>>, vector<1x256xf32>
    %c0_6 = arith.constant 0 : index
    %c0_7 = arith.constant 0 : index
    %4 = vector.load %arg13[%c0_6, %c0_7] : memref<1x256xf32, #tpu.memory_space<vmem>>, vector<1x256xf32>
    %c0_8 = arith.constant 0 : index
    %c0_9 = arith.constant 0 : index
    %5 = vector.load %arg2[%c0_8, %c0_9] : memref<1x256xf32, #tpu.memory_space<vmem>>, vector<1x256xf32>
    %c0_10 = arith.constant 0 : index
    %c0_11 = arith.constant 0 : index
    %6 = vector.load %arg3[%c0_10, %c0_11] : memref<1x256xf32, #tpu.memory_space<vmem>>, vector<1x256xf32>
    %cst = arith.constant dense<0.000000e+00> : vector<32xf32>
    %7 = vector.multi_reduction <add>, %1, %cst [1] : vector<32x256xf32> to vector<32xf32>
    %8 = vector.shape_cast %7 : vector<32xf32> to vector<32x1xf32>
    %cst_12 = arith.constant 2.560000e+02 : f32
    %9 = vector.broadcast %cst_12 : f32 to vector<32x1xf32>
    %10 = arith.divf %8, %9 : vector<32x1xf32>
    %11 = vector.broadcast %10 : vector<32x1xf32> to vector<32x256xf32>
    %12 = arith.subf %1, %11 : vector<32x256xf32>
    %13 = arith.mulf %12, %12 : vector<32x256xf32>
    %cst_13 = arith.constant dense<0.000000e+00> : vector<32xf32>
    %14 = vector.multi_reduction <add>, %13, %cst_13 [1] : vector<32x256xf32> to vector<32xf32>
    %15 = vector.shape_cast %14 : vector<32xf32> to vector<32x1xf32>
    %cst_14 = arith.constant 2.560000e+02 : f32
    %16 = vector.broadcast %cst_14 : f32 to vector<32x1xf32>
    %17 = arith.divf %15, %16 : vector<32x1xf32>
    %18 = vector.broadcast %10 : vector<32x1xf32> to vector<32x256xf32>
    %19 = arith.subf %1, %18 : vector<32x256xf32>
    %cst_15 = arith.constant 9.99999974E-6 : f32
    %20 = vector.broadcast %cst_15 : f32 to vector<32x1xf32>
    %21 = arith.addf %17, %20 : vector<32x1xf32>
    %22 = math.rsqrt %21 : vector<32x1xf32>
    %23 = vector.broadcast %22 : vector<32x1xf32> to vector<32x256xf32>
    %24 = arith.mulf %19, %23 : vector<32x256xf32>
    %25 = vector.broadcast %5 : vector<1x256xf32> to vector<32x256xf32>
    %26 = arith.mulf %24, %25 : vector<32x256xf32>
    %27 = vector.broadcast %6 : vector<1x256xf32> to vector<32x256xf32>
    %28 = arith.addf %26, %27 : vector<32x256xf32>
    %29 = arith.truncf %28 : vector<32x256xf32> to vector<32x256xbf16>
    %c0_16 = arith.constant 0 : index
    %c0_17 = arith.constant 0 : index
    %30 = vector.load %arg6[%c0_16, %c0_17] : memref<256x768xbf16, #tpu.memory_space<vmem>>, vector<256x768xbf16>
    %cst_18 = arith.constant dense<0.000000e+00> : vector<32x768xf32>
    %31 = tpu.matmul %29, %30, %cst_18 {dimension_numbers = #tpu.dot_dimension_numbers<[1], [0], [0], [1], [0, 0, 1, 1], [], []>} : vector<32x256xbf16>, vector<256x768xbf16>, vector<32x768xf32> -> vector<32x768xf32>
    %32 = vector.broadcast %2 : vector<1x768xf32> to vector<32x768xf32>
    %33 = arith.addf %31, %32 : vector<32x768xf32>
    %34 = arith.truncf %33 : vector<32x768xf32> to vector<32x768xbf16>
    %35 = vector.shape_cast %34 : vector<32x768xbf16> to vector<2x16x768xbf16>
    %cst_19 = arith.constant 0.000000e+00 : f32
    %36 = vector.broadcast %cst_19 : f32 to vector<32x256xf32>
    %37 = vector.extract_strided_slice %35 {offsets = [0, 0, 0], sizes = [2, 16, 64], strides = [1, 1, 1]} : vector<2x16x768xbf16> to vector<2x16x64xbf16>
    %38 = vector.extract_strided_slice %35 {offsets = [0, 0, 256], sizes = [2, 16, 64], strides = [1, 1, 1]} : vector<2x16x768xbf16> to vector<2x16x64xbf16>
    %39 = vector.extract_strided_slice %35 {offsets = [0, 0, 512], sizes = [2, 16, 64], strides = [1, 1, 1]} : vector<2x16x768xbf16> to vector<2x16x64xbf16>
    "tpu.trace_start"() <{level = 10 : i32, message = "bqd,bkd->bqk"}> : () -> ()
    %cst_20 = arith.constant dense<0.000000e+00> : vector<2x16x16xf32>
    %40 = tpu.matmul %37, %38, %cst_20 {dimension_numbers = #tpu.dot_dimension_numbers<[2], [2], [1], [1], [0, 0, 0, 1, 1, 1], [0], [0]>} : vector<2x16x64xbf16>, vector<2x16x64xbf16>, vector<2x16x16xf32> -> vector<2x16x16xf32>
    "tpu.trace_stop"() : () -> ()
    %cst_21 = arith.constant dense<0xFF800000> : vector<2x16xf32>
    %41 = vector.multi_reduction <maximumf>, %40, %cst_21 [2] : vector<2x16x16xf32> to vector<2x16xf32>
    %42 = vector.shape_cast %41 : vector<2x16xf32> to vector<2x16x1xf32>
    %43 = vector.broadcast %42 : vector<2x16x1xf32> to vector<2x16x16xf32>
    %44 = arith.subf %40, %43 : vector<2x16x16xf32>
    %45 = math.exp %44 : vector<2x16x16xf32>
    %cst_22 = arith.constant dense<0.000000e+00> : vector<2x16xf32>
    %46 = vector.multi_reduction <add>, %45, %cst_22 [2] : vector<2x16x16xf32> to vector<2x16xf32>
    %47 = vector.shape_cast %46 : vector<2x16xf32> to vector<2x16x1xf32>
    %48 = tpu.reciprocal %47 {approx = true} : vector<2x16x1xf32> -> vector<2x16x1xf32>
    %49 = vector.broadcast %48 : vector<2x16x1xf32> to vector<2x16x16xf32>
    %50 = arith.mulf %45, %49 : vector<2x16x16xf32>
    %51 = arith.truncf %50 : vector<2x16x16xf32> to vector<2x16x16xbf16>
    "tpu.trace_start"() <{level = 10 : i32, message = "bqk,bkd->bqd"}> : () -> ()
    %cst_23 = arith.constant dense<0.000000e+00> : vector<2x16x64xf32>
    %52 = tpu.matmul %51, %39, %cst_23 {dimension_numbers = #tpu.dot_dimension_numbers<[2], [1], [1], [2], [0, 0, 0, 1, 1, 2], [0], [0]>} : vector<2x16x16xbf16>, vector<2x16x64xbf16>, vector<2x16x64xf32> -> vector<2x16x64xf32>
    "tpu.trace_stop"() : () -> ()
    %53 = vector.shape_cast %52 : vector<2x16x64xf32> to vector<32x64xf32>
    %54 = arith.truncf %53 : vector<32x64xf32> to vector<32x64xbf16>
    %c0_24 = arith.constant 0 : index
    %c0_25 = arith.constant 0 : index
    %c0_26 = arith.constant 0 : index
    %55 = vector.load %arg8[%c0_24, %c0_25, %c0_26] : memref<4x64x256xbf16, #tpu.memory_space<vmem>>, vector<1x64x256xbf16>
    %56 = vector.shape_cast %55 : vector<1x64x256xbf16> to vector<64x256xbf16>
    %cst_27 = arith.constant dense<0.000000e+00> : vector<32x256xf32>
    %57 = tpu.matmul %54, %56, %cst_27 {dimension_numbers = #tpu.dot_dimension_numbers<[1], [0], [0], [1], [0, 0, 1, 1], [], []>} : vector<32x64xbf16>, vector<64x256xbf16>, vector<32x256xf32> -> vector<32x256xf32>
    %58 = arith.addf %36, %57 : vector<32x256xf32>
    %59 = vector.extract_strided_slice %35 {offsets = [0, 0, 64], sizes = [2, 16, 64], strides = [1, 1, 1]} : vector<2x16x768xbf16> to vector<2x16x64xbf16>
    %60 = vector.extract_strided_slice %35 {offsets = [0, 0, 320], sizes = [2, 16, 64], strides = [1, 1, 1]} : vector<2x16x768xbf16> to vector<2x16x64xbf16>
    %61 = vector.extract_strided_slice %35 {offsets = [0, 0, 576], sizes = [2, 16, 64], strides = [1, 1, 1]} : vector<2x16x768xbf16> to vector<2x16x64xbf16>
    "tpu.trace_start"() <{level = 10 : i32, message = "bqd,bkd->bqk"}> : () -> ()
    %cst_28 = arith.constant dense<0.000000e+00> : vector<2x16x16xf32>
    %62 = tpu.matmul %59, %60, %cst_28 {dimension_numbers = #tpu.dot_dimension_numbers<[2], [2], [1], [1], [0, 0, 0, 1, 1, 1], [0], [0]>} : vector<2x16x64xbf16>, vector<2x16x64xbf16>, vector<2x16x16xf32> -> vector<2x16x16xf32>
    "tpu.trace_stop"() : () -> ()
    %cst_29 = arith.constant dense<0xFF800000> : vector<2x16xf32>
    %63 = vector.multi_reduction <maximumf>, %62, %cst_29 [2] : vector<2x16x16xf32> to vector<2x16xf32>
    %64 = vector.shape_cast %63 : vector<2x16xf32> to vector<2x16x1xf32>
    %65 = vector.broadcast %64 : vector<2x16x1xf32> to vector<2x16x16xf32>
    %66 = arith.subf %62, %65 : vector<2x16x16xf32>
    %67 = math.exp %66 : vector<2x16x16xf32>
    %cst_30 = arith.constant dense<0.000000e+00> : vector<2x16xf32>
    %68 = vector.multi_reduction <add>, %67, %cst_30 [2] : vector<2x16x16xf32> to vector<2x16xf32>
    %69 = vector.shape_cast %68 : vector<2x16xf32> to vector<2x16x1xf32>
    %70 = tpu.reciprocal %69 {approx = true} : vector<2x16x1xf32> -> vector<2x16x1xf32>
    %71 = vector.broadcast %70 : vector<2x16x1xf32> to vector<2x16x16xf32>
    %72 = arith.mulf %67, %71 : vector<2x16x16xf32>
    %73 = arith.truncf %72 : vector<2x16x16xf32> to vector<2x16x16xbf16>
    "tpu.trace_start"() <{level = 10 : i32, message = "bqk,bkd->bqd"}> : () -> ()
    %cst_31 = arith.constant dense<0.000000e+00> : vector<2x16x64xf32>
    %74 = tpu.matmul %73, %61, %cst_31 {dimension_numbers = #tpu.dot_dimension_numbers<[2], [1], [1], [2], [0, 0, 0, 1, 1, 2], [0], [0]>} : vector<2x16x16xbf16>, vector<2x16x64xbf16>, vector<2x16x64xf32> -> vector<2x16x64xf32>
    "tpu.trace_stop"() : () -> ()
    %75 = vector.shape_cast %74 : vector<2x16x64xf32> to vector<32x64xf32>
    %76 = arith.truncf %75 : vector<32x64xf32> to vector<32x64xbf16>
    %c1 = arith.constant 1 : index
    %c0_32 = arith.constant 0 : index
    %c0_33 = arith.constant 0 : index
    %77 = vector.load %arg8[%c1, %c0_32, %c0_33] : memref<4x64x256xbf16, #tpu.memory_space<vmem>>, vector<1x64x256xbf16>
    %78 = vector.shape_cast %77 : vector<1x64x256xbf16> to vector<64x256xbf16>
    %cst_34 = arith.constant dense<0.000000e+00> : vector<32x256xf32>
    %79 = tpu.matmul %76, %78, %cst_34 {dimension_numbers = #tpu.dot_dimension_numbers<[1], [0], [0], [1], [0, 0, 1, 1], [], []>} : vector<32x64xbf16>, vector<64x256xbf16>, vector<32x256xf32> -> vector<32x256xf32>
    %80 = arith.addf %58, %79 : vector<32x256xf32>
    %81 = vector.extract_strided_slice %35 {offsets = [0, 0, 128], sizes = [2, 16, 64], strides = [1, 1, 1]} : vector<2x16x768xbf16> to vector<2x16x64xbf16>
    %82 = vector.extract_strided_slice %35 {offsets = [0, 0, 384], sizes = [2, 16, 64], strides = [1, 1, 1]} : vector<2x16x768xbf16> to vector<2x16x64xbf16>
    %83 = vector.extract_strided_slice %35 {offsets = [0, 0, 640], sizes = [2, 16, 64], strides = [1, 1, 1]} : vector<2x16x768xbf16> to vector<2x16x64xbf16>
    "tpu.trace_start"() <{level = 10 : i32, message = "bqd,bkd->bqk"}> : () -> ()
    %cst_35 = arith.constant dense<0.000000e+00> : vector<2x16x16xf32>
    %84 = tpu.matmul %81, %82, %cst_35 {dimension_numbers = #tpu.dot_dimension_numbers<[2], [2], [1], [1], [0, 0, 0, 1, 1, 1], [0], [0]>} : vector<2x16x64xbf16>, vector<2x16x64xbf16>, vector<2x16x16xf32> -> vector<2x16x16xf32>
    "tpu.trace_stop"() : () -> ()
    %cst_36 = arith.constant dense<0xFF800000> : vector<2x16xf32>
    %85 = vector.multi_reduction <maximumf>, %84, %cst_36 [2] : vector<2x16x16xf32> to vector<2x16xf32>
    %86 = vector.shape_cast %85 : vector<2x16xf32> to vector<2x16x1xf32>
    %87 = vector.broadcast %86 : vector<2x16x1xf32> to vector<2x16x16xf32>
    %88 = arith.subf %84, %87 : vector<2x16x16xf32>
    %89 = math.exp %88 : vector<2x16x16xf32>
    %cst_37 = arith.constant dense<0.000000e+00> : vector<2x16xf32>
    %90 = vector.multi_reduction <add>, %89, %cst_37 [2] : vector<2x16x16xf32> to vector<2x16xf32>
    %91 = vector.shape_cast %90 : vector<2x16xf32> to vector<2x16x1xf32>
    %92 = tpu.reciprocal %91 {approx = true} : vector<2x16x1xf32> -> vector<2x16x1xf32>
    %93 = vector.broadcast %92 : vector<2x16x1xf32> to vector<2x16x16xf32>
    %94 = arith.mulf %89, %93 : vector<2x16x16xf32>
    %95 = arith.truncf %94 : vector<2x16x16xf32> to vector<2x16x16xbf16>
    "tpu.trace_start"() <{level = 10 : i32, message = "bqk,bkd->bqd"}> : () -> ()
    %cst_38 = arith.constant dense<0.000000e+00> : vector<2x16x64xf32>
    %96 = tpu.matmul %95, %83, %cst_38 {dimension_numbers = #tpu.dot_dimension_numbers<[2], [1], [1], [2], [0, 0, 0, 1, 1, 2], [0], [0]>} : vector<2x16x16xbf16>, vector<2x16x64xbf16>, vector<2x16x64xf32> -> vector<2x16x64xf32>
    "tpu.trace_stop"() : () -> ()
    %97 = vector.shape_cast %96 : vector<2x16x64xf32> to vector<32x64xf32>
    %98 = arith.truncf %97 : vector<32x64xf32> to vector<32x64xbf16>
    %c2 = arith.constant 2 : index
    %c0_39 = arith.constant 0 : index
    %c0_40 = arith.constant 0 : index
    %99 = vector.load %arg8[%c2, %c0_39, %c0_40] : memref<4x64x256xbf16, #tpu.memory_space<vmem>>, vector<1x64x256xbf16>
    %100 = vector.shape_cast %99 : vector<1x64x256xbf16> to vector<64x256xbf16>
    %cst_41 = arith.constant dense<0.000000e+00> : vector<32x256xf32>
    %101 = tpu.matmul %98, %100, %cst_41 {dimension_numbers = #tpu.dot_dimension_numbers<[1], [0], [0], [1], [0, 0, 1, 1], [], []>} : vector<32x64xbf16>, vector<64x256xbf16>, vector<32x256xf32> -> vector<32x256xf32>
    %102 = arith.addf %80, %101 : vector<32x256xf32>
    %103 = vector.extract_strided_slice %35 {offsets = [0, 0, 192], sizes = [2, 16, 64], strides = [1, 1, 1]} : vector<2x16x768xbf16> to vector<2x16x64xbf16>
    %104 = vector.extract_strided_slice %35 {offsets = [0, 0, 448], sizes = [2, 16, 64], strides = [1, 1, 1]} : vector<2x16x768xbf16> to vector<2x16x64xbf16>
    %105 = vector.extract_strided_slice %35 {offsets = [0, 0, 704], sizes = [2, 16, 64], strides = [1, 1, 1]} : vector<2x16x768xbf16> to vector<2x16x64xbf16>
    "tpu.trace_start"() <{level = 10 : i32, message = "bqd,bkd->bqk"}> : () -> ()
    %cst_42 = arith.constant dense<0.000000e+00> : vector<2x16x16xf32>
    %106 = tpu.matmul %103, %104, %cst_42 {dimension_numbers = #tpu.dot_dimension_numbers<[2], [2], [1], [1], [0, 0, 0, 1, 1, 1], [0], [0]>} : vector<2x16x64xbf16>, vector<2x16x64xbf16>, vector<2x16x16xf32> -> vector<2x16x16xf32>
    "tpu.trace_stop"() : () -> ()
    %cst_43 = arith.constant dense<0xFF800000> : vector<2x16xf32>
    %107 = vector.multi_reduction <maximumf>, %106, %cst_43 [2] : vector<2x16x16xf32> to vector<2x16xf32>
    %108 = vector.shape_cast %107 : vector<2x16xf32> to vector<2x16x1xf32>
    %109 = vector.broadcast %108 : vector<2x16x1xf32> to vector<2x16x16xf32>
    %110 = arith.subf %106, %109 : vector<2x16x16xf32>
    %111 = math.exp %110 : vector<2x16x16xf32>
    %cst_44 = arith.constant dense<0.000000e+00> : vector<2x16xf32>
    %112 = vector.multi_reduction <add>, %111, %cst_44 [2] : vector<2x16x16xf32> to vector<2x16xf32>
    %113 = vector.shape_cast %112 : vector<2x16xf32> to vector<2x16x1xf32>
    %114 = tpu.reciprocal %113 {approx = true} : vector<2x16x1xf32> -> vector<2x16x1xf32>
    %115 = vector.broadcast %114 : vector<2x16x1xf32> to vector<2x16x16xf32>
    %116 = arith.mulf %111, %115 : vector<2x16x16xf32>
    %117 = arith.truncf %116 : vector<2x16x16xf32> to vector<2x16x16xbf16>
    "tpu.trace_start"() <{level = 10 : i32, message = "bqk,bkd->bqd"}> : () -> ()
    %cst_45 = arith.constant dense<0.000000e+00> : vector<2x16x64xf32>
    %118 = tpu.matmul %117, %105, %cst_45 {dimension_numbers = #tpu.dot_dimension_numbers<[2], [1], [1], [2], [0, 0, 0, 1, 1, 2], [0], [0]>} : vector<2x16x16xbf16>, vector<2x16x64xbf16>, vector<2x16x64xf32> -> vector<2x16x64xf32>
    "tpu.trace_stop"() : () -> ()
    %119 = vector.shape_cast %118 : vector<2x16x64xf32> to vector<32x64xf32>
    %120 = arith.truncf %119 : vector<32x64xf32> to vector<32x64xbf16>
    %c3 = arith.constant 3 : index
    %c0_46 = arith.constant 0 : index
    %c0_47 = arith.constant 0 : index
    %121 = vector.load %arg8[%c3, %c0_46, %c0_47] : memref<4x64x256xbf16, #tpu.memory_space<vmem>>, vector<1x64x256xbf16>
    %122 = vector.shape_cast %121 : vector<1x64x256xbf16> to vector<64x256xbf16>
    %cst_48 = arith.constant dense<0.000000e+00> : vector<32x256xf32>
    %123 = tpu.matmul %120, %122, %cst_48 {dimension_numbers = #tpu.dot_dimension_numbers<[1], [0], [0], [1], [0, 0, 1, 1], [], []>} : vector<32x64xbf16>, vector<64x256xbf16>, vector<32x256xf32> -> vector<32x256xf32>
    %124 = arith.addf %102, %123 : vector<32x256xf32>
    %125 = arith.addf %1, %124 : vector<32x256xf32>
    %126 = vector.broadcast %3 : vector<1x256xf32> to vector<32x256xf32>
    %127 = arith.addf %125, %126 : vector<32x256xf32>
    %c0_49 = arith.constant 0 : index
    %c0_50 = arith.constant 0 : index
    %128 = vector.load %arg4[%c0_49, %c0_50] : memref<1x256xf32, #tpu.memory_space<vmem>>, vector<1x256xf32>
    %c0_51 = arith.constant 0 : index
    %c0_52 = arith.constant 0 : index
    %129 = vector.load %arg5[%c0_51, %c0_52] : memref<1x256xf32, #tpu.memory_space<vmem>>, vector<1x256xf32>
    %cst_53 = arith.constant dense<0.000000e+00> : vector<32xf32>
    %130 = vector.multi_reduction <add>, %127, %cst_53 [1] : vector<32x256xf32> to vector<32xf32>
    %131 = vector.shape_cast %130 : vector<32xf32> to vector<32x1xf32>
    %cst_54 = arith.constant 2.560000e+02 : f32
    %132 = vector.broadcast %cst_54 : f32 to vector<32x1xf32>
    %133 = arith.divf %131, %132 : vector<32x1xf32>
    %134 = vector.broadcast %133 : vector<32x1xf32> to vector<32x256xf32>
    %135 = arith.subf %127, %134 : vector<32x256xf32>
    %136 = arith.mulf %135, %135 : vector<32x256xf32>
    %cst_55 = arith.constant dense<0.000000e+00> : vector<32xf32>
    %137 = vector.multi_reduction <add>, %136, %cst_55 [1] : vector<32x256xf32> to vector<32xf32>
    %138 = vector.shape_cast %137 : vector<32xf32> to vector<32x1xf32>
    %cst_56 = arith.constant 2.560000e+02 : f32
    %139 = vector.broadcast %cst_56 : f32 to vector<32x1xf32>
    %140 = arith.divf %138, %139 : vector<32x1xf32>
    %141 = vector.broadcast %133 : vector<32x1xf32> to vector<32x256xf32>
    %142 = arith.subf %127, %141 : vector<32x256xf32>
    %cst_57 = arith.constant 9.99999974E-6 : f32
    %143 = vector.broadcast %cst_57 : f32 to vector<32x1xf32>
    %144 = arith.addf %140, %143 : vector<32x1xf32>
    %145 = math.rsqrt %144 : vector<32x1xf32>
    %146 = vector.broadcast %145 : vector<32x1xf32> to vector<32x256xf32>
    %147 = arith.mulf %142, %146 : vector<32x256xf32>
    %148 = vector.broadcast %128 : vector<1x256xf32> to vector<32x256xf32>
    %149 = arith.mulf %147, %148 : vector<32x256xf32>
    %150 = vector.broadcast %129 : vector<1x256xf32> to vector<32x256xf32>
    %151 = arith.addf %149, %150 : vector<32x256xf32>
    %152 = arith.truncf %151 : vector<32x256xf32> to vector<32x256xbf16>
    %cst_58 = arith.constant 0.000000e+00 : f32
    %153 = vector.broadcast %cst_58 : f32 to vector<32x256xf32>
    %c0_59 = arith.constant 0 : index
    %c0_60 = arith.constant 0 : index
    %154 = vector.load %arg10[%c0_59, %c0_60] : memref<256x1024xbf16, #tpu.memory_space<vmem>>, vector<256x512xbf16>
    %cst_61 = arith.constant dense<0.000000e+00> : vector<32x512xf32>
    %155 = tpu.matmul %152, %154, %cst_61 {dimension_numbers = #tpu.dot_dimension_numbers<[1], [0], [0], [1], [0, 0, 1, 1], [], []>} : vector<32x256xbf16>, vector<256x512xbf16>, vector<32x512xf32> -> vector<32x512xf32>
    %c0_62 = arith.constant 0 : index
    %c0_63 = arith.constant 0 : index
    %156 = vector.load %arg11[%c0_62, %c0_63] : memref<1x1024xf32, #tpu.memory_space<vmem>>, vector<1x512xf32>
    %157 = vector.broadcast %156 : vector<1x512xf32> to vector<32x512xf32>
    %158 = arith.addf %155, %157 : vector<32x512xf32>
    %cst_64 = arith.constant 1.702000e+00 : f32
    %159 = vector.broadcast %cst_64 : f32 to vector<32x512xf32>
    %160 = arith.mulf %159, %158 : vector<32x512xf32>
    %161 = arith.negf %160 : vector<32x512xf32>
    %162 = math.exp %161 : vector<32x512xf32>
    %cst_65 = arith.constant 1.000000e+00 : f32
    %163 = vector.broadcast %cst_65 : f32 to vector<32x512xf32>
    %164 = arith.addf %163, %162 : vector<32x512xf32>
    %165 = arith.divf %163, %164 : vector<32x512xf32>
    %166 = arith.mulf %158, %165 : vector<32x512xf32>
    %167 = arith.truncf %166 : vector<32x512xf32> to vector<32x512xbf16>
    %c0_66 = arith.constant 0 : index
    %c0_67 = arith.constant 0 : index
    %168 = vector.load %arg12[%c0_66, %c0_67] : memref<1024x256xbf16, #tpu.memory_space<vmem>>, vector<512x256xbf16>
    %cst_68 = arith.constant dense<0.000000e+00> : vector<32x256xf32>
    %169 = tpu.matmul %167, %168, %cst_68 {dimension_numbers = #tpu.dot_dimension_numbers<[1], [0], [0], [1], [0, 0, 1, 1], [], []>} : vector<32x512xbf16>, vector<512x256xbf16>, vector<32x256xf32> -> vector<32x256xf32>
    %170 = arith.addf %153, %169 : vector<32x256xf32>
    %c0_69 = arith.constant 0 : index
    %c512 = arith.constant 512 : index
    %171 = vector.load %arg10[%c0_69, %c512] : memref<256x1024xbf16, #tpu.memory_space<vmem>>, vector<256x512xbf16>
    %cst_70 = arith.constant dense<0.000000e+00> : vector<32x512xf32>
    %172 = tpu.matmul %152, %171, %cst_70 {dimension_numbers = #tpu.dot_dimension_numbers<[1], [0], [0], [1], [0, 0, 1, 1], [], []>} : vector<32x256xbf16>, vector<256x512xbf16>, vector<32x512xf32> -> vector<32x512xf32>
    %c0_71 = arith.constant 0 : index
    %c512_72 = arith.constant 512 : index
    %173 = vector.load %arg11[%c0_71, %c512_72] : memref<1x1024xf32, #tpu.memory_space<vmem>>, vector<1x512xf32>
    %174 = vector.broadcast %173 : vector<1x512xf32> to vector<32x512xf32>
    %175 = arith.addf %172, %174 : vector<32x512xf32>
    %cst_73 = arith.constant 1.702000e+00 : f32
    %176 = vector.broadcast %cst_73 : f32 to vector<32x512xf32>
    %177 = arith.mulf %176, %175 : vector<32x512xf32>
    %178 = arith.negf %177 : vector<32x512xf32>
    %179 = math.exp %178 : vector<32x512xf32>
    %cst_74 = arith.constant 1.000000e+00 : f32
    %180 = vector.broadcast %cst_74 : f32 to vector<32x512xf32>
    %181 = arith.addf %180, %179 : vector<32x512xf32>
    %182 = arith.divf %180, %181 : vector<32x512xf32>
    %183 = arith.mulf %175, %182 : vector<32x512xf32>
    %184 = arith.truncf %183 : vector<32x512xf32> to vector<32x512xbf16>
    %c512_75 = arith.constant 512 : index
    %c0_76 = arith.constant 0 : index
    %185 = vector.load %arg12[%c512_75, %c0_76] : memref<1024x256xbf16, #tpu.memory_space<vmem>>, vector<512x256xbf16>
    %cst_77 = arith.constant dense<0.000000e+00> : vector<32x256xf32>
    %186 = tpu.matmul %184, %185, %cst_77 {dimension_numbers = #tpu.dot_dimension_numbers<[1], [0], [0], [1], [0, 0, 1, 1], [], []>} : vector<32x512xbf16>, vector<512x256xbf16>, vector<32x256xf32> -> vector<32x256xf32>
    %187 = arith.addf %170, %186 : vector<32x256xf32>
    %188 = arith.addf %127, %187 : vector<32x256xf32>
    %189 = vector.broadcast %4 : vector<1x256xf32> to vector<32x256xf32>
    %190 = arith.addf %188, %189 : vector<32x256xf32>
    %191 = vector.shape_cast %190 : vector<32x256xf32> to vector<2x16x256xf32>
    %c0_78 = arith.constant 0 : index
    %c0_79 = arith.constant 0 : index
    %c0_80 = arith.constant 0 : index
    %192 = vector.load %arg14[%c0_78, %c0_79, %c0_80] : memref<2x16x256xf32, #tpu.memory_space<vmem>>, vector<2x16x256xf32>
    tpu.vector_store %arg14[%c0_78, %c0_79, %c0_80], %191 {strides = array<i32>} : memref<2x16x256xf32, #tpu.memory_space<vmem>>, vector<2x16x256xf32>,
    return
  }
  func.func @transform_0(%arg0: i32) -> (i32, i32, i32) {
    %c0_i32 = arith.constant 0 : i32
    %c0_i32_0 = arith.constant 0 : i32
    %c0_i32_1 = arith.constant 0 : i32
    return %arg0, %c0_i32, %c0_i32_0 : i32, i32, i32
  }
  func.func @transform_1(%arg0: i32) -> (i32, i32) {
    %c0_i32 = arith.constant 0 : i32
    %c0_i32_0 = arith.constant 0 : i32
    %c0_i32_1 = arith.constant 0 : i32
    return %c0_i32, %c0_i32_0 : i32, i32
  }
  func.func @transform_2(%arg0: i32) -> (i32, i32) {
    %c0_i32 = arith.constant 0 : i32
    %c0_i32_0 = arith.constant 0 : i32
    %c0_i32_1 = arith.constant 0 : i32
    return %c0_i32, %c0_i32_0 : i32, i32
  }
  func.func @transform_3(%arg0: i32) -> (i32, i32) {
    %c0_i32 = arith.constant 0 : i32
    %c0_i32_0 = arith.constant 0 : i32
    %c0_i32_1 = arith.constant 0 : i32
    return %c0_i32, %c0_i32_0 : i32, i32
  }
  func.func @transform_4(%arg0: i32) -> (i32, i32) {
    %c0_i32 = arith.constant 0 : i32
    %c0_i32_0 = arith.constant 0 : i32
    %c0_i32_1 = arith.constant 0 : i32
    return %c0_i32, %c0_i32_0 : i32, i32
  }
  func.func @transform_5(%arg0: i32) -> (i32, i32) {
    %c0_i32 = arith.constant 0 : i32
    %c0_i32_0 = arith.constant 0 : i32
    %c0_i32_1 = arith.constant 0 : i32
    return %c0_i32, %c0_i32_0 : i32, i32
  }
  func.func @transform_6(%arg0: i32) -> (i32, i32) {
    %c0_i32 = arith.constant 0 : i32
    %c0_i32_0 = arith.constant 0 : i32
    %c0_i32_1 = arith.constant 0 : i32
    return %c0_i32, %c0_i32_0 : i32, i32
  }
  func.func @transform_7(%arg0: i32) -> (i32, i32, i32) {
    %c0_i32 = arith.constant 0 : i32
    %c0_i32_0 = arith.constant 0 : i32
    %c0_i32_1 = arith.constant 0 : i32
    %c0_i32_2 = arith.constant 0 : i32
    return %c0_i32, %c0_i32_0, %c0_i32_1 : i32, i32, i32
  }
  func.func @transform_8(%arg0: i32) -> (i32, i32) {
    %c0_i32 = arith.constant 0 : i32
    %c0_i32_0 = arith.constant 0 : i32
    %c0_i32_1 = arith.constant 0 : i32
    return %c0_i32, %c0_i32_0 : i32, i32
  }
  func.func @transform_9(%arg0: i32) -> (i32, i32) {
    %c0_i32 = arith.constant 0 : i32
    %c0_i32_0 = arith.constant 0 : i32
    %c0_i32_1 = arith.constant 0 : i32
    return %c0_i32, %c0_i32_0 : i32, i32
  }
  func.func @transform_10(%arg0: i32) -> (i32, i32) {
    %c0_i32 = arith.constant 0 : i32
    %c0_i32_0 = arith.constant 0 : i32
    %c0_i32_1 = arith.constant 0 : i32
    return %c0_i32, %c0_i32_0 : i32, i32
  }
  func.func @transform_11(%arg0: i32) -> (i32, i32) {
    %c0_i32 = arith.constant 0 : i32
    %c0_i32_0 = arith.constant 0 : i32
    %c0_i32_1 = arith.constant 0 : i32
    return %c0_i32, %c0_i32_0 : i32, i32
  }
  func.func @transform_12(%arg0: i32) -> (i32, i32) {
    %c0_i32 = arith.constant 0 : i32
    %c0_i32_0 = arith.constant 0 : i32
    %c0_i32_1 = arith.constant 0 : i32
    return %c0_i32, %c0_i32_0 : i32, i32
  }
  func.func @transform_13(%arg0: i32) -> (i32, i32, i32) {
    %c0_i32 = arith.constant 0 : i32
    %c0_i32_0 = arith.constant 0 : i32
    %c0_i32_1 = arith.constant 0 : i32
    return %arg0, %c0_i32, %c0_i32_0 : i32, i32, i32
  }
}

</mosaic_0001>

<llo_original>
// kernel: tpu_custom_call.1
$region0: #{tpu_custom_call.1}
  #allocation0 [shape = 'u32[]', space=smem, size = 0x4, offset = 0x4, fixed_abs, tag = 'smem constant byte address 0x4 - core index']
  #allocation1 [shape = 'u32[144,128]{1,0:T(1,128)}', space=vmem, size = 0x12000, scoped, tag = 'internal scratch']
  %s0 = inlined_call_operand.hbm [shape: f32[2,16,256], index: 0, kind: input, shape index: {}]
  %s1 = inlined_call_operand.hbm [shape: f32[1,256], index: 1, kind: input, shape index: {}]
  %s2 = inlined_call_operand.hbm [shape: f32[1,256], index: 2, kind: input, shape index: {}]
  %s3 = inlined_call_operand.hbm [shape: f32[1,256], index: 3, kind: input, shape index: {}]
  %s4 = inlined_call_operand.hbm [shape: f32[1,256], index: 4, kind: input, shape index: {}]
  %s5 = inlined_call_operand.hbm [shape: bf16[256,768], index: 5, kind: input, shape index: {}]
  %s6 = inlined_call_operand.vmem [shape: f32[1,768], index: 6, kind: input, shape index: {}]
  %s7 = inlined_call_operand.hbm [shape: bf16[4,64,256], index: 7, kind: input, shape index: {}]
  %s8 = inlined_call_operand.vmem [shape: f32[1,256], index: 8, kind: input, shape index: {}]
  %s9 = inlined_call_operand.hbm [shape: bf16[256,1024], index: 9, kind: input, shape index: {}]
  %s10 = inlined_call_operand.vmem [shape: f32[1,1024], index: 10, kind: input, shape index: {}]
  %s11 = inlined_call_operand.hbm [shape: bf16[1024,256], index: 11, kind: input, shape index: {}]
  %s12 = inlined_call_operand.vmem [shape: f32[1,256], index: 12, kind: input, shape index: {}]
  %s13 = inlined_call_operand.hbm [shape: f32[2,16,256], index: 13, kind: output, shape index: {}]
  %s14 = sld [smem:[#allocation0]]
  $region98: #{tpu_custom_call.1} parent=0
    _
  %s16 = ssub.s32 1, %s14
  %s17 = scalar_select 0, %s16, %s14
  $region1: #{tpu_custom_call.1} parent=0
    #allocation2 [shape = 'u8[32768]{0}', space=vmem, size = 0x8000, scoped, tag = 'input window, operand 0, single buffered']
    #allocation3 [shape = 's32[1]{0}', space=sflag, size = 0x4, scoped, tag = 'scoped memory for tpu_custom_call.1']
    #allocation4 [shape = 's32[1]{0}', space=sflag, size = 0x4, scoped, tag = 'scoped memory for tpu_custom_call.1']
    #allocation5 [shape = 'u8[1024]{0}', space=vmem, size = 0x400, scoped, tag = 'input window, operand 1, single buffered']
    #allocation6 [shape = 's32[1]{0}', space=sflag, size = 0x4, scoped, tag = 'scoped memory for tpu_custom_call.1']
    #allocation7 [shape = 'u8[1024]{0}', space=vmem, size = 0x400, scoped, tag = 'input window, operand 2, single buffered']
    #allocation8 [shape = 'u8[1024]{0}', space=vmem, size = 0x400, scoped, tag = 'input window, operand 3, single buffered']
    #allocation9 [shape = 's32[1]{0}', space=sflag, size = 0x4, scoped, tag = 'scoped memory for tpu_custom_call.1']
    #allocation10 [shape = 'u8[1024]{0}', space=vmem, size = 0x400, scoped, tag = 'input window, operand 4, single buffered']
    #allocation11 [shape = 'u8[393216]{0}', space=vmem, size = 0x60000, scoped, tag = 'input window, operand 5, single buffered']
    #allocation12 [shape = 's32[1]{0}', space=sflag, size = 0x4, scoped, tag = 'scoped memory for tpu_custom_call.1']
    #allocation13 [shape = 'u8[131072]{0}', space=vmem, size = 0x20000, scoped, tag = 'input window, operand 7, single buffered']
    #allocation14 [shape = 'u8[524288]{0}', space=vmem, size = 0x80000, scoped, tag = 'input window, operand 9, single buffered']
    #allocation15 [shape = 's32[1]{0}', space=sflag, size = 0x4, scoped, tag = 'scoped memory for tpu_custom_call.1']
    #allocation16 [shape = 'u8[524288]{0}', space=vmem, size = 0x80000, scoped, tag = 'input window, operand 11, single buffered']
    #allocation17 [shape = 'u8[32768]{0}', space=vmem, size = 0x8000, scoped, tag = 'output window, operand 0, single buffered']
    %18 = vsyncpa [#allocation3], 0
    %19 = vsyncpa [#allocation6], 0
    %20 = vsyncpa [#allocation9], 0
    %21 = vsyncpa [#allocation12], 0
    %22 = vsyncpa [#allocation15], 0
    %23 = vsyncpa [#allocation4], 0
    // Predicated region
    $region2: #{tpu_custom_call.1} parent=1 // pred_check
      _
    $region3: #{tpu_custom_call.1} parent=1 // pred_check_branch
      %25 = sbr.rel (0) target = $region5
    $region4: #{tpu_custom_call.1} parent=1 // pred_region
      %s27 = ssub.s32 1024, 1024
      %28 = vsyncadd [#allocation3], %s27
      %s29 = sshll.u32 [#allocation2], 4
      %s30 = int_to_ptr.vmem [resolvable:$true] %s29
      %35 = dma.hbm_to_vmem [thread:$0]  %s0, 1024, %s30, [#allocation3], 256, 256, 16
    $region5: #{tpu_custom_call.1} parent=1 // pred_fallthru
      _
    // Predicated region
    $region6: #{tpu_custom_call.1} parent=1 // pred_check
      _
    $region7: #{tpu_custom_call.1} parent=1 // pred_check_branch
      %37 = sbr.rel (0) target = $region9
    $region8: #{tpu_custom_call.1} parent=1 // pred_region
      %s39 = ssub.s32 32, 32
      %40 = vsyncadd [#allocation6], %s39
      %s42 = sshll.u32 [#allocation5], 4
      %s43 = int_to_ptr.vmem [resolvable:$true] %s42
      %45 = dma.hbm_to_vmem [thread:$0]  %s1, 32, %s43, [#allocation6]
    $region9: #{tpu_custom_call.1} parent=1 // pred_fallthru
      _
    // Predicated region
    $region10: #{tpu_custom_call.1} parent=1 // pred_check
      _
    $region11: #{tpu_custom_call.1} parent=1 // pred_check_branch
      %47 = sbr.rel (0) target = $region13
    $region12: #{tpu_custom_call.1} parent=1 // pred_region
      %s49 = ssub.s32 32, 32
      %50 = vsyncadd [#allocation6], %s49
      %s52 = sshll.u32 [#allocation7], 4
      %s53 = int_to_ptr.vmem [resolvable:$true] %s52
      %55 = dma.hbm_to_vmem [thread:$0]  %s2, 32, %s53, [#allocation6]
    $region13: #{tpu_custom_call.1} parent=1 // pred_fallthru
      _
    // Predicated region
    $region14: #{tpu_custom_call.1} parent=1 // pred_check
      _
    $region15: #{tpu_custom_call.1} parent=1 // pred_check_branch
      %57 = sbr.rel (0) target = $region17
    $region16: #{tpu_custom_call.1} parent=1 // pred_region
      %s59 = ssub.s32 32, 32
      %60 = vsyncadd [#allocation9], %s59
      %s62 = sshll.u32 [#allocation8], 4
      %s63 = int_to_ptr.vmem [resolvable:$true] %s62
      %65 = dma.hbm_to_vmem [thread:$0]  %s3, 32, %s63, [#allocation9]
    $region17: #{tpu_custom_call.1} parent=1 // pred_fallthru
      _
    // Predicated region
    $region18: #{tpu_custom_call.1} parent=1 // pred_check
      _
    $region19: #{tpu_custom_call.1} parent=1 // pred_check_branch
      %67 = sbr.rel (0) target = $region21
    $region20: #{tpu_custom_call.1} parent=1 // pred_region
      %s69 = ssub.s32 32, 32
      %70 = vsyncadd [#allocation9], %s69
      %s72 = sshll.u32 [#allocation10], 4
      %s73 = int_to_ptr.vmem [resolvable:$true] %s72
      %75 = dma.hbm_to_vmem [thread:$0]  %s4, 32, %s73, [#allocation9]
    $region21: #{tpu_custom_call.1} parent=1 // pred_fallthru
      _
    // Predicated region
    $region22: #{tpu_custom_call.1} parent=1 // pred_check
      _
    $region23: #{tpu_custom_call.1} parent=1 // pred_check_branch
      %77 = sbr.rel (0) target = $region25
    $region24: #{tpu_custom_call.1} parent=1 // pred_region
      %s79 = ssub.s32 12288, 12288
      %80 = vsyncadd [#allocation12], %s79
      %s81 = sshll.u32 [#allocation11], 4
      %s82 = int_to_ptr.vmem [resolvable:$true] %s81
      %87 = dma.hbm_to_vmem [thread:$0]  %s5, 12288, %s82, [#allocation12], 384, 384, 24
    $region25: #{tpu_custom_call.1} parent=1 // pred_fallthru
      _
    // Predicated region
    $region26: #{tpu_custom_call.1} parent=1 // pred_check
      _
    $region27: #{tpu_custom_call.1} parent=1 // pred_check_branch
      %89 = sbr.rel (0) target = $region29
    $region28: #{tpu_custom_call.1} parent=1 // pred_region
      _
    $region29: #{tpu_custom_call.1} parent=1 // pred_fallthru
      _
    // Predicated region
    $region30: #{tpu_custom_call.1} parent=1 // pred_check
      _
    $region31: #{tpu_custom_call.1} parent=1 // pred_check_branch
      %91 = sbr.rel (0) target = $region33
    $region32: #{tpu_custom_call.1} parent=1 // pred_region
      %s93 = ssub.s32 4096, 4096
      %94 = vsyncadd [#allocation12], %s93
      %s95 = sshll.u32 [#allocation13], 4
      %s96 = int_to_ptr.vmem [resolvable:$true] %s95
      %101 = dma.hbm_to_vmem [thread:$0]  %s7, 4096, %s96, [#allocation12], 128, 128, 8
    $region33: #{tpu_custom_call.1} parent=1 // pred_fallthru
      _
    // Predicated region
    $region34: #{tpu_custom_call.1} parent=1 // pred_check
      _
    $region35: #{tpu_custom_call.1} parent=1 // pred_check_branch
      %103 = sbr.rel (0) target = $region37
    $region36: #{tpu_custom_call.1} parent=1 // pred_region
      _
    $region37: #{tpu_custom_call.1} parent=1 // pred_fallthru
      _
    // Predicated region
    $region38: #{tpu_custom_call.1} parent=1 // pred_check
      _
    $region39: #{tpu_custom_call.1} parent=1 // pred_check_branch
      %105 = sbr.rel (0) target = $region41
    $region40: #{tpu_custom_call.1} parent=1 // pred_region
      %s107 = ssub.s32 16384, 16384
      %108 = vsyncadd [#allocation15], %s107
      %s109 = sshll.u32 [#allocation14], 4
      %s110 = int_to_ptr.vmem [resolvable:$true] %s109
      %115 = dma.hbm_to_vmem [thread:$0]  %s9, 16384, %s110, [#allocation15], 512, 512, 32
    $region41: #{tpu_custom_call.1} parent=1 // pred_fallthru
      _
    // Predicated region
    $region42: #{tpu_custom_call.1} parent=1 // pred_check
      _
    $region43: #{tpu_custom_call.1} parent=1 // pred_check_branch
      %117 = sbr.rel (0) target = $region45
    $region44: #{tpu_custom_call.1} parent=1 // pred_region
      _
    $region45: #{tpu_custom_call.1} parent=1 // pred_fallthru
      _
    // Predicated region
    $region46: #{tpu_custom_call.1} parent=1 // pred_check
      _
    $region47: #{tpu_custom_call.1} parent=1 // pred_check_branch
      %119 = sbr.rel (0) target = $region49
    $region48: #{tpu_custom_call.1} parent=1 // pred_region
      %s121 = ssub.s32 16384, 16384
      %122 = vsyncadd [#allocation15], %s121
      %s123 = sshll.u32 [#allocation16], 4
      %s124 = int_to_ptr.vmem [resolvable:$true] %s123
      %129 = dma.hbm_to_vmem [thread:$0]  %s11, 16384, %s124, [#allocation15], 128, 128, 8
    $region49: #{tpu_custom_call.1} parent=1 // pred_fallthru
      _
    // Predicated region
    $region50: #{tpu_custom_call.1} parent=1 // pred_check
      _
    $region51: #{tpu_custom_call.1} parent=1 // pred_check_branch
      %131 = sbr.rel (0) target = $region53
    $region52: #{tpu_custom_call.1} parent=1 // pred_region
      _
    $region53: #{tpu_custom_call.1} parent=1 // pred_fallthru
      _
    // Predicated region
    $region54: #{tpu_custom_call.1} parent=1 // pred_check
      _
    $region55: #{tpu_custom_call.1} parent=1 // pred_check_branch
      %133 = sbr.rel (0) target = $region57
    $region56: #{tpu_custom_call.1} parent=1 // pred_region
      %134 = dma.done [#allocation3], 1024
    $region57: #{tpu_custom_call.1} parent=1 // pred_fallthru
      _
    // Predicated region
    $region58: #{tpu_custom_call.1} parent=1 // pred_check
      _
    $region59: #{tpu_custom_call.1} parent=1 // pred_check_branch
      %136 = sbr.rel (0) target = $region61
    $region60: #{tpu_custom_call.1} parent=1 // pred_region
      %137 = dma.done [#allocation6], 32
    $region61: #{tpu_custom_call.1} parent=1 // pred_fallthru
      _
    // Predicated region
    $region62: #{tpu_custom_call.1} parent=1 // pred_check
      _
    $region63: #{tpu_custom_call.1} parent=1 // pred_check_branch
      %139 = sbr.rel (0) target = $region65
    $region64: #{tpu_custom_call.1} parent=1 // pred_region
      %140 = dma.done [#allocation6], 32
    $region65: #{tpu_custom_call.1} parent=1 // pred_fallthru
      _
    // Predicated region
    $region66: #{tpu_custom_call.1} parent=1 // pred_check
      _
    $region67: #{tpu_custom_call.1} parent=1 // pred_check_branch
      %142 = sbr.rel (0) target = $region69
    $region68: #{tpu_custom_call.1} parent=1 // pred_region
      %143 = dma.done [#allocation9], 32
    $region69: #{tpu_custom_call.1} parent=1 // pred_fallthru
      _
    // Predicated region
    $region70: #{tpu_custom_call.1} parent=1 // pred_check
      _
    $region71: #{tpu_custom_call.1} parent=1 // pred_check_branch
      %145 = sbr.rel (0) target = $region73
    $region72: #{tpu_custom_call.1} parent=1 // pred_region
      %146 = dma.done [#allocation9], 32
    $region73: #{tpu_custom_call.1} parent=1 // pred_fallthru
      _
    // Predicated region
    $region74: #{tpu_custom_call.1} parent=1 // pred_check
      _
    $region75: #{tpu_custom_call.1} parent=1 // pred_check_branch
      %148 = sbr.rel (0) target = $region77
    $region76: #{tpu_custom_call.1} parent=1 // pred_region
      %149 = dma.done [#allocation12], 12288
    $region77: #{tpu_custom_call.1} parent=1 // pred_fallthru
      _
    // Predicated region
    $region78: #{tpu_custom_call.1} parent=1 // pred_check
      _
    $region79: #{tpu_custom_call.1} parent=1 // pred_check_branch
      %151 = sbr.rel (0) target = $region81
    $region80: #{tpu_custom_call.1} parent=1 // pred_region
      %152 = dma.done [#allocation12], 4096
    $region81: #{tpu_custom_call.1} parent=1 // pred_fallthru
      _
    // Predicated region
    $region82: #{tpu_custom_call.1} parent=1 // pred_check
      _
    $region83: #{tpu_custom_call.1} parent=1 // pred_check_branch
      %154 = sbr.rel (0) target = $region85
    $region84: #{tpu_custom_call.1} parent=1 // pred_region
      %155 = dma.done [#allocation15], 16384
    $region85: #{tpu_custom_call.1} parent=1 // pred_fallthru
      _
    // Predicated region
    $region86: #{tpu_custom_call.1} parent=1 // pred_check
      _
    $region87: #{tpu_custom_call.1} parent=1 // pred_check_branch
      %157 = sbr.rel (0) target = $region89
    $region88: #{tpu_custom_call.1} parent=1 // pred_region
      %158 = dma.done [#allocation15], 16384
    $region89: #{tpu_custom_call.1} parent=1 // pred_fallthru
      _
    %v160 = vld [vmem:[#allocation2] sm:$0xff]
    %v161 = vld [vmem:[#allocation2 + $0x8] sm:$0xff]
    %v162 = vld [vmem:[#allocation2 + $0x10] sm:$0xff]
    %v163 = vld [vmem:[#allocation2 + $0x18] sm:$0xff]
    %v164 = vld [vmem:[#allocation2 + $0x20] sm:$0xff]
    %v165 = vld [vmem:[#allocation2 + $0x28] sm:$0xff]
    %v166 = vld [vmem:[#allocation2 + $0x30] sm:$0xff]
    %v167 = vld [vmem:[#allocation2 + $0x38] sm:$0xff]
    %v168 = vld [vmem:[%s6] sm:$0x3f]
    %v169 = vld [vmem:[%s8] sm:$0x3]
    %v170 = vld [vmem:[%s12] sm:$0x3]
    %v171 = vld [vmem:[#allocation5] sm:$0x3]
    %v172 = vld [vmem:[#allocation7] sm:$0x3]
    %v173 = vadd.f32 %v160, %v161
    %174 = vadd.xlane.f32.xlu0 %v173
    %v175 = vpop.xlane.xlu0 %174
    %v176 = vadd.f32 %v162, %v163
    %177 = vadd.xlane.f32.xlu0 %v176
    %v178 = vpop.xlane.xlu0 %177
    %v179 = vadd.f32 %v164, %v165
    %180 = vadd.xlane.f32.xlu0 %v179
    %v181 = vpop.xlane.xlu0 %180
    %v182 = vadd.f32 %v166, %v167
    %183 = vadd.xlane.f32.xlu0 %v182
    %v184 = vpop.xlane.xlu0 %183
    %v185 = vrcp.pop 256.0
    %v186 = vmul.f32 %v175, %v185
    %v187 = vmul.f32 %v178, %v185
    %v188 = vmul.f32 %v181, %v185
    %v189 = vmul.f32 %v184, %v185
    %v190 = vsub.f32 %v160, %v186
    %v191 = vsub.f32 %v161, %v186
    %v192 = vsub.f32 %v162, %v187
    %v193 = vsub.f32 %v163, %v187
    %v194 = vsub.f32 %v164, %v188
    %v195 = vsub.f32 %v165, %v188
    %v196 = vsub.f32 %v166, %v189
    %v197 = vsub.f32 %v167, %v189
    %v198 = vmul.f32 %v190, %v190
    %v199 = vmul.f32 %v191, %v191
    %v200 = vmul.f32 %v192, %v192
    %v201 = vmul.f32 %v193, %v193
    %v202 = vmul.f32 %v194, %v194
    %v203 = vmul.f32 %v195, %v195
    %v204 = vmul.f32 %v196, %v196
    %v205 = vmul.f32 %v197, %v197
    %v206 = vadd.f32 %v198, %v199
    %207 = vadd.xlane.f32.xlu0 %v206
    %v208 = vpop.xlane.xlu0 %207
    %v209 = vadd.f32 %v200, %v201
    %210 = vadd.xlane.f32.xlu0 %v209
    %v211 = vpop.xlane.xlu0 %210
    %v212 = vadd.f32 %v202, %v203
    %213 = vadd.xlane.f32.xlu0 %v212
    %v214 = vpop.xlane.xlu0 %213
    %v215 = vadd.f32 %v204, %v205
    %216 = vadd.xlane.f32.xlu0 %v215
    %v217 = vpop.xlane.xlu0 %216
    %v218 = vmul.f32 %v208, %v185
    %v219 = vmul.f32 %v211, %v185
    %v220 = vmul.f32 %v214, %v185
    %v221 = vmul.f32 %v217, %v185
    %v222 = vadd.f32 %v218, 1e-05
    %v223 = vadd.f32 %v219, 1e-05
    %v224 = vadd.f32 %v220, 1e-05
    %v225 = vadd.f32 %v221, 1e-05
    %v226 = vrsqrt.pop %v222
    %v227 = vrsqrt.pop %v223
    %v228 = vrsqrt.pop %v224
    %v229 = vrsqrt.pop %v225
    %v230 = vmul.f32 %v190, %v226
    %v231 = vmul.f32 %v191, %v226
    %v232 = vmul.f32 %v192, %v227
    %v233 = vmul.f32 %v193, %v227
    %v234 = vmul.f32 %v194, %v228
    %v235 = vmul.f32 %v195, %v228
    %v236 = vmul.f32 %v196, %v229
    %v237 = vmul.f32 %v197, %v229
    %v239 = vlaneseq
    %v240 = vshrl.u32 %v239, 7
    %v241 = vsub.s32 0, %v240
    %v242 = vrot.slane %v171, %v241
    %v243 = vlaneseq
    %v244 = vshrl.u32 %v243, 7
    %v245 = vsub.s32 1, %v244
    %v246 = vrot.slane %v171, %v245
    %v249 = vmul.f32 %v230, %v242
    %v250 = vmul.f32 %v231, %v246
    %v251 = vmul.f32 %v232, %v242
    %v252 = vmul.f32 %v233, %v246
    %v253 = vmul.f32 %v234, %v242
    %v254 = vmul.f32 %v235, %v246
    %v255 = vmul.f32 %v236, %v242
    %v256 = vmul.f32 %v237, %v246
    %v258 = vlaneseq
    %v259 = vshrl.u32 %v258, 7
    %v260 = vsub.s32 0, %v259
    %v261 = vrot.slane %v172, %v260
    %v262 = vlaneseq
    %v263 = vshrl.u32 %v262, 7
    %v264 = vsub.s32 1, %v263
    %v265 = vrot.slane %v172, %v264
    %v268 = vadd.f32 %v249, %v261
    %v269 = vadd.f32 %v250, %v265
    %v270 = vadd.f32 %v251, %v261
    %v271 = vadd.f32 %v252, %v265
    %v272 = vadd.f32 %v253, %v261
    %v273 = vadd.f32 %v254, %v265
    %v274 = vadd.f32 %v255, %v261
    %v275 = vadd.f32 %v256, %v265
    %v276 = vpack.c.bf16 %v270, %v268
    %v277 = vpack.c.bf16 %v271, %v269
    %v278 = vpack.c.bf16 %v274, %v272
    %v279 = vpack.c.bf16 %v275, %v273
    %v280 = vld [vmem:[#allocation11] sm:$0xff]
    %v281 = vld [vmem:[#allocation11 + $0x8] sm:$0xff]
    %v282 = vld [vmem:[#allocation11 + $0x10] sm:$0xff]
    %v283 = vld [vmem:[#allocation11 + $0x18] sm:$0xff]
    %v284 = vld [vmem:[#allocation11 + $0x20] sm:$0xff]
    %v285 = vld [vmem:[#allocation11 + $0x28] sm:$0xff]
    %v286 = vld [vmem:[#allocation11 + $0x30] sm:$0xff]
    %v287 = vld [vmem:[#allocation11 + $0x38] sm:$0xff]
    %v288 = vld [vmem:[#allocation11 + $0x40] sm:$0xff]
    %v289 = vld [vmem:[#allocation11 + $0x48] sm:$0xff]
    %v290 = vld [vmem:[#allocation11 + $0x50] sm:$0xff]
    %v291 = vld [vmem:[#allocation11 + $0x58] sm:$0xff]
    %v292 = vld [vmem:[#allocation11 + $0x60] sm:$0xff]
    %v293 = vld [vmem:[#allocation11 + $0x68] sm:$0xff]
    %v294 = vld [vmem:[#allocation11 + $0x70] sm:$0xff]
    %v295 = vld [vmem:[#allocation11 + $0x78] sm:$0xff]
    %v296 = vld [vmem:[#allocation11 + $0x80] sm:$0xff]
    %v297 = vld [vmem:[#allocation11 + $0x88] sm:$0xff]
    %v298 = vld [vmem:[#allocation11 + $0x90] sm:$0xff]
    %v299 = vld [vmem:[#allocation11 + $0x98] sm:$0xff]
    %v300 = vld [vmem:[#allocation11 + $0xa0] sm:$0xff]
    %v301 = vld [vmem:[#allocation11 + $0xa8] sm:$0xff]
    %v302 = vld [vmem:[#allocation11 + $0xb0] sm:$0xff]
    %v303 = vld [vmem:[#allocation11 + $0xb8] sm:$0xff]
    %v304 = vld [vmem:[#allocation11 + $0xc0] sm:$0xff]
    %v305 = vld [vmem:[#allocation11 + $0xc8] sm:$0xff]
    %v306 = vld [vmem:[#allocation11 + $0xd0] sm:$0xff]
    %v307 = vld [vmem:[#allocation11 + $0xd8] sm:$0xff]
    %v308 = vld [vmem:[#allocation11 + $0xe0] sm:$0xff]
    %v309 = vld [vmem:[#allocation11 + $0xe8] sm:$0xff]
    %v310 = vld [vmem:[#allocation11 + $0xf0] sm:$0xff]
    %v311 = vld [vmem:[#allocation11 + $0xf8] sm:$0xff]
    %v312 = vld [vmem:[#allocation11 + $0x100] sm:$0xff]
    %v313 = vld [vmem:[#allocation11 + $0x108] sm:$0xff]
    %v314 = vld [vmem:[#allocation11 + $0x110] sm:$0xff]
    %v315 = vld [vmem:[#allocation11 + $0x118] sm:$0xff]
    %v316 = vld [vmem:[#allocation11 + $0x120] sm:$0xff]
    %v317 = vld [vmem:[#allocation11 + $0x128] sm:$0xff]
    %v318 = vld [vmem:[#allocation11 + $0x130] sm:$0xff]
    %v319 = vld [vmem:[#allocation11 + $0x138] sm:$0xff]
    %v320 = vld [vmem:[#allocation11 + $0x140] sm:$0xff]
    %v321 = vld [vmem:[#allocation11 + $0x148] sm:$0xff]
    %v322 = vld [vmem:[#allocation11 + $0x150] sm:$0xff]
    %v323 = vld [vmem:[#allocation11 + $0x158] sm:$0xff]
    %v324 = vld [vmem:[#allocation11 + $0x160] sm:$0xff]
    %v325 = vld [vmem:[#allocation11 + $0x168] sm:$0xff]
    %v326 = vld [vmem:[#allocation11 + $0x170] sm:$0xff]
    %v327 = vld [vmem:[#allocation11 + $0x178] sm:$0xff]
    %v328 = vld [vmem:[#allocation11 + $0x180] sm:$0xff]
    %v329 = vld [vmem:[#allocation11 + $0x188] sm:$0xff]
    %v330 = vld [vmem:[#allocation11 + $0x190] sm:$0xff]
    %v331 = vld [vmem:[#allocation11 + $0x198] sm:$0xff]
    %v332 = vld [vmem:[#allocation11 + $0x1a0] sm:$0xff]
    %v333 = vld [vmem:[#allocation11 + $0x1a8] sm:$0xff]
    %v334 = vld [vmem:[#allocation11 + $0x1b0] sm:$0xff]
    %v335 = vld [vmem:[#allocation11 + $0x1b8] sm:$0xff]
    %v336 = vld [vmem:[#allocation11 + $0x1c0] sm:$0xff]
    %v337 = vld [vmem:[#allocation11 + $0x1c8] sm:$0xff]
    %v338 = vld [vmem:[#allocation11 + $0x1d0] sm:$0xff]
    %v339 = vld [vmem:[#allocation11 + $0x1d8] sm:$0xff]
    %v340 = vld [vmem:[#allocation11 + $0x1e0] sm:$0xff]
    %v341 = vld [vmem:[#allocation11 + $0x1e8] sm:$0xff]
    %v342 = vld [vmem:[#allocation11 + $0x1f0] sm:$0xff]
    %v343 = vld [vmem:[#allocation11 + $0x1f8] sm:$0xff]
    %v344 = vld [vmem:[#allocation11 + $0x200] sm:$0xff]
    %v345 = vld [vmem:[#allocation11 + $0x208] sm:$0xff]
    %v346 = vld [vmem:[#allocation11 + $0x210] sm:$0xff]
    %v347 = vld [vmem:[#allocation11 + $0x218] sm:$0xff]
    %v348 = vld [vmem:[#allocation11 + $0x220] sm:$0xff]
    %v349 = vld [vmem:[#allocation11 + $0x228] sm:$0xff]
    %v350 = vld [vmem:[#allocation11 + $0x230] sm:$0xff]
    %v351 = vld [vmem:[#allocation11 + $0x238] sm:$0xff]
    %v352 = vld [vmem:[#allocation11 + $0x240] sm:$0xff]
    %v353 = vld [vmem:[#allocation11 + $0x248] sm:$0xff]
    %v354 = vld [vmem:[#allocation11 + $0x250] sm:$0xff]
    %v355 = vld [vmem:[#allocation11 + $0x258] sm:$0xff]
    %v356 = vld [vmem:[#allocation11 + $0x260] sm:$0xff]
    %v357 = vld [vmem:[#allocation11 + $0x268] sm:$0xff]
    %v358 = vld [vmem:[#allocation11 + $0x270] sm:$0xff]
    %v359 = vld [vmem:[#allocation11 + $0x278] sm:$0xff]
    %v360 = vld [vmem:[#allocation11 + $0x280] sm:$0xff]
    %v361 = vld [vmem:[#allocation11 + $0x288] sm:$0xff]
    %v362 = vld [vmem:[#allocation11 + $0x290] sm:$0xff]
    %v363 = vld [vmem:[#allocation11 + $0x298] sm:$0xff]
    %v364 = vld [vmem:[#allocation11 + $0x2a0] sm:$0xff]
    %v365 = vld [vmem:[#allocation11 + $0x2a8] sm:$0xff]
    %v366 = vld [vmem:[#allocation11 + $0x2b0] sm:$0xff]
    %v367 = vld [vmem:[#allocation11 + $0x2b8] sm:$0xff]
    %v368 = vld [vmem:[#allocation11 + $0x2c0] sm:$0xff]
    %v369 = vld [vmem:[#allocation11 + $0x2c8] sm:$0xff]
    %v370 = vld [vmem:[#allocation11 + $0x2d0] sm:$0xff]
    %v371 = vld [vmem:[#allocation11 + $0x2d8] sm:$0xff]
    %v372 = vld [vmem:[#allocation11 + $0x2e0] sm:$0xff]
    %v373 = vld [vmem:[#allocation11 + $0x2e8] sm:$0xff]
    %v374 = vld [vmem:[#allocation11 + $0x2f0] sm:$0xff]
    %v375 = vld [vmem:[#allocation11 + $0x2f8] sm:$0xff]
    %v377 = vlaneseq
    %v378 = vshrl.u32 %v377, 7
    %v379 = vsub.s32 0, %v378
    %v380 = vrot.slane %v168, %v379
    %v381 = vlaneseq
    %v382 = vshrl.u32 %v381, 7
    %v383 = vsub.s32 1, %v382
    %v384 = vrot.slane %v168, %v383
    %v385 = vlaneseq
    %v386 = vshrl.u32 %v385, 7
    %v387 = vsub.s32 2, %v386
    %v388 = vrot.slane %v168, %v387
    %v389 = vlaneseq
    %v390 = vshrl.u32 %v389, 7
    %v391 = vsub.s32 3, %v390
    %v392 = vrot.slane %v168, %v391
    %v393 = vlaneseq
    %v394 = vshrl.u32 %v393, 7
    %v395 = vsub.s32 4, %v394
    %v396 = vrot.slane %v168, %v395
    %v397 = vlaneseq
    %v398 = vshrl.u32 %v397, 7
    %v399 = vsub.s32 5, %v398
    %v400 = vrot.slane %v168, %v399
    %v503 = vunpack.c.l.b16 %v280
    %v504 = vunpack.c.h.b16 %v280
    %v505 = vunpack.c.l.b16 %v281
    %v506 = vunpack.c.h.b16 %v281
    %v507 = vunpack.c.l.b16 %v282
    %v508 = vunpack.c.h.b16 %v282
    %v509 = vunpack.c.l.b16 %v283
    %v510 = vunpack.c.h.b16 %v283
    %v511 = vunpack.c.l.b16 %v284
    %v512 = vunpack.c.h.b16 %v284
    %v513 = vunpack.c.l.b16 %v285
    %v514 = vunpack.c.h.b16 %v285
    %v515 = vunpack.c.l.b16 %v286
    %v516 = vunpack.c.h.b16 %v286
    %v517 = vunpack.c.l.b16 %v287
    %v518 = vunpack.c.h.b16 %v287
    %v519 = vunpack.c.l.b16 %v288
    %v520 = vunpack.c.h.b16 %v288
    %v521 = vunpack.c.l.b16 %v289
    %v522 = vunpack.c.h.b16 %v289
    %v523 = vunpack.c.l.b16 %v290
    %v524 = vunpack.c.h.b16 %v290
    %v525 = vunpack.c.l.b16 %v291
    %v526 = vunpack.c.h.b16 %v291
    %v527 = vunpack.c.l.b16 %v292
    %v528 = vunpack.c.h.b16 %v292
    %v529 = vunpack.c.l.b16 %v293
    %v530 = vunpack.c.h.b16 %v293
    %v531 = vunpack.c.l.b16 %v294
    %v532 = vunpack.c.h.b16 %v294
    %v533 = vunpack.c.l.b16 %v295
    %v534 = vunpack.c.h.b16 %v295
    %v535 = vunpack.c.l.b16 %v296
    %v536 = vunpack.c.h.b16 %v296
    %v537 = vunpack.c.l.b16 %v297
    %v538 = vunpack.c.h.b16 %v297
    %v539 = vunpack.c.l.b16 %v298
    %v540 = vunpack.c.h.b16 %v298
    %v541 = vunpack.c.l.b16 %v299
    %v542 = vunpack.c.h.b16 %v299
    %v543 = vunpack.c.l.b16 %v300
    %v544 = vunpack.c.h.b16 %v300
    %v545 = vunpack.c.l.b16 %v301
    %v546 = vunpack.c.h.b16 %v301
    %v547 = vunpack.c.l.b16 %v302
    %v548 = vunpack.c.h.b16 %v302
    %v549 = vunpack.c.l.b16 %v303
    %v550 = vunpack.c.h.b16 %v303
    %v551 = vunpack.c.l.b16 %v304
    %v552 = vunpack.c.h.b16 %v304
    %v553 = vunpack.c.l.b16 %v305
    %v554 = vunpack.c.h.b16 %v305
    %v555 = vunpack.c.l.b16 %v306
    %v556 = vunpack.c.h.b16 %v306
    %v557 = vunpack.c.l.b16 %v307
    %v558 = vunpack.c.h.b16 %v307
    %v559 = vunpack.c.l.b16 %v308
    %v560 = vunpack.c.h.b16 %v308
    %v561 = vunpack.c.l.b16 %v309
    %v562 = vunpack.c.h.b16 %v309
    %v563 = vunpack.c.l.b16 %v310
    %v564 = vunpack.c.h.b16 %v310
    %v565 = vunpack.c.l.b16 %v311
    %v566 = vunpack.c.h.b16 %v311
    %v567 = vunpack.c.l.b16 %v312
    %v568 = vunpack.c.h.b16 %v312
    %v569 = vunpack.c.l.b16 %v313
    %v570 = vunpack.c.h.b16 %v313
    %v571 = vunpack.c.l.b16 %v314
    %v572 = vunpack.c.h.b16 %v314
    %v573 = vunpack.c.l.b16 %v315
    %v574 = vunpack.c.h.b16 %v315
    %v575 = vunpack.c.l.b16 %v316
    %v576 = vunpack.c.h.b16 %v316
    %v577 = vunpack.c.l.b16 %v317
    %v578 = vunpack.c.h.b16 %v317
    %v579 = vunpack.c.l.b16 %v318
    %v580 = vunpack.c.h.b16 %v318
    %v581 = vunpack.c.l.b16 %v319
    %v582 = vunpack.c.h.b16 %v319
    %v583 = vunpack.c.l.b16 %v320
    %v584 = vunpack.c.h.b16 %v320
    %v585 = vunpack.c.l.b16 %v321
    %v586 = vunpack.c.h.b16 %v321
    %v587 = vunpack.c.l.b16 %v322
    %v588 = vunpack.c.h.b16 %v322
    %v589 = vunpack.c.l.b16 %v323
    %v590 = vunpack.c.h.b16 %v323
    %v591 = vunpack.c.l.b16 %v324
    %v592 = vunpack.c.h.b16 %v324
    %v593 = vunpack.c.l.b16 %v325
    %v594 = vunpack.c.h.b16 %v325
    %v595 = vunpack.c.l.b16 %v326
    %v596 = vunpack.c.h.b16 %v326
    %v597 = vunpack.c.l.b16 %v327
    %v598 = vunpack.c.h.b16 %v327
    %v599 = vunpack.c.l.b16 %v328
    %v600 = vunpack.c.h.b16 %v328
    %v601 = vunpack.c.l.b16 %v329
    %v602 = vunpack.c.h.b16 %v329
    %v603 = vunpack.c.l.b16 %v330
    %v604 = vunpack.c.h.b16 %v330
    %v605 = vunpack.c.l.b16 %v331
    %v606 = vunpack.c.h.b16 %v331
    %v607 = vunpack.c.l.b16 %v332
    %v608 = vunpack.c.h.b16 %v332
    %v609 = vunpack.c.l.b16 %v333
    %v610 = vunpack.c.h.b16 %v333
    %v611 = vunpack.c.l.b16 %v334
    %v612 = vunpack.c.h.b16 %v334
    %v613 = vunpack.c.l.b16 %v335
    %v614 = vunpack.c.h.b16 %v335
    %v615 = vunpack.c.l.b16 %v336
    %v616 = vunpack.c.h.b16 %v336
    %v617 = vunpack.c.l.b16 %v337
    %v618 = vunpack.c.h.b16 %v337
    %v619 = vunpack.c.l.b16 %v338
    %v620 = vunpack.c.h.b16 %v338
    %v621 = vunpack.c.l.b16 %v339
    %v622 = vunpack.c.h.b16 %v339
    %v623 = vunpack.c.l.b16 %v340
    %v624 = vunpack.c.h.b16 %v340
    %v625 = vunpack.c.l.b16 %v341
    %v626 = vunpack.c.h.b16 %v341
    %v627 = vunpack.c.l.b16 %v342
    %v628 = vunpack.c.h.b16 %v342
    %v629 = vunpack.c.l.b16 %v343
    %v630 = vunpack.c.h.b16 %v343
    %v631 = vunpack.c.l.b16 %v344
    %v632 = vunpack.c.h.b16 %v344
    %v633 = vunpack.c.l.b16 %v345
    %v634 = vunpack.c.h.b16 %v345
    %v635 = vunpack.c.l.b16 %v346
    %v636 = vunpack.c.h.b16 %v346
    %v637 = vunpack.c.l.b16 %v347
    %v638 = vunpack.c.h.b16 %v347
    %v639 = vunpack.c.l.b16 %v348
    %v640 = vunpack.c.h.b16 %v348
    %v641 = vunpack.c.l.b16 %v349
    %v642 = vunpack.c.h.b16 %v349
    %v643 = vunpack.c.l.b16 %v350
    %v644 = vunpack.c.h.b16 %v350
    %v645 = vunpack.c.l.b16 %v351
    %v646 = vunpack.c.h.b16 %v351
    %v647 = vunpack.c.l.b16 %v352
    %v648 = vunpack.c.h.b16 %v352
    %v649 = vunpack.c.l.b16 %v353
    %v650 = vunpack.c.h.b16 %v353
    %v651 = vunpack.c.l.b16 %v354
    %v652 = vunpack.c.h.b16 %v354
    %v653 = vunpack.c.l.b16 %v355
    %v654 = vunpack.c.h.b16 %v355
    %v655 = vunpack.c.l.b16 %v356
    %v656 = vunpack.c.h.b16 %v356
    %v657 = vunpack.c.l.b16 %v357
    %v658 = vunpack.c.h.b16 %v357
    %v659 = vunpack.c.l.b16 %v358
    %v660 = vunpack.c.h.b16 %v358
    %v661 = vunpack.c.l.b16 %v359
    %v662 = vunpack.c.h.b16 %v359
    %v663 = vunpack.c.l.b16 %v360
    %v664 = vunpack.c.h.b16 %v360
    %v665 = vunpack.c.l.b16 %v361
    %v666 = vunpack.c.h.b16 %v361
    %v667 = vunpack.c.l.b16 %v362
    %v668 = vunpack.c.h.b16 %v362
    %v669 = vunpack.c.l.b16 %v363
    %v670 = vunpack.c.h.b16 %v363
    %v671 = vunpack.c.l.b16 %v364
    %v672 = vunpack.c.h.b16 %v364
    %v673 = vunpack.c.l.b16 %v365
    %v674 = vunpack.c.h.b16 %v365
    %v675 = vunpack.c.l.b16 %v366
    %v676 = vunpack.c.h.b16 %v366
    %v677 = vunpack.c.l.b16 %v367
    %v678 = vunpack.c.h.b16 %v367
    %v679 = vunpack.c.l.b16 %v368
    %v680 = vunpack.c.h.b16 %v368
    %v681 = vunpack.c.l.b16 %v369
    %v682 = vunpack.c.h.b16 %v369
    %v683 = vunpack.c.l.b16 %v370
    %v684 = vunpack.c.h.b16 %v370
    %v685 = vunpack.c.l.b16 %v371
    %v686 = vunpack.c.h.b16 %v371
    %v687 = vunpack.c.l.b16 %v372
    %v688 = vunpack.c.h.b16 %v372
    %v689 = vunpack.c.l.b16 %v373
    %v690 = vunpack.c.h.b16 %v373
    %v691 = vunpack.c.l.b16 %v374
    %v692 = vunpack.c.h.b16 %v374
    %v693 = vunpack.c.l.b16 %v375
    %v694 = vunpack.c.h.b16 %v375
    %v695 = vpack.c.b16 %v509, %v503
    %v696 = vpack.c.b16 %v510, %v504
    %v697 = vpack.c.b16 %v511, %v505
    %v698 = vpack.c.b16 %v512, %v506
    %v699 = vpack.c.b16 %v513, %v507
    %v700 = vpack.c.b16 %v514, %v508
    %v701 = vpack.c.b16 %v521, %v515
    %v702 = vpack.c.b16 %v522, %v516
    %v703 = vpack.c.b16 %v523, %v517
    %v704 = vpack.c.b16 %v524, %v518
    %v705 = vpack.c.b16 %v525, %v519
    %v706 = vpack.c.b16 %v526, %v520
    %v707 = vpack.c.b16 %v533, %v527
    %v708 = vpack.c.b16 %v534, %v528
    %v709 = vpack.c.b16 %v535, %v529
    %v710 = vpack.c.b16 %v536, %v530
    %v711 = vpack.c.b16 %v537, %v531
    %v712 = vpack.c.b16 %v538, %v532
    %v713 = vpack.c.b16 %v545, %v539
    %v714 = vpack.c.b16 %v546, %v540
    %v715 = vpack.c.b16 %v547, %v541
    %v716 = vpack.c.b16 %v548, %v542
    %v717 = vpack.c.b16 %v549, %v543
    %v718 = vpack.c.b16 %v550, %v544
    %v719 = vpack.c.b16 %v557, %v551
    %v720 = vpack.c.b16 %v558, %v552
    %v721 = vpack.c.b16 %v559, %v553
    %v722 = vpack.c.b16 %v560, %v554
    %v723 = vpack.c.b16 %v561, %v555
    %v724 = vpack.c.b16 %v562, %v556
    %v725 = vpack.c.b16 %v569, %v563
    %v726 = vpack.c.b16 %v570, %v564
    %v727 = vpack.c.b16 %v571, %v565
    %v728 = vpack.c.b16 %v572, %v566
    %v729 = vpack.c.b16 %v573, %v567
    %v730 = vpack.c.b16 %v574, %v568
    %v731 = vpack.c.b16 %v581, %v575
    %v732 = vpack.c.b16 %v582, %v576
    %v733 = vpack.c.b16 %v583, %v577
    %v734 = vpack.c.b16 %v584, %v578
    %v735 = vpack.c.b16 %v585, %v579
    %v736 = vpack.c.b16 %v586, %v580
    %v737 = vpack.c.b16 %v593, %v587
    %v738 = vpack.c.b16 %v594, %v588
    %v739 = vpack.c.b16 %v595, %v589
    %v740 = vpack.c.b16 %v596, %v590
    %v741 = vpack.c.b16 %v597, %v591
    %v742 = vpack.c.b16 %v598, %v592
    %v743 = vpack.c.b16 %v605, %v599
    %v744 = vpack.c.b16 %v606, %v600
    %v745 = vpack.c.b16 %v607, %v601
    %v746 = vpack.c.b16 %v608, %v602
    %v747 = vpack.c.b16 %v609, %v603
    %v748 = vpack.c.b16 %v610, %v604
    %v749 = vpack.c.b16 %v617, %v611
    %v750 = vpack.c.b16 %v618, %v612
    %v751 = vpack.c.b16 %v619, %v613
    %v752 = vpack.c.b16 %v620, %v614
    %v753 = vpack.c.b16 %v621, %v615
    %v754 = vpack.c.b16 %v622, %v616
    %v755 = vpack.c.b16 %v629, %v623
    %v756 = vpack.c.b16 %v630, %v624
    %v757 = vpack.c.b16 %v631, %v625
    %v758 = vpack.c.b16 %v632, %v626
    %v759 = vpack.c.b16 %v633, %v627
    %v760 = vpack.c.b16 %v634, %v628
    %v761 = vpack.c.b16 %v641, %v635
    %v762 = vpack.c.b16 %v642, %v636
    %v763 = vpack.c.b16 %v643, %v637
    %v764 = vpack.c.b16 %v644, %v638
    %v765 = vpack.c.b16 %v645, %v639
    %v766 = vpack.c.b16 %v646, %v640
    %v767 = vpack.c.b16 %v653, %v647
    %v768 = vpack.c.b16 %v654, %v648
    %v769 = vpack.c.b16 %v655, %v649
    %v770 = vpack.c.b16 %v656, %v650
    %v771 = vpack.c.b16 %v657, %v651
    %v772 = vpack.c.b16 %v658, %v652
    %v773 = vpack.c.b16 %v665, %v659
    %v774 = vpack.c.b16 %v666, %v660
    %v775 = vpack.c.b16 %v667, %v661
    %v776 = vpack.c.b16 %v668, %v662
    %v777 = vpack.c.b16 %v669, %v663
    %v778 = vpack.c.b16 %v670, %v664
    %v779 = vpack.c.b16 %v677, %v671
    %v780 = vpack.c.b16 %v678, %v672
    %v781 = vpack.c.b16 %v679, %v673
    %v782 = vpack.c.b16 %v680, %v674
    %v783 = vpack.c.b16 %v681, %v675
    %v784 = vpack.c.b16 %v682, %v676
    %v785 = vpack.c.b16 %v689, %v683
    %v786 = vpack.c.b16 %v690, %v684
    %v787 = vpack.c.b16 %v691, %v685
    %v788 = vpack.c.b16 %v692, %v686
    %v789 = vpack.c.b16 %v693, %v687
    %v790 = vpack.c.b16 %v694, %v688
    %887 = vmatprep.subr.bf16.mxu0 %v696
    %888 = vmatpush1.bf16.msra.mxu0 %v695
    %889 = vmatprep.subr.bf16.mxu0 %v702
    %890 = vmatpush1.bf16.msra.mxu0 %v701
    %891 = vmatprep.subr.bf16.mxu0 %v708
    %892 = vmatpush1.bf16.msra.mxu0 %v707
    %893 = vmatprep.subr.bf16.mxu0 %v714
    %894 = vmatpush1.bf16.msra.mxu0 %v713
    %895 = vmatprep.subr.bf16.mxu0 %v720
    %896 = vmatpush1.bf16.msra.mxu0 %v719
    %897 = vmatprep.subr.bf16.mxu0 %v726
    %898 = vmatpush1.bf16.msra.mxu0 %v725
    %899 = vmatprep.subr.bf16.mxu0 %v732
    %900 = vmatpush1.bf16.msra.mxu0 %v731
    %901 = vmatprep.subr.bf16.mxu0 %v738
    %902 = vmatpush1.bf16.msra.mxu0 %v737
    %903 = vmatprep.subr.bf16.mxu0 %v744
    %904 = vmatpush1.bf16.msra.mxu0 %v743
    %905 = vmatprep.subr.bf16.mxu0 %v750
    %906 = vmatpush1.bf16.msra.mxu0 %v749
    %907 = vmatprep.subr.bf16.mxu0 %v756
    %908 = vmatpush1.bf16.msra.mxu0 %v755
    %909 = vmatprep.subr.bf16.mxu0 %v762
    %910 = vmatpush1.bf16.msra.mxu0 %v761
    %911 = vmatprep.subr.bf16.mxu0 %v768
    %912 = vmatpush1.bf16.msra.mxu0 %v767
    %913 = vmatprep.subr.bf16.mxu0 %v774
    %914 = vmatpush1.bf16.msra.mxu0 %v773
    %915 = vmatprep.subr.bf16.mxu0 %v780
    %916 = vmatpush1.bf16.msra.mxu0 %v779
    %917 = vmatprep.subr.bf16.mxu0 %v786
    %918 = vmatpush1.bf16.msra.mxu0 %v785
    %919 = vmatprep.mubr.bf16.mxu0 %v277
    %920 = vmatmul.mubr.bf16.gmra.mrb[0].mxu0 %v276
    %v921 = vpop.f32.mrb[0].mxu0
    %v922 = vadd.f32 %v380, %v921
    %v923 = vpop.f32.mrb[0].mxu0
    %v924 = vadd.f32 %v384, %v923
    %v925 = vpop.f32.mrb[0].mxu0
    %v926 = vadd.f32 %v380, %v925
    %v927 = vpop.f32.mrb[0].mxu0
    %v928 = vadd.f32 %v384, %v927
    %929 = vmatprep.mubr.bf16.mxu0 %v279
    %930 = vmatmul.mubr.bf16.gmra.mrb[0].mxu0 %v278
    %v931 = vpop.f32.mrb[0].mxu0
    %v932 = vadd.f32 %v380, %v931
    %v933 = vpop.f32.mrb[0].mxu0
    %v934 = vadd.f32 %v384, %v933
    %v935 = vpop.f32.mrb[0].mxu0
    %v936 = vadd.f32 %v380, %v935
    %v937 = vpop.f32.mrb[0].mxu0
    %v938 = vadd.f32 %v384, %v937
    %939 = vdwg.mxu0
    %940 = vmatprep.subr.bf16.mxu0 %v698
    %941 = vmatpush1.bf16.msra.mxu0 %v697
    %942 = vmatprep.subr.bf16.mxu0 %v704
    %943 = vmatpush1.bf16.msra.mxu0 %v703
    %944 = vmatprep.subr.bf16.mxu0 %v710
    %945 = vmatpush1.bf16.msra.mxu0 %v709
    %946 = vmatprep.subr.bf16.mxu0 %v716
    %947 = vmatpush1.bf16.msra.mxu0 %v715
    %948 = vmatprep.subr.bf16.mxu0 %v722
    %949 = vmatpush1.bf16.msra.mxu0 %v721
    %950 = vmatprep.subr.bf16.mxu0 %v728
    %951 = vmatpush1.bf16.msra.mxu0 %v727
    %952 = vmatprep.subr.bf16.mxu0 %v734
    %953 = vmatpush1.bf16.msra.mxu0 %v733
    %954 = vmatprep.subr.bf16.mxu0 %v740
    %955 = vmatpush1.bf16.msra.mxu0 %v739
    %956 = vmatprep.subr.bf16.mxu0 %v746
    %957 = vmatpush1.bf16.msra.mxu0 %v745
    %958 = vmatprep.subr.bf16.mxu0 %v752
    %959 = vmatpush1.bf16.msra.mxu0 %v751
    %960 = vmatprep.subr.bf16.mxu0 %v758
    %961 = vmatpush1.bf16.msra.mxu0 %v757
    %962 = vmatprep.subr.bf16.mxu0 %v764
    %963 = vmatpush1.bf16.msra.mxu0 %v763
    %964 = vmatprep.subr.bf16.mxu0 %v770
    %965 = vmatpush1.bf16.msra.mxu0 %v769
    %966 = vmatprep.subr.bf16.mxu0 %v776
    %967 = vmatpush1.bf16.msra.mxu0 %v775
    %968 = vmatprep.subr.bf16.mxu0 %v782
    %969 = vmatpush1.bf16.msra.mxu0 %v781
    %970 = vmatprep.subr.bf16.mxu0 %v788
    %971 = vmatpush1.bf16.msra.mxu0 %v787
    %972 = vmatprep.mubr.bf16.mxu0 %v277
    %973 = vmatmul.mubr.bf16.gmra.mrb[0].mxu0 %v276
    %v974 = vpop.f32.mrb[0].mxu0
    %v975 = vadd.f32 %v388, %v974
    %v976 = vpop.f32.mrb[0].mxu0
    %v977 = vadd.f32 %v392, %v976
    %v978 = vpop.f32.mrb[0].mxu0
    %v979 = vadd.f32 %v388, %v978
    %v980 = vpop.f32.mrb[0].mxu0
    %v981 = vadd.f32 %v392, %v980
    %982 = vmatprep.mubr.bf16.mxu0 %v279
    %983 = vmatmul.mubr.bf16.gmra.mrb[0].mxu0 %v278
    %v984 = vpop.f32.mrb[0].mxu0
    %v985 = vadd.f32 %v388, %v984
    %v986 = vpop.f32.mrb[0].mxu0
    %v987 = vadd.f32 %v392, %v986
    %v988 = vpop.f32.mrb[0].mxu0
    %v989 = vadd.f32 %v388, %v988
    %v990 = vpop.f32.mrb[0].mxu0
    %v991 = vadd.f32 %v392, %v990
    %992 = vdwg.mxu0
    %993 = vmatprep.subr.bf16.mxu0 %v700
    %994 = vmatpush1.bf16.msra.mxu0 %v699
    %995 = vmatprep.subr.bf16.mxu0 %v706
    %996 = vmatpush1.bf16.msra.mxu0 %v705
    %997 = vmatprep.subr.bf16.mxu0 %v712
    %998 = vmatpush1.bf16.msra.mxu0 %v711
    %999 = vmatprep.subr.bf16.mxu0 %v718
    %1000 = vmatpush1.bf16.msra.mxu0 %v717
    %1001 = vmatprep.subr.bf16.mxu0 %v724
    %1002 = vmatpush1.bf16.msra.mxu0 %v723
    %1003 = vmatprep.subr.bf16.mxu0 %v730
    %1004 = vmatpush1.bf16.msra.mxu0 %v729
    %1005 = vmatprep.subr.bf16.mxu0 %v736
    %1006 = vmatpush1.bf16.msra.mxu0 %v735
    %1007 = vmatprep.subr.bf16.mxu0 %v742
    %1008 = vmatpush1.bf16.msra.mxu0 %v741
    %1009 = vmatprep.subr.bf16.mxu0 %v748
    %1010 = vmatpush1.bf16.msra.mxu0 %v747
    %1011 = vmatprep.subr.bf16.mxu0 %v754
    %1012 = vmatpush1.bf16.msra.mxu0 %v753
    %1013 = vmatprep.subr.bf16.mxu0 %v760
    %1014 = vmatpush1.bf16.msra.mxu0 %v759
    %1015 = vmatprep.subr.bf16.mxu0 %v766
    %1016 = vmatpush1.bf16.msra.mxu0 %v765
    %1017 = vmatprep.subr.bf16.mxu0 %v772
    %1018 = vmatpush1.bf16.msra.mxu0 %v771
    %1019 = vmatprep.subr.bf16.mxu0 %v778
    %1020 = vmatpush1.bf16.msra.mxu0 %v777
    %1021 = vmatprep.subr.bf16.mxu0 %v784
    %1022 = vmatpush1.bf16.msra.mxu0 %v783
    %1023 = vmatprep.subr.bf16.mxu0 %v790
    %1024 = vmatpush1.bf16.msra.mxu0 %v789
    %1025 = vmatprep.mubr.bf16.mxu0 %v277
    %1026 = vmatmul.mubr.bf16.gmra.mrb[0].mxu0 %v276
    %v1027 = vpop.f32.mrb[0].mxu0
    %v1028 = vadd.f32 %v396, %v1027
    %v1029 = vpop.f32.mrb[0].mxu0
    %v1030 = vadd.f32 %v400, %v1029
    %v1031 = vpop.f32.mrb[0].mxu0
    %v1032 = vadd.f32 %v396, %v1031
    %v1033 = vpop.f32.mrb[0].mxu0
    %v1034 = vadd.f32 %v400, %v1033
    %1035 = vmatprep.mubr.bf16.mxu0 %v279
    %1036 = vmatmul.mubr.bf16.gmra.mrb[0].mxu0 %v278
    %v1037 = vpop.f32.mrb[0].mxu0
    %v1038 = vadd.f32 %v396, %v1037
    %v1039 = vpop.f32.mrb[0].mxu0
    %v1040 = vadd.f32 %v400, %v1039
    %v1041 = vpop.f32.mrb[0].mxu0
    %v1042 = vadd.f32 %v396, %v1041
    %v1043 = vpop.f32.mrb[0].mxu0
    %v1044 = vadd.f32 %v400, %v1043
    %1045 = vdwg.mxu0
    %v1046 = vpack.c.bf16 %v926, %v922
    %v1047 = vpack.c.bf16 %v928, %v924
    %v1048 = vpack.c.bf16 %v979, %v975
    %v1049 = vpack.c.bf16 %v981, %v977
    %v1050 = vpack.c.bf16 %v1032, %v1028
    %v1051 = vpack.c.bf16 %v1034, %v1030
    %v1052 = vpack.c.bf16 %v936, %v932
    %v1053 = vpack.c.bf16 %v938, %v934
    %v1054 = vpack.c.bf16 %v989, %v985
    %v1055 = vpack.c.bf16 %v991, %v987
    %v1056 = vpack.c.bf16 %v1042, %v1038
    %v1057 = vpack.c.bf16 %v1044, %v1040
    %vm1058 = vcmask 523264
    %v1060 = vsel %vm1058, %v1046, 0
    %v1063 = vsel %vm1058, %v1048, 0
    %1065 = vmatprep.subr.bf16.mxu0 0
    %1066 = vmatpush1.bf16.xpose.msra.mxu0 %v1063
    %1067 = vmatprep.subr.bf16.mxu0 0
    %1068 = vmatpush1.bf16.xpose.msra.mxu0 0
    %1069 = vmatprep.subr.bf16.mxu0 0
    %1070 = vmatpush1.bf16.xpose.msra.mxu0 0
    %1071 = vmatprep.subr.bf16.mxu0 0
    %1072 = vmatpush1.bf16.xpose.msra.mxu0 0
    %1073 = vmatprep.subr.bf16.mxu0 0
    %1074 = vmatpush1.bf16.xpose.msra.mxu0 0
    %1075 = vmatprep.subr.bf16.mxu0 0
    %1076 = vmatpush1.bf16.xpose.msra.mxu0 0
    %1077 = vmatprep.subr.bf16.mxu0 0
    %1078 = vmatpush1.bf16.xpose.msra.mxu0 0
    %1079 = vmatprep.subr.bf16.mxu0 0
    %1080 = vmatpush1.bf16.xpose.msra.mxu0 0
    %1081 = vmatprep.subr.bf16.mxu0 0
    %1082 = vmatpush1.bf16.xpose.msra.mxu0 0
    %1083 = vmatprep.subr.bf16.mxu0 0
    %1084 = vmatpush1.bf16.xpose.msra.mxu0 0
    %1085 = vmatprep.subr.bf16.mxu0 0
    %1086 = vmatpush1.bf16.xpose.msra.mxu0 0
    %1087 = vmatprep.subr.bf16.mxu0 0
    %1088 = vmatpush1.bf16.xpose.msra.mxu0 0
    %1089 = vmatprep.subr.bf16.mxu0 0
    %1090 = vmatpush1.bf16.xpose.msra.mxu0 0
    %1091 = vmatprep.subr.bf16.mxu0 0
    %1092 = vmatpush1.bf16.xpose.msra.mxu0 0
    %1093 = vmatprep.subr.bf16.mxu0 0
    %1094 = vmatpush1.bf16.xpose.msra.mxu0 0
    %1095 = vmatprep.subr.bf16.mxu0 0
    %1096 = vmatpush1.bf16.xpose.msra.mxu0 0
    %1097 = vmatprep.mubr.bf16.mxu0 0
    %1098 = vmatmul.mubr.bf16.gmra.mrb[0].mxu0 %v1060
    %v1099 = vpop.f32.mrb[0].mxu0
    %v1100 = vadd.f32 0.0, %v1099
    %v1101 = vpop.f32.mrb[0].mxu0
    %v1102 = vpop.f32.mrb[0].mxu0
    %v1103 = vadd.f32 0.0, %v1102
    %v1104 = vpop.f32.mrb[0].mxu0
    %1105 = vdwg.mxu0
    %v1107 = vsel %vm1058, %v1052, 0
    %v1110 = vsel %vm1058, %v1054, 0
    %1112 = vmatprep.subr.bf16.mxu0 0
    %1113 = vmatpush1.bf16.xpose.msra.mxu0 %v1110
    %1114 = vmatprep.subr.bf16.mxu0 0
    %1115 = vmatpush1.bf16.xpose.msra.mxu0 0
    %1116 = vmatprep.subr.bf16.mxu0 0
    %1117 = vmatpush1.bf16.xpose.msra.mxu0 0
    %1118 = vmatprep.subr.bf16.mxu0 0
    %1119 = vmatpush1.bf16.xpose.msra.mxu0 0
    %1120 = vmatprep.subr.bf16.mxu0 0
    %1121 = vmatpush1.bf16.xpose.msra.mxu0 0
    %1122 = vmatprep.subr.bf16.mxu0 0
    %1123 = vmatpush1.bf16.xpose.msra.mxu0 0
    %1124 = vmatprep.subr.bf16.mxu0 0
    %1125 = vmatpush1.bf16.xpose.msra.mxu0 0
    %1126 = vmatprep.subr.bf16.mxu0 0
    %1127 = vmatpush1.bf16.xpose.msra.mxu0 0
    %1128 = vmatprep.subr.bf16.mxu0 0
    %1129 = vmatpush1.bf16.xpose.msra.mxu0 0
    %1130 = vmatprep.subr.bf16.mxu0 0
    %1131 = vmatpush1.bf16.xpose.msra.mxu0 0
    %1132 = vmatprep.subr.bf16.mxu0 0
    %1133 = vmatpush1.bf16.xpose.msra.mxu0 0
    %1134 = vmatprep.subr.bf16.mxu0 0
    %1135 = vmatpush1.bf16.xpose.msra.mxu0 0
    %1136 = vmatprep.subr.bf16.mxu0 0
    %1137 = vmatpush1.bf16.xpose.msra.mxu0 0
    %1138 = vmatprep.subr.bf16.mxu0 0
    %1139 = vmatpush1.bf16.xpose.msra.mxu0 0
    %1140 = vmatprep.subr.bf16.mxu0 0
    %1141 = vmatpush1.bf16.xpose.msra.mxu0 0
    %1142 = vmatprep.subr.bf16.mxu0 0
    %1143 = vmatpush1.bf16.xpose.msra.mxu0 0
    %1144 = vmatprep.mubr.bf16.mxu0 0
    %1145 = vmatmul.mubr.bf16.gmra.mrb[0].mxu0 %v1107
    %v1146 = vpop.f32.mrb[0].mxu0
    %v1147 = vadd.f32 0.0, %v1146
    %v1148 = vpop.f32.mrb[0].mxu0
    %v1149 = vpop.f32.mrb[0].mxu0
    %v1150 = vadd.f32 0.0, %v1149
    %v1151 = vpop.f32.mrb[0].mxu0
    %1152 = vdwg.mxu0
    %vm1153 = vcmask 130048
    %v1154 = vsel %vm1153, %v1100, -inf
    %1155 = vmax.xlane.f32.xlu0 %v1154
    %v1156 = vpop.xlane.xlu0 %1155
    %v1157 = vsel %vm1153, %v1103, -inf
    %1158 = vmax.xlane.f32.xlu0 %v1157
    %v1159 = vpop.xlane.xlu0 %1158
    %v1160 = vsel %vm1153, %v1147, -inf
    %1161 = vmax.xlane.f32.xlu0 %v1160
    %v1162 = vpop.xlane.xlu0 %1161
    %v1163 = vsel %vm1153, %v1150, -inf
    %1164 = vmax.xlane.f32.xlu0 %v1163
    %v1165 = vpop.xlane.xlu0 %1164
    %v1166 = vsub.f32 %v1100, %v1156
    %v1167 = vsub.f32 %v1103, %v1159
    %v1168 = vsub.f32 %v1147, %v1162
    %v1169 = vsub.f32 %v1150, %v1165
    %v1170 = vmul.f32 %v1166, 1.442695
    %v1171 = vpow.pop %v1170
    %v1172 = vmul.f32 %v1167, 1.442695
    %v1173 = vpow.pop %v1172
    %v1174 = vmul.f32 %v1168, 1.442695
    %v1175 = vpow.pop %v1174
    %v1176 = vmul.f32 %v1169, 1.442695
    %v1177 = vpow.pop %v1176
    %v1178 = vsel %vm1153, %v1171, 0.0
    %1179 = vadd.xlane.f32.xlu0 %v1178
    %v1180 = vpop.xlane.xlu0 %1179
    %v1181 = vsel %vm1153, %v1173, 0.0
    %1182 = vadd.xlane.f32.xlu0 %v1181
    %v1183 = vpop.xlane.xlu0 %1182
    %v1184 = vsel %vm1153, %v1175, 0.0
    %1185 = vadd.xlane.f32.xlu0 %v1184
    %v1186 = vpop.xlane.xlu0 %1185
    %v1187 = vsel %vm1153, %v1177, 0.0
    %1188 = vadd.xlane.f32.xlu0 %v1187
    %v1189 = vpop.xlane.xlu0 %1188
    %v1190 = vrcp.pop %v1180
    %v1191 = vrcp.pop %v1183
    %v1192 = vrcp.pop %v1186
    %v1193 = vrcp.pop %v1189
    %v1194 = vmul.f32 %v1171, %v1190
    %v1195 = vmul.f32 %v1173, %v1191
    %v1196 = vmul.f32 %v1175, %v1192
    %v1197 = vmul.f32 %v1177, %v1193
    %v1198 = vpack.c.bf16 %v1195, %v1194
    %v1199 = vpack.c.bf16 %v1197, %v1196
    %v1201 = vsel %vm1153, %v1198, 0
    %1203 = vmatprep.subr.bf16.mxu0 0
    %1204 = vmatpush1.bf16.msra.mxu0 %v1050
    %1205 = vmatprep.subr.bf16.mxu0 0
    %1206 = vmatpush1.bf16.msra.mxu0 0
    %1207 = vmatprep.subr.bf16.mxu0 0
    %1208 = vmatpush1.bf16.msra.mxu0 0
    %1209 = vmatprep.subr.bf16.mxu0 0
    %1210 = vmatpush1.bf16.msra.mxu0 0
    %1211 = vmatprep.subr.bf16.mxu0 0
    %1212 = vmatpush1.bf16.msra.mxu0 0
    %1213 = vmatprep.subr.bf16.mxu0 0
    %1214 = vmatpush1.bf16.msra.mxu0 0
    %1215 = vmatprep.subr.bf16.mxu0 0
    %1216 = vmatpush1.bf16.msra.mxu0 0
    %1217 = vmatprep.subr.bf16.mxu0 0
    %1218 = vmatpush1.bf16.msra.mxu0 0
    %1219 = vmatprep.subr.bf16.mxu0 0
    %1220 = vmatpush1.bf16.msra.mxu0 0
    %1221 = vmatprep.subr.bf16.mxu0 0
    %1222 = vmatpush1.bf16.msra.mxu0 0
    %1223 = vmatprep.subr.bf16.mxu0 0
    %1224 = vmatpush1.bf16.msra.mxu0 0
    %1225 = vmatprep.subr.bf16.mxu0 0
    %1226 = vmatpush1.bf16.msra.mxu0 0
    %1227 = vmatprep.subr.bf16.mxu0 0
    %1228 = vmatpush1.bf16.msra.mxu0 0
    %1229 = vmatprep.subr.bf16.mxu0 0
    %1230 = vmatpush1.bf16.msra.mxu0 0
    %1231 = vmatprep.subr.bf16.mxu0 0
    %1232 = vmatpush1.bf16.msra.mxu0 0
    %1233 = vmatprep.subr.bf16.mxu0 0
    %1234 = vmatpush1.bf16.msra.mxu0 0
    %1235 = vmatprep.mubr.bf16.mxu0 0
    %1236 = vmatmul.mubr.bf16.gmra.mrb[0].mxu0 %v1201
    %v1237 = vpop.f32.mrb[0].mxu0
    %v1238 = vadd.f32 0.0, %v1237
    %v1239 = vpop.f32.mrb[0].mxu0
    %v1240 = vpop.f32.mrb[0].mxu0
    %v1241 = vadd.f32 0.0, %v1240
    %v1242 = vpop.f32.mrb[0].mxu0
    %1243 = vdwg.mxu0
    %v1245 = vsel %vm1153, %v1199, 0
    %1247 = vmatprep.subr.bf16.mxu0 0
    %1248 = vmatpush1.bf16.msra.mxu0 %v1056
    %1249 = vmatprep.subr.bf16.mxu0 0
    %1250 = vmatpush1.bf16.msra.mxu0 0
    %1251 = vmatprep.subr.bf16.mxu0 0
    %1252 = vmatpush1.bf16.msra.mxu0 0
    %1253 = vmatprep.subr.bf16.mxu0 0
    %1254 = vmatpush1.bf16.msra.mxu0 0
    %1255 = vmatprep.subr.bf16.mxu0 0
    %1256 = vmatpush1.bf16.msra.mxu0 0
    %1257 = vmatprep.subr.bf16.mxu0 0
    %1258 = vmatpush1.bf16.msra.mxu0 0
    %1259 = vmatprep.subr.bf16.mxu0 0
    %1260 = vmatpush1.bf16.msra.mxu0 0
    %1261 = vmatprep.subr.bf16.mxu0 0
    %1262 = vmatpush1.bf16.msra.mxu0 0
    %1263 = vmatprep.subr.bf16.mxu0 0
    %1264 = vmatpush1.bf16.msra.mxu0 0
    %1265 = vmatprep.subr.bf16.mxu0 0
    %1266 = vmatpush1.bf16.msra.mxu0 0
    %1267 = vmatprep.subr.bf16.mxu0 0
    %1268 = vmatpush1.bf16.msra.mxu0 0
    %1269 = vmatprep.subr.bf16.mxu0 0
    %1270 = vmatpush1.bf16.msra.mxu0 0
    %1271 = vmatprep.subr.bf16.mxu0 0
    %1272 = vmatpush1.bf16.msra.mxu0 0
    %1273 = vmatprep.subr.bf16.mxu0 0
    %1274 = vmatpush1.bf16.msra.mxu0 0
    %1275 = vmatprep.subr.bf16.mxu0 0
    %1276 = vmatpush1.bf16.msra.mxu0 0
    %1277 = vmatprep.subr.bf16.mxu0 0
    %1278 = vmatpush1.bf16.msra.mxu0 0
    %1279 = vmatprep.mubr.bf16.mxu0 0
    %1280 = vmatmul.mubr.bf16.gmra.mrb[0].mxu0 %v1245
    %v1281 = vpop.f32.mrb[0].mxu0
    %v1282 = vadd.f32 0.0, %v1281
    %v1283 = vpop.f32.mrb[0].mxu0
    %v1284 = vpop.f32.mrb[0].mxu0
    %v1285 = vadd.f32 0.0, %v1284
    %v1286 = vpop.f32.mrb[0].mxu0
    %1287 = vdwg.mxu0
    %v1288 = vpack.c.bf16 %v1241, %v1238
    %v1289 = vpack.c.bf16 %v1285, %v1282
    %v1290 = vld [vmem:[#allocation13] sm:$0xff]
    %v1291 = vld [vmem:[#allocation13 + $0x8] sm:$0xff]
    %v1292 = vld [vmem:[#allocation13 + $0x10] sm:$0xff]
    %v1293 = vld [vmem:[#allocation13 + $0x18] sm:$0xff]
    %v1294 = vld [vmem:[#allocation13 + $0x20] sm:$0xff]
    %v1295 = vld [vmem:[#allocation13 + $0x28] sm:$0xff]
    %v1296 = vld [vmem:[#allocation13 + $0x30] sm:$0xff]
    %v1297 = vld [vmem:[#allocation13 + $0x38] sm:$0xff]
    %1299 = vrot.lane.b32.xlu0 %v1046, 64
    %v1300 = vpop.permute.xlu0 %1299
    %1302 = vrot.lane.b32.xlu0 %v1048, 64
    %v1303 = vpop.permute.xlu0 %1302
    %v1305 = vsel %vm1058, %v1300, 0
    %v1308 = vsel %vm1058, %v1303, 0
    %1310 = vmatprep.subr.bf16.mxu0 0
    %1311 = vmatpush1.bf16.xpose.msra.mxu0 %v1308
    %1312 = vmatprep.subr.bf16.mxu0 0
    %1313 = vmatpush1.bf16.xpose.msra.mxu0 0
    %1314 = vmatprep.subr.bf16.mxu0 0
    %1315 = vmatpush1.bf16.xpose.msra.mxu0 0
    %1316 = vmatprep.subr.bf16.mxu0 0
    %1317 = vmatpush1.bf16.xpose.msra.mxu0 0
    %1318 = vmatprep.subr.bf16.mxu0 0
    %1319 = vmatpush1.bf16.xpose.msra.mxu0 0
    %1320 = vmatprep.subr.bf16.mxu0 0
    %1321 = vmatpush1.bf16.xpose.msra.mxu0 0
    %1322 = vmatprep.subr.bf16.mxu0 0
    %1323 = vmatpush1.bf16.xpose.msra.mxu0 0
    %1324 = vmatprep.subr.bf16.mxu0 0
    %1325 = vmatpush1.bf16.xpose.msra.mxu0 0
    %1326 = vmatprep.subr.bf16.mxu0 0
    %1327 = vmatpush1.bf16.xpose.msra.mxu0 0
    %1328 = vmatprep.subr.bf16.mxu0 0
    %1329 = vmatpush1.bf16.xpose.msra.mxu0 0
    %1330 = vmatprep.subr.bf16.mxu0 0
    %1331 = vmatpush1.bf16.xpose.msra.mxu0 0
    %1332 = vmatprep.subr.bf16.mxu0 0
    %1333 = vmatpush1.bf16.xpose.msra.mxu0 0
    %1334 = vmatprep.subr.bf16.mxu0 0
    %1335 = vmatpush1.bf16.xpose.msra.mxu0 0
    %1336 = vmatprep.subr.bf16.mxu0 0
    %1337 = vmatpush1.bf16.xpose.msra.mxu0 0
    %1338 = vmatprep.subr.bf16.mxu0 0
    %1339 = vmatpush1.bf16.xpose.msra.mxu0 0
    %1340 = vmatprep.subr.bf16.mxu0 0
    %1341 = vmatpush1.bf16.xpose.msra.mxu0 0
    %1342 = vmatprep.mubr.bf16.mxu0 0
    %1343 = vmatmul.mubr.bf16.gmra.mrb[0].mxu0 %v1305
    %v1344 = vpop.f32.mrb[0].mxu0
    %v1345 = vadd.f32 0.0, %v1344
    %v1346 = vpop.f32.mrb[0].mxu0
    %v1347 = vpop.f32.mrb[0].mxu0
    %v1348 = vadd.f32 0.0, %v1347
    %v1349 = vpop.f32.mrb[0].mxu0
    %1350 = vdwg.mxu0
    %1352 = vrot.lane.b32.xlu0 %v1052, 64
    %v1353 = vpop.permute.xlu0 %1352
    %1355 = vrot.lane.b32.xlu0 %v1054, 64
    %v1356 = vpop.permute.xlu0 %1355
    %v1358 = vsel %vm1058, %v1353, 0
    %v1361 = vsel %vm1058, %v1356, 0
    %1363 = vmatprep.subr.bf16.mxu0 0
    %1364 = vmatpush1.bf16.xpose.msra.mxu0 %v1361
    %1365 = vmatprep.subr.bf16.mxu0 0
    %1366 = vmatpush1.bf16.xpose.msra.mxu0 0
    %1367 = vmatprep.subr.bf16.mxu0 0
    %1368 = vmatpush1.bf16.xpose.msra.mxu0 0
    %1369 = vmatprep.subr.bf16.mxu0 0
    %1370 = vmatpush1.bf16.xpose.msra.mxu0 0
    %1371 = vmatprep.subr.bf16.mxu0 0
    %1372 = vmatpush1.bf16.xpose.msra.mxu0 0
    %1373 = vmatprep.subr.bf16.mxu0 0
    %1374 = vmatpush1.bf16.xpose.msra.mxu0 0
    %1375 = vmatprep.subr.bf16.mxu0 0
    %1376 = vmatpush1.bf16.xpose.msra.mxu0 0
    %1377 = vmatprep.subr.bf16.mxu0 0
    %1378 = vmatpush1.bf16.xpose.msra.mxu0 0
    %1379 = vmatprep.subr.bf16.mxu0 0
    %1380 = vmatpush1.bf16.xpose.msra.mxu0 0
    %1381 = vmatprep.subr.bf16.mxu0 0
    %1382 = vmatpush1.bf16.xpose.msra.mxu0 0
    %1383 = vmatprep.subr.bf16.mxu0 0
    %1384 = vmatpush1.bf16.xpose.msra.mxu0 0
    %1385 = vmatprep.subr.bf16.mxu0 0
    %1386 = vmatpush1.bf16.xpose.msra.mxu0 0
    %1387 = vmatprep.subr.bf16.mxu0 0
    %1388 = vmatpush1.bf16.xpose.msra.mxu0 0
    %1389 = vmatprep.subr.bf16.mxu0 0
    %1390 = vmatpush1.bf16.xpose.msra.mxu0 0
    %1391 = vmatprep.subr.bf16.mxu0 0
    %1392 = vmatpush1.bf16.xpose.msra.mxu0 0
    %1393 = vmatprep.subr.bf16.mxu0 0
    %1394 = vmatpush1.bf16.xpose.msra.mxu0 0
    %1395 = vmatprep.mubr.bf16.mxu0 0
    %1396 = vmatmul.mubr.bf16.gmra.mrb[0].mxu0 %v1358
    %v1397 = vpop.f32.mrb[0].mxu0
    %v1398 = vadd.f32 0.0, %v1397
    %v1399 = vpop.f32.mrb[0].mxu0
    %v1400 = vpop.f32.mrb[0].mxu0
    %v1401 = vadd.f32 0.0, %v1400
    %v1402 = vpop.f32.mrb[0].mxu0
    %1403 = vdwg.mxu0
    %v1404 = vsel %vm1153, %v1345, -inf
    %1405 = vmax.xlane.f32.xlu0 %v1404
    %v1406 = vpop.xlane.xlu0 %1405
    %v1407 = vsel %vm1153, %v1348, -inf
    %1408 = vmax.xlane.f32.xlu0 %v1407
    %v1409 = vpop.xlane.xlu0 %1408
    %v1410 = vsel %vm1153, %v1398, -inf
    %1411 = vmax.xlane.f32.xlu0 %v1410
    %v1412 = vpop.xlane.xlu0 %1411
    %v1413 = vsel %vm1153, %v1401, -inf
    %1414 = vmax.xlane.f32.xlu0 %v1413
    %v1415 = vpop.xlane.xlu0 %1414
    %v1416 = vsub.f32 %v1345, %v1406
    %v1417 = vsub.f32 %v1348, %v1409
    %v1418 = vsub.f32 %v1398, %v1412
    %v1419 = vsub.f32 %v1401, %v1415
    %v1420 = vmul.f32 %v1416, 1.442695
    %v1421 = vpow.pop %v1420
    %v1422 = vmul.f32 %v1417, 1.442695
    %v1423 = vpow.pop %v1422
    %v1424 = vmul.f32 %v1418, 1.442695
    %v1425 = vpow.pop %v1424
    %v1426 = vmul.f32 %v1419, 1.442695
    %v1427 = vpow.pop %v1426
    %v1428 = vsel %vm1153, %v1421, 0.0
    %1429 = vadd.xlane.f32.xlu0 %v1428
    %v1430 = vpop.xlane.xlu0 %1429
    %v1431 = vsel %vm1153, %v1423, 0.0
    %1432 = vadd.xlane.f32.xlu0 %v1431
    %v1433 = vpop.xlane.xlu0 %1432
    %v1434 = vsel %vm1153, %v1425, 0.0
    %1435 = vadd.xlane.f32.xlu0 %v1434
    %v1436 = vpop.xlane.xlu0 %1435
    %v1437 = vsel %vm1153, %v1427, 0.0
    %1438 = vadd.xlane.f32.xlu0 %v1437
    %v1439 = vpop.xlane.xlu0 %1438
    %v1440 = vrcp.pop %v1430
    %v1441 = vrcp.pop %v1433
    %v1442 = vrcp.pop %v1436
    %v1443 = vrcp.pop %v1439
    %v1444 = vmul.f32 %v1421, %v1440
    %v1445 = vmul.f32 %v1423, %v1441
    %v1446 = vmul.f32 %v1425, %v1442
    %v1447 = vmul.f32 %v1427, %v1443
    %v1448 = vpack.c.bf16 %v1445, %v1444
    %v1449 = vpack.c.bf16 %v1447, %v1446
    %1451 = vrot.lane.b32.xlu0 %v1050, 64
    %v1452 = vpop.permute.xlu0 %1451
    %v1455 = vsel %vm1153, %v1448, 0
    %1457 = vmatprep.subr.bf16.mxu0 0
    %1458 = vmatpush1.bf16.msra.mxu0 %v1452
    %1459 = vmatprep.subr.bf16.mxu0 0
    %1460 = vmatpush1.bf16.msra.mxu0 0
    %1461 = vmatprep.subr.bf16.mxu0 0
    %1462 = vmatpush1.bf16.msra.mxu0 0
    %1463 = vmatprep.subr.bf16.mxu0 0
    %1464 = vmatpush1.bf16.msra.mxu0 0
    %1465 = vmatprep.subr.bf16.mxu0 0
    %1466 = vmatpush1.bf16.msra.mxu0 0
    %1467 = vmatprep.subr.bf16.mxu0 0
    %1468 = vmatpush1.bf16.msra.mxu0 0
    %1469 = vmatprep.subr.bf16.mxu0 0
    %1470 = vmatpush1.bf16.msra.mxu0 0
    %1471 = vmatprep.subr.bf16.mxu0 0
    %1472 = vmatpush1.bf16.msra.mxu0 0
    %1473 = vmatprep.subr.bf16.mxu0 0
    %1474 = vmatpush1.bf16.msra.mxu0 0
    %1475 = vmatprep.subr.bf16.mxu0 0
    %1476 = vmatpush1.bf16.msra.mxu0 0
    %1477 = vmatprep.subr.bf16.mxu0 0
    %1478 = vmatpush1.bf16.msra.mxu0 0
    %1479 = vmatprep.subr.bf16.mxu0 0
    %1480 = vmatpush1.bf16.msra.mxu0 0
    %1481 = vmatprep.subr.bf16.mxu0 0
    %1482 = vmatpush1.bf16.msra.mxu0 0
    %1483 = vmatprep.subr.bf16.mxu0 0
    %1484 = vmatpush1.bf16.msra.mxu0 0
    %1485 = vmatprep.subr.bf16.mxu0 0
    %1486 = vmatpush1.bf16.msra.mxu0 0
    %1487 = vmatprep.subr.bf16.mxu0 0
    %1488 = vmatpush1.bf16.msra.mxu0 0
    %1489 = vmatprep.mubr.bf16.mxu0 0
    %1490 = vmatmul.mubr.bf16.gmra.mrb[0].mxu0 %v1455
    %v1491 = vpop.f32.mrb[0].mxu0
    %v1492 = vadd.f32 0.0, %v1491
    %v1493 = vpop.f32.mrb[0].mxu0
    %v1494 = vpop.f32.mrb[0].mxu0
    %v1495 = vadd.f32 0.0, %v1494
    %v1496 = vpop.f32.mrb[0].mxu0
    %1497 = vdwg.mxu0
    %1499 = vrot.lane.b32.xlu0 %v1056, 64
    %v1500 = vpop.permute.xlu0 %1499
    %v1503 = vsel %vm1153, %v1449, 0
    %1505 = vmatprep.subr.bf16.mxu0 0
    %1506 = vmatpush1.bf16.msra.mxu0 %v1500
    %1507 = vmatprep.subr.bf16.mxu0 0
    %1508 = vmatpush1.bf16.msra.mxu0 0
    %1509 = vmatprep.subr.bf16.mxu0 0
    %1510 = vmatpush1.bf16.msra.mxu0 0
    %1511 = vmatprep.subr.bf16.mxu0 0
    %1512 = vmatpush1.bf16.msra.mxu0 0
    %1513 = vmatprep.subr.bf16.mxu0 0
    %1514 = vmatpush1.bf16.msra.mxu0 0
    %1515 = vmatprep.subr.bf16.mxu0 0
    %1516 = vmatpush1.bf16.msra.mxu0 0
    %1517 = vmatprep.subr.bf16.mxu0 0
    %1518 = vmatpush1.bf16.msra.mxu0 0
    %1519 = vmatprep.subr.bf16.mxu0 0
    %1520 = vmatpush1.bf16.msra.mxu0 0
    %1521 = vmatprep.subr.bf16.mxu0 0
    %1522 = vmatpush1.bf16.msra.mxu0 0
    %1523 = vmatprep.subr.bf16.mxu0 0
    %1524 = vmatpush1.bf16.msra.mxu0 0
    %1525 = vmatprep.subr.bf16.mxu0 0
    %1526 = vmatpush1.bf16.msra.mxu0 0
    %1527 = vmatprep.subr.bf16.mxu0 0
    %1528 = vmatpush1.bf16.msra.mxu0 0
    %1529 = vmatprep.subr.bf16.mxu0 0
    %1530 = vmatpush1.bf16.msra.mxu0 0
    %1531 = vmatprep.subr.bf16.mxu0 0
    %1532 = vmatpush1.bf16.msra.mxu0 0
    %1533 = vmatprep.subr.bf16.mxu0 0
    %1534 = vmatpush1.bf16.msra.mxu0 0
    %1535 = vmatprep.subr.bf16.mxu0 0
    %1536 = vmatpush1.bf16.msra.mxu0 0
    %1537 = vmatprep.mubr.bf16.mxu0 0
    %1538 = vmatmul.mubr.bf16.gmra.mrb[0].mxu0 %v1503
    %v1539 = vpop.f32.mrb[0].mxu0
    %v1540 = vadd.f32 0.0, %v1539
    %v1541 = vpop.f32.mrb[0].mxu0
    %v1542 = vpop.f32.mrb[0].mxu0
    %v1543 = vadd.f32 0.0, %v1542
    %v1544 = vpop.f32.mrb[0].mxu0
    %1545 = vdwg.mxu0
    %v1546 = vpack.c.bf16 %v1495, %v1492
    %v1547 = vpack.c.bf16 %v1543, %v1540
    %s1548 = scalar_lea.vmem [#allocation13], 64
    %v1549 = vld [vmem:[%s1548] sm:$0xff]
    %v1550 = vld [vmem:[%s1548 + $0x8] sm:$0xff]
    %v1551 = vld [vmem:[%s1548 + $0x10] sm:$0xff]
    %v1552 = vld [vmem:[%s1548 + $0x18] sm:$0xff]
    %v1553 = vld [vmem:[%s1548 + $0x20] sm:$0xff]
    %v1554 = vld [vmem:[%s1548 + $0x28] sm:$0xff]
    %v1555 = vld [vmem:[%s1548 + $0x30] sm:$0xff]
    %v1556 = vld [vmem:[%s1548 + $0x38] sm:$0xff]
    %v1565 = vunpack.c.l.b16 %v1549
    %v1566 = vunpack.c.h.b16 %v1549
    %v1567 = vunpack.c.l.b16 %v1550
    %v1568 = vunpack.c.h.b16 %v1550
    %v1569 = vunpack.c.l.b16 %v1551
    %v1570 = vunpack.c.h.b16 %v1551
    %v1571 = vunpack.c.l.b16 %v1552
    %v1572 = vunpack.c.h.b16 %v1552
    %v1573 = vunpack.c.l.b16 %v1553
    %v1574 = vunpack.c.h.b16 %v1553
    %v1575 = vunpack.c.l.b16 %v1554
    %v1576 = vunpack.c.h.b16 %v1554
    %v1577 = vunpack.c.l.b16 %v1555
    %v1578 = vunpack.c.h.b16 %v1555
    %v1579 = vunpack.c.l.b16 %v1556
    %v1580 = vunpack.c.h.b16 %v1556
    %v1581 = vpack.c.b16 %v1567, %v1565
    %v1582 = vpack.c.b16 %v1568, %v1566
    %v1583 = vpack.c.b16 %v1571, %v1569
    %v1584 = vpack.c.b16 %v1572, %v1570
    %v1585 = vpack.c.b16 %v1575, %v1573
    %v1586 = vpack.c.b16 %v1576, %v1574
    %v1587 = vpack.c.b16 %v1579, %v1577
    %v1588 = vpack.c.b16 %v1580, %v1578
    %v1598 = vsel %vm1058, %v1546, 0
    %v1601 = vsel %vm1058, %v1547, 0
    %1603 = vmatprep.subr.bf16.mxu0 %v1582
    %1604 = vmatpush1.bf16.msra.mxu0 %v1581
    %1605 = vmatprep.subr.bf16.mxu0 %v1584
    %1606 = vmatpush1.bf16.msra.mxu0 %v1583
    %1607 = vmatprep.subr.bf16.mxu0 %v1586
    %1608 = vmatpush1.bf16.msra.mxu0 %v1585
    %1609 = vmatprep.subr.bf16.mxu0 %v1588
    %1610 = vmatpush1.bf16.msra.mxu0 %v1587
    %1611 = vmatprep.subr.bf16.mxu0 0
    %1612 = vmatpush1.bf16.msra.mxu0 0
    %1613 = vmatprep.subr.bf16.mxu0 0
    %1614 = vmatpush1.bf16.msra.mxu0 0
    %1615 = vmatprep.subr.bf16.mxu0 0
    %1616 = vmatpush1.bf16.msra.mxu0 0
    %1617 = vmatprep.subr.bf16.mxu0 0
    %1618 = vmatpush1.bf16.msra.mxu0 0
    %1619 = vmatprep.subr.bf16.mxu0 0
    %1620 = vmatpush1.bf16.msra.mxu0 0
    %1621 = vmatprep.subr.bf16.mxu0 0
    %1622 = vmatpush1.bf16.msra.mxu0 0
    %1623 = vmatprep.subr.bf16.mxu0 0
    %1624 = vmatpush1.bf16.msra.mxu0 0
    %1625 = vmatprep.subr.bf16.mxu0 0
    %1626 = vmatpush1.bf16.msra.mxu0 0
    %1627 = vmatprep.subr.bf16.mxu0 0
    %1628 = vmatpush1.bf16.msra.mxu0 0
    %1629 = vmatprep.subr.bf16.mxu0 0
    %1630 = vmatpush1.bf16.msra.mxu0 0
    %1631 = vmatprep.subr.bf16.mxu0 0
    %1632 = vmatpush1.bf16.msra.mxu0 0
    %1633 = vmatprep.subr.bf16.mxu0 0
    %1634 = vmatpush1.bf16.msra.mxu0 0
    %1635 = vmatprep.mubr.bf16.mxu0 0
    %1636 = vmatmul.mubr.bf16.gmra.mrb[0].mxu0 %v1598
    %v1637 = vpop.f32.mrb[0].mxu0
    %v1638 = vadd.f32 0.0, %v1637
    %v1639 = vpop.f32.mrb[0].mxu0
    %v1640 = vadd.f32 0.0, %v1639
    %v1641 = vpop.f32.mrb[0].mxu0
    %v1642 = vadd.f32 0.0, %v1641
    %v1643 = vpop.f32.mrb[0].mxu0
    %v1644 = vadd.f32 0.0, %v1643
    %1645 = vmatprep.mubr.bf16.mxu0 0
    %1646 = vmatmul.mubr.bf16.gmra.mrb[0].mxu0 %v1601
    %v1647 = vpop.f32.mrb[0].mxu0
    %v1648 = vadd.f32 0.0, %v1647
    %v1649 = vpop.f32.mrb[0].mxu0
    %v1650 = vadd.f32 0.0, %v1649
    %v1651 = vpop.f32.mrb[0].mxu0
    %v1652 = vadd.f32 0.0, %v1651
    %v1653 = vpop.f32.mrb[0].mxu0
    %v1654 = vadd.f32 0.0, %v1653
    %1655 = vdwg.mxu0
    %v1664 = vunpack.c.l.b16 %v1290
    %v1665 = vunpack.c.h.b16 %v1290
    %v1666 = vunpack.c.l.b16 %v1291
    %v1667 = vunpack.c.h.b16 %v1291
    %v1668 = vunpack.c.l.b16 %v1292
    %v1669 = vunpack.c.h.b16 %v1292
    %v1670 = vunpack.c.l.b16 %v1293
    %v1671 = vunpack.c.h.b16 %v1293
    %v1672 = vunpack.c.l.b16 %v1294
    %v1673 = vunpack.c.h.b16 %v1294
    %v1674 = vunpack.c.l.b16 %v1295
    %v1675 = vunpack.c.h.b16 %v1295
    %v1676 = vunpack.c.l.b16 %v1296
    %v1677 = vunpack.c.h.b16 %v1296
    %v1678 = vunpack.c.l.b16 %v1297
    %v1679 = vunpack.c.h.b16 %v1297
    %v1680 = vpack.c.b16 %v1666, %v1664
    %v1681 = vpack.c.b16 %v1667, %v1665
    %v1682 = vpack.c.b16 %v1670, %v1668
    %v1683 = vpack.c.b16 %v1671, %v1669
    %v1684 = vpack.c.b16 %v1674, %v1672
    %v1685 = vpack.c.b16 %v1675, %v1673
    %v1686 = vpack.c.b16 %v1678, %v1676
    %v1687 = vpack.c.b16 %v1679, %v1677
    %v1697 = vsel %vm1058, %v1288, 0
    %v1700 = vsel %vm1058, %v1289, 0
    %1702 = vmatprep.subr.bf16.mxu0 %v1681
    %1703 = vmatpush1.bf16.msra.mxu0 %v1680
    %1704 = vmatprep.subr.bf16.mxu0 %v1683
    %1705 = vmatpush1.bf16.msra.mxu0 %v1682
    %1706 = vmatprep.subr.bf16.mxu0 %v1685
    %1707 = vmatpush1.bf16.msra.mxu0 %v1684
    %1708 = vmatprep.subr.bf16.mxu0 %v1687
    %1709 = vmatpush1.bf16.msra.mxu0 %v1686
    %1710 = vmatprep.subr.bf16.mxu0 0
    %1711 = vmatpush1.bf16.msra.mxu0 0
    %1712 = vmatprep.subr.bf16.mxu0 0
    %1713 = vmatpush1.bf16.msra.mxu0 0
    %1714 = vmatprep.subr.bf16.mxu0 0
    %1715 = vmatpush1.bf16.msra.mxu0 0
    %1716 = vmatprep.subr.bf16.mxu0 0
    %1717 = vmatpush1.bf16.msra.mxu0 0
    %1718 = vmatprep.subr.bf16.mxu0 0
    %1719 = vmatpush1.bf16.msra.mxu0 0
    %1720 = vmatprep.subr.bf16.mxu0 0
    %1721 = vmatpush1.bf16.msra.mxu0 0
    %1722 = vmatprep.subr.bf16.mxu0 0
    %1723 = vmatpush1.bf16.msra.mxu0 0
    %1724 = vmatprep.subr.bf16.mxu0 0
    %1725 = vmatpush1.bf16.msra.mxu0 0
    %1726 = vmatprep.subr.bf16.mxu0 0
    %1727 = vmatpush1.bf16.msra.mxu0 0
    %1728 = vmatprep.subr.bf16.mxu0 0
    %1729 = vmatpush1.bf16.msra.mxu0 0
    %1730 = vmatprep.subr.bf16.mxu0 0
    %1731 = vmatpush1.bf16.msra.mxu0 0
    %1732 = vmatprep.subr.bf16.mxu0 0
    %1733 = vmatpush1.bf16.msra.mxu0 0
    %1734 = vmatprep.mubr.bf16.mxu0 0
    %1735 = vmatmul.mubr.bf16.gmra.mrb[0].mxu0 %v1697
    %v1736 = vpop.f32.mrb[0].mxu0
    %v1737 = vadd.f32 %v1638, %v1736
    %v1738 = vpop.f32.mrb[0].mxu0
    %v1739 = vadd.f32 %v1640, %v1738
    %v1740 = vpop.f32.mrb[0].mxu0
    %v1741 = vadd.f32 %v1642, %v1740
    %v1742 = vpop.f32.mrb[0].mxu0
    %v1743 = vadd.f32 %v1644, %v1742
    %1744 = vmatprep.mubr.bf16.mxu0 0
    %1745 = vmatmul.mubr.bf16.gmra.mrb[0].mxu0 %v1700
    %v1746 = vpop.f32.mrb[0].mxu0
    %v1747 = vadd.f32 %v1648, %v1746
    %v1748 = vpop.f32.mrb[0].mxu0
    %v1749 = vadd.f32 %v1650, %v1748
    %v1750 = vpop.f32.mrb[0].mxu0
    %v1751 = vadd.f32 %v1652, %v1750
    %v1752 = vpop.f32.mrb[0].mxu0
    %v1753 = vadd.f32 %v1654, %v1752
    %1754 = vdwg.mxu0
    %v1756 = vsel %vm1058, %v1047, 0
    %v1759 = vsel %vm1058, %v1049, 0
    %1761 = vmatprep.subr.bf16.mxu0 0
    %1762 = vmatpush1.bf16.xpose.msra.mxu0 %v1759
    %1763 = vmatprep.subr.bf16.mxu0 0
    %1764 = vmatpush1.bf16.xpose.msra.mxu0 0
    %1765 = vmatprep.subr.bf16.mxu0 0
    %1766 = vmatpush1.bf16.xpose.msra.mxu0 0
    %1767 = vmatprep.subr.bf16.mxu0 0
    %1768 = vmatpush1.bf16.xpose.msra.mxu0 0
    %1769 = vmatprep.subr.bf16.mxu0 0
    %1770 = vmatpush1.bf16.xpose.msra.mxu0 0
    %1771 = vmatprep.subr.bf16.mxu0 0
    %1772 = vmatpush1.bf16.xpose.msra.mxu0 0
    %1773 = vmatprep.subr.bf16.mxu0 0
    %1774 = vmatpush1.bf16.xpose.msra.mxu0 0
    %1775 = vmatprep.subr.bf16.mxu0 0
    %1776 = vmatpush1.bf16.xpose.msra.mxu0 0
    %1777 = vmatprep.subr.bf16.mxu0 0
    %1778 = vmatpush1.bf16.xpose.msra.mxu0 0
    %1779 = vmatprep.subr.bf16.mxu0 0
    %1780 = vmatpush1.bf16.xpose.msra.mxu0 0
    %1781 = vmatprep.subr.bf16.mxu0 0
    %1782 = vmatpush1.bf16.xpose.msra.mxu0 0
    %1783 = vmatprep.subr.bf16.mxu0 0
    %1784 = vmatpush1.bf16.xpose.msra.mxu0 0
    %1785 = vmatprep.subr.bf16.mxu0 0
    %1786 = vmatpush1.bf16.xpose.msra.mxu0 0
    %1787 = vmatprep.subr.bf16.mxu0 0
    %1788 = vmatpush1.bf16.xpose.msra.mxu0 0
    %1789 = vmatprep.subr.bf16.mxu0 0
    %1790 = vmatpush1.bf16.xpose.msra.mxu0 0
    %1791 = vmatprep.subr.bf16.mxu0 0
    %1792 = vmatpush1.bf16.xpose.msra.mxu0 0
    %1793 = vmatprep.mubr.bf16.mxu0 0
    %1794 = vmatmul.mubr.bf16.gmra.mrb[0].mxu0 %v1756
    %v1795 = vpop.f32.mrb[0].mxu0
    %v1796 = vadd.f32 0.0, %v1795
    %v1797 = vpop.f32.mrb[0].mxu0
    %v1798 = vpop.f32.mrb[0].mxu0
    %v1799 = vadd.f32 0.0, %v1798
    %v1800 = vpop.f32.mrb[0].mxu0
    %1801 = vdwg.mxu0
    %v1803 = vsel %vm1058, %v1053, 0
    %v1806 = vsel %vm1058, %v1055, 0
    %1808 = vmatprep.subr.bf16.mxu0 0
    %1809 = vmatpush1.bf16.xpose.msra.mxu0 %v1806
    %1810 = vmatprep.subr.bf16.mxu0 0
    %1811 = vmatpush1.bf16.xpose.msra.mxu0 0
    %1812 = vmatprep.subr.bf16.mxu0 0
    %1813 = vmatpush1.bf16.xpose.msra.mxu0 0
    %1814 = vmatprep.subr.bf16.mxu0 0
    %1815 = vmatpush1.bf16.xpose.msra.mxu0 0
    %1816 = vmatprep.subr.bf16.mxu0 0
    %1817 = vmatpush1.bf16.xpose.msra.mxu0 0
    %1818 = vmatprep.subr.bf16.mxu0 0
    %1819 = vmatpush1.bf16.xpose.msra.mxu0 0
    %1820 = vmatprep.subr.bf16.mxu0 0
    %1821 = vmatpush1.bf16.xpose.msra.mxu0 0
    %1822 = vmatprep.subr.bf16.mxu0 0
    %1823 = vmatpush1.bf16.xpose.msra.mxu0 0
    %1824 = vmatprep.subr.bf16.mxu0 0
    %1825 = vmatpush1.bf16.xpose.msra.mxu0 0
    %1826 = vmatprep.subr.bf16.mxu0 0
    %1827 = vmatpush1.bf16.xpose.msra.mxu0 0
    %1828 = vmatprep.subr.bf16.mxu0 0
    %1829 = vmatpush1.bf16.xpose.msra.mxu0 0
    %1830 = vmatprep.subr.bf16.mxu0 0
    %1831 = vmatpush1.bf16.xpose.msra.mxu0 0
    %1832 = vmatprep.subr.bf16.mxu0 0
    %1833 = vmatpush1.bf16.xpose.msra.mxu0 0
    %1834 = vmatprep.subr.bf16.mxu0 0
    %1835 = vmatpush1.bf16.xpose.msra.mxu0 0
    %1836 = vmatprep.subr.bf16.mxu0 0
    %1837 = vmatpush1.bf16.xpose.msra.mxu0 0
    %1838 = vmatprep.subr.bf16.mxu0 0
    %1839 = vmatpush1.bf16.xpose.msra.mxu0 0
    %1840 = vmatprep.mubr.bf16.mxu0 0
    %1841 = vmatmul.mubr.bf16.gmra.mrb[0].mxu0 %v1803
    %v1842 = vpop.f32.mrb[0].mxu0
    %v1843 = vadd.f32 0.0, %v1842
    %v1844 = vpop.f32.mrb[0].mxu0
    %v1845 = vpop.f32.mrb[0].mxu0
    %v1846 = vadd.f32 0.0, %v1845
    %v1847 = vpop.f32.mrb[0].mxu0
    %1848 = vdwg.mxu0
    %v1849 = vsel %vm1153, %v1796, -inf
    %1850 = vmax.xlane.f32.xlu0 %v1849
    %v1851 = vpop.xlane.xlu0 %1850
    %v1852 = vsel %vm1153, %v1799, -inf
    %1853 = vmax.xlane.f32.xlu0 %v1852
    %v1854 = vpop.xlane.xlu0 %1853
    %v1855 = vsel %vm1153, %v1843, -inf
    %1856 = vmax.xlane.f32.xlu0 %v1855
    %v1857 = vpop.xlane.xlu0 %1856
    %v1858 = vsel %vm1153, %v1846, -inf
    %1859 = vmax.xlane.f32.xlu0 %v1858
    %v1860 = vpop.xlane.xlu0 %1859
    %v1861 = vsub.f32 %v1796, %v1851
    %v1862 = vsub.f32 %v1799, %v1854
    %v1863 = vsub.f32 %v1843, %v1857
    %v1864 = vsub.f32 %v1846, %v1860
    %v1865 = vmul.f32 %v1861, 1.442695
    %v1866 = vpow.pop %v1865
    %v1867 = vmul.f32 %v1862, 1.442695
    %v1868 = vpow.pop %v1867
    %v1869 = vmul.f32 %v1863, 1.442695
    %v1870 = vpow.pop %v1869
    %v1871 = vmul.f32 %v1864, 1.442695
    %v1872 = vpow.pop %v1871
    %v1873 = vsel %vm1153, %v1866, 0.0
    %1874 = vadd.xlane.f32.xlu0 %v1873
    %v1875 = vpop.xlane.xlu0 %1874
    %v1876 = vsel %vm1153, %v1868, 0.0
    %1877 = vadd.xlane.f32.xlu0 %v1876
    %v1878 = vpop.xlane.xlu0 %1877
    %v1879 = vsel %vm1153, %v1870, 0.0
    %1880 = vadd.xlane.f32.xlu0 %v1879
    %v1881 = vpop.xlane.xlu0 %1880
    %v1882 = vsel %vm1153, %v1872, 0.0
    %1883 = vadd.xlane.f32.xlu0 %v1882
    %v1884 = vpop.xlane.xlu0 %1883
    %v1885 = vrcp.pop %v1875
    %v1886 = vrcp.pop %v1878
    %v1887 = vrcp.pop %v1881
    %v1888 = vrcp.pop %v1884
    %v1889 = vmul.f32 %v1866, %v1885
    %v1890 = vmul.f32 %v1868, %v1886
    %v1891 = vmul.f32 %v1870, %v1887
    %v1892 = vmul.f32 %v1872, %v1888
    %v1893 = vpack.c.bf16 %v1890, %v1889
    %v1894 = vpack.c.bf16 %v1892, %v1891
    %v1896 = vsel %vm1153, %v1893, 0
    %1898 = vmatprep.subr.bf16.mxu0 0
    %1899 = vmatpush1.bf16.msra.mxu0 %v1051
    %1900 = vmatprep.subr.bf16.mxu0 0
    %1901 = vmatpush1.bf16.msra.mxu0 0
    %1902 = vmatprep.subr.bf16.mxu0 0
    %1903 = vmatpush1.bf16.msra.mxu0 0
    %1904 = vmatprep.subr.bf16.mxu0 0
    %1905 = vmatpush1.bf16.msra.mxu0 0
    %1906 = vmatprep.subr.bf16.mxu0 0
    %1907 = vmatpush1.bf16.msra.mxu0 0
    %1908 = vmatprep.subr.bf16.mxu0 0
    %1909 = vmatpush1.bf16.msra.mxu0 0
    %1910 = vmatprep.subr.bf16.mxu0 0
    %1911 = vmatpush1.bf16.msra.mxu0 0
    %1912 = vmatprep.subr.bf16.mxu0 0
    %1913 = vmatpush1.bf16.msra.mxu0 0
    %1914 = vmatprep.subr.bf16.mxu0 0
    %1915 = vmatpush1.bf16.msra.mxu0 0
    %1916 = vmatprep.subr.bf16.mxu0 0
    %1917 = vmatpush1.bf16.msra.mxu0 0
    %1918 = vmatprep.subr.bf16.mxu0 0
    %1919 = vmatpush1.bf16.msra.mxu0 0
    %1920 = vmatprep.subr.bf16.mxu0 0
    %1921 = vmatpush1.bf16.msra.mxu0 0
    %1922 = vmatprep.subr.bf16.mxu0 0
    %1923 = vmatpush1.bf16.msra.mxu0 0
    %1924 = vmatprep.subr.bf16.mxu0 0
    %1925 = vmatpush1.bf16.msra.mxu0 0
    %1926 = vmatprep.subr.bf16.mxu0 0
    %1927 = vmatpush1.bf16.msra.mxu0 0
    %1928 = vmatprep.subr.bf16.mxu0 0
    %1929 = vmatpush1.bf16.msra.mxu0 0
    %1930 = vmatprep.mubr.bf16.mxu0 0
    %1931 = vmatmul.mubr.bf16.gmra.mrb[0].mxu0 %v1896
    %v1932 = vpop.f32.mrb[0].mxu0
    %v1933 = vadd.f32 0.0, %v1932
    %v1934 = vpop.f32.mrb[0].mxu0
    %v1935 = vpop.f32.mrb[0].mxu0
    %v1936 = vadd.f32 0.0, %v1935
    %v1937 = vpop.f32.mrb[0].mxu0
    %1938 = vdwg.mxu0
    %v1940 = vsel %vm1153, %v1894, 0
    %1942 = vmatprep.subr.bf16.mxu0 0
    %1943 = vmatpush1.bf16.msra.mxu0 %v1057
    %1944 = vmatprep.subr.bf16.mxu0 0
    %1945 = vmatpush1.bf16.msra.mxu0 0
    %1946 = vmatprep.subr.bf16.mxu0 0
    %1947 = vmatpush1.bf16.msra.mxu0 0
    %1948 = vmatprep.subr.bf16.mxu0 0
    %1949 = vmatpush1.bf16.msra.mxu0 0
    %1950 = vmatprep.subr.bf16.mxu0 0
    %1951 = vmatpush1.bf16.msra.mxu0 0
    %1952 = vmatprep.subr.bf16.mxu0 0
    %1953 = vmatpush1.bf16.msra.mxu0 0
    %1954 = vmatprep.subr.bf16.mxu0 0
    %1955 = vmatpush1.bf16.msra.mxu0 0
    %1956 = vmatprep.subr.bf16.mxu0 0
    %1957 = vmatpush1.bf16.msra.mxu0 0
    %1958 = vmatprep.subr.bf16.mxu0 0
    %1959 = vmatpush1.bf16.msra.mxu0 0
    %1960 = vmatprep.subr.bf16.mxu0 0
    %1961 = vmatpush1.bf16.msra.mxu0 0
    %1962 = vmatprep.subr.bf16.mxu0 0
    %1963 = vmatpush1.bf16.msra.mxu0 0
    %1964 = vmatprep.subr.bf16.mxu0 0
    %1965 = vmatpush1.bf16.msra.mxu0 0
    %1966 = vmatprep.subr.bf16.mxu0 0
    %1967 = vmatpush1.bf16.msra.mxu0 0
    %1968 = vmatprep.subr.bf16.mxu0 0
    %1969 = vmatpush1.bf16.msra.mxu0 0
    %1970 = vmatprep.subr.bf16.mxu0 0
    %1971 = vmatpush1.bf16.msra.mxu0 0
    %1972 = vmatprep.subr.bf16.mxu0 0
    %1973 = vmatpush1.bf16.msra.mxu0 0
    %1974 = vmatprep.mubr.bf16.mxu0 0
    %1975 = vmatmul.mubr.bf16.gmra.mrb[0].mxu0 %v1940
    %v1976 = vpop.f32.mrb[0].mxu0
    %v1977 = vadd.f32 0.0, %v1976
    %v1978 = vpop.f32.mrb[0].mxu0
    %v1979 = vpop.f32.mrb[0].mxu0
    %v1980 = vadd.f32 0.0, %v1979
    %v1981 = vpop.f32.mrb[0].mxu0
    %1982 = vdwg.mxu0
    %v1983 = vpack.c.bf16 %v1936, %v1933
    %v1984 = vpack.c.bf16 %v1980, %v1977
    %s1985 = scalar_lea.vmem [#allocation13], 128
    %v1986 = vld [vmem:[%s1985] sm:$0xff]
    %v1987 = vld [vmem:[%s1985 + $0x8] sm:$0xff]
    %v1988 = vld [vmem:[%s1985 + $0x10] sm:$0xff]
    %v1989 = vld [vmem:[%s1985 + $0x18] sm:$0xff]
    %v1990 = vld [vmem:[%s1985 + $0x20] sm:$0xff]
    %v1991 = vld [vmem:[%s1985 + $0x28] sm:$0xff]
    %v1992 = vld [vmem:[%s1985 + $0x30] sm:$0xff]
    %v1993 = vld [vmem:[%s1985 + $0x38] sm:$0xff]
    %v2002 = vunpack.c.l.b16 %v1986
    %v2003 = vunpack.c.h.b16 %v1986
    %v2004 = vunpack.c.l.b16 %v1987
    %v2005 = vunpack.c.h.b16 %v1987
    %v2006 = vunpack.c.l.b16 %v1988
    %v2007 = vunpack.c.h.b16 %v1988
    %v2008 = vunpack.c.l.b16 %v1989
    %v2009 = vunpack.c.h.b16 %v1989
    %v2010 = vunpack.c.l.b16 %v1990
    %v2011 = vunpack.c.h.b16 %v1990
    %v2012 = vunpack.c.l.b16 %v1991
    %v2013 = vunpack.c.h.b16 %v1991
    %v2014 = vunpack.c.l.b16 %v1992
    %v2015 = vunpack.c.h.b16 %v1992
    %v2016 = vunpack.c.l.b16 %v1993
    %v2017 = vunpack.c.h.b16 %v1993
    %v2018 = vpack.c.b16 %v2004, %v2002
    %v2019 = vpack.c.b16 %v2005, %v2003
    %v2020 = vpack.c.b16 %v2008, %v2006
    %v2021 = vpack.c.b16 %v2009, %v2007
    %v2022 = vpack.c.b16 %v2012, %v2010
    %v2023 = vpack.c.b16 %v2013, %v2011
    %v2024 = vpack.c.b16 %v2016, %v2014
    %v2025 = vpack.c.b16 %v2017, %v2015
    %v2035 = vsel %vm1058, %v1983, 0
    %v2038 = vsel %vm1058, %v1984, 0
    %2040 = vmatprep.subr.bf16.mxu0 %v2019
    %2041 = vmatpush1.bf16.msra.mxu0 %v2018
    %2042 = vmatprep.subr.bf16.mxu0 %v2021
    %2043 = vmatpush1.bf16.msra.mxu0 %v2020
    %2044 = vmatprep.subr.bf16.mxu0 %v2023
    %2045 = vmatpush1.bf16.msra.mxu0 %v2022
    %2046 = vmatprep.subr.bf16.mxu0 %v2025
    %2047 = vmatpush1.bf16.msra.mxu0 %v2024
    %2048 = vmatprep.subr.bf16.mxu0 0
    %2049 = vmatpush1.bf16.msra.mxu0 0
    %2050 = vmatprep.subr.bf16.mxu0 0
    %2051 = vmatpush1.bf16.msra.mxu0 0
    %2052 = vmatprep.subr.bf16.mxu0 0
    %2053 = vmatpush1.bf16.msra.mxu0 0
    %2054 = vmatprep.subr.bf16.mxu0 0
    %2055 = vmatpush1.bf16.msra.mxu0 0
    %2056 = vmatprep.subr.bf16.mxu0 0
    %2057 = vmatpush1.bf16.msra.mxu0 0
    %2058 = vmatprep.subr.bf16.mxu0 0
    %2059 = vmatpush1.bf16.msra.mxu0 0
    %2060 = vmatprep.subr.bf16.mxu0 0
    %2061 = vmatpush1.bf16.msra.mxu0 0
    %2062 = vmatprep.subr.bf16.mxu0 0
    %2063 = vmatpush1.bf16.msra.mxu0 0
    %2064 = vmatprep.subr.bf16.mxu0 0
    %2065 = vmatpush1.bf16.msra.mxu0 0
    %2066 = vmatprep.subr.bf16.mxu0 0
    %2067 = vmatpush1.bf16.msra.mxu0 0
    %2068 = vmatprep.subr.bf16.mxu0 0
    %2069 = vmatpush1.bf16.msra.mxu0 0
    %2070 = vmatprep.subr.bf16.mxu0 0
    %2071 = vmatpush1.bf16.msra.mxu0 0
    %2072 = vmatprep.mubr.bf16.mxu0 0
    %2073 = vmatmul.mubr.bf16.gmra.mrb[0].mxu0 %v2035
    %v2074 = vpop.f32.mrb[0].mxu0
    %v2075 = vadd.f32 0.0, %v2074
    %v2076 = vpop.f32.mrb[0].mxu0
    %v2077 = vadd.f32 0.0, %v2076
    %v2078 = vpop.f32.mrb[0].mxu0
    %v2079 = vadd.f32 0.0, %v2078
    %v2080 = vpop.f32.mrb[0].mxu0
    %v2081 = vadd.f32 0.0, %v2080
    %2082 = vmatprep.mubr.bf16.mxu0 0
    %2083 = vmatmul.mubr.bf16.gmra.mrb[0].mxu0 %v2038
    %v2084 = vpop.f32.mrb[0].mxu0
    %v2085 = vadd.f32 0.0, %v2084
    %v2086 = vpop.f32.mrb[0].mxu0
    %v2087 = vadd.f32 0.0, %v2086
    %v2088 = vpop.f32.mrb[0].mxu0
    %v2089 = vadd.f32 0.0, %v2088
    %v2090 = vpop.f32.mrb[0].mxu0
    %v2091 = vadd.f32 0.0, %v2090
    %2092 = vdwg.mxu0
    %v2093 = vadd.f32 %v1737, %v2075
    %v2094 = vadd.f32 %v1739, %v2077
    %v2095 = vadd.f32 %v1741, %v2079
    %v2096 = vadd.f32 %v1743, %v2081
    %v2097 = vadd.f32 %v1747, %v2085
    %v2098 = vadd.f32 %v1749, %v2087
    %v2099 = vadd.f32 %v1751, %v2089
    %v2100 = vadd.f32 %v1753, %v2091
    %2102 = vrot.lane.b32.xlu0 %v1047, 64
    %v2103 = vpop.permute.xlu0 %2102
    %2105 = vrot.lane.b32.xlu0 %v1049, 64
    %v2106 = vpop.permute.xlu0 %2105
    %v2108 = vsel %vm1058, %v2103, 0
    %v2111 = vsel %vm1058, %v2106, 0
    %2113 = vmatprep.subr.bf16.mxu0 0
    %2114 = vmatpush1.bf16.xpose.msra.mxu0 %v2111
    %2115 = vmatprep.subr.bf16.mxu0 0
    %2116 = vmatpush1.bf16.xpose.msra.mxu0 0
    %2117 = vmatprep.subr.bf16.mxu0 0
    %2118 = vmatpush1.bf16.xpose.msra.mxu0 0
    %2119 = vmatprep.subr.bf16.mxu0 0
    %2120 = vmatpush1.bf16.xpose.msra.mxu0 0
    %2121 = vmatprep.subr.bf16.mxu0 0
    %2122 = vmatpush1.bf16.xpose.msra.mxu0 0
    %2123 = vmatprep.subr.bf16.mxu0 0
    %2124 = vmatpush1.bf16.xpose.msra.mxu0 0
    %2125 = vmatprep.subr.bf16.mxu0 0
    %2126 = vmatpush1.bf16.xpose.msra.mxu0 0
    %2127 = vmatprep.subr.bf16.mxu0 0
    %2128 = vmatpush1.bf16.xpose.msra.mxu0 0
    %2129 = vmatprep.subr.bf16.mxu0 0
    %2130 = vmatpush1.bf16.xpose.msra.mxu0 0
    %2131 = vmatprep.subr.bf16.mxu0 0
    %2132 = vmatpush1.bf16.xpose.msra.mxu0 0
    %2133 = vmatprep.subr.bf16.mxu0 0
    %2134 = vmatpush1.bf16.xpose.msra.mxu0 0
    %2135 = vmatprep.subr.bf16.mxu0 0
    %2136 = vmatpush1.bf16.xpose.msra.mxu0 0
    %2137 = vmatprep.subr.bf16.mxu0 0
    %2138 = vmatpush1.bf16.xpose.msra.mxu0 0
    %2139 = vmatprep.subr.bf16.mxu0 0
    %2140 = vmatpush1.bf16.xpose.msra.mxu0 0
    %2141 = vmatprep.subr.bf16.mxu0 0
    %2142 = vmatpush1.bf16.xpose.msra.mxu0 0
    %2143 = vmatprep.subr.bf16.mxu0 0
    %2144 = vmatpush1.bf16.xpose.msra.mxu0 0
    %2145 = vmatprep.mubr.bf16.mxu0 0
    %2146 = vmatmul.mubr.bf16.gmra.mrb[0].mxu0 %v2108
    %v2147 = vpop.f32.mrb[0].mxu0
    %v2148 = vadd.f32 0.0, %v2147
    %v2149 = vpop.f32.mrb[0].mxu0
    %v2150 = vpop.f32.mrb[0].mxu0
    %v2151 = vadd.f32 0.0, %v2150
    %v2152 = vpop.f32.mrb[0].mxu0
    %2153 = vdwg.mxu0
    %2155 = vrot.lane.b32.xlu0 %v1053, 64
    %v2156 = vpop.permute.xlu0 %2155
    %2158 = vrot.lane.b32.xlu0 %v1055, 64
    %v2159 = vpop.permute.xlu0 %2158
    %v2161 = vsel %vm1058, %v2156, 0
    %v2164 = vsel %vm1058, %v2159, 0
    %2166 = vmatprep.subr.bf16.mxu0 0
    %2167 = vmatpush1.bf16.xpose.msra.mxu0 %v2164
    %2168 = vmatprep.subr.bf16.mxu0 0
    %2169 = vmatpush1.bf16.xpose.msra.mxu0 0
    %2170 = vmatprep.subr.bf16.mxu0 0
    %2171 = vmatpush1.bf16.xpose.msra.mxu0 0
    %2172 = vmatprep.subr.bf16.mxu0 0
    %2173 = vmatpush1.bf16.xpose.msra.mxu0 0
    %2174 = vmatprep.subr.bf16.mxu0 0
    %2175 = vmatpush1.bf16.xpose.msra.mxu0 0
    %2176 = vmatprep.subr.bf16.mxu0 0
    %2177 = vmatpush1.bf16.xpose.msra.mxu0 0
    %2178 = vmatprep.subr.bf16.mxu0 0
    %2179 = vmatpush1.bf16.xpose.msra.mxu0 0
    %2180 = vmatprep.subr.bf16.mxu0 0
    %2181 = vmatpush1.bf16.xpose.msra.mxu0 0
    %2182 = vmatprep.subr.bf16.mxu0 0
    %2183 = vmatpush1.bf16.xpose.msra.mxu0 0
    %2184 = vmatprep.subr.bf16.mxu0 0
    %2185 = vmatpush1.bf16.xpose.msra.mxu0 0
    %2186 = vmatprep.subr.bf16.mxu0 0
    %2187 = vmatpush1.bf16.xpose.msra.mxu0 0
    %2188 = vmatprep.subr.bf16.mxu0 0
    %2189 = vmatpush1.bf16.xpose.msra.mxu0 0
    %2190 = vmatprep.subr.bf16.mxu0 0
    %2191 = vmatpush1.bf16.xpose.msra.mxu0 0
    %2192 = vmatprep.subr.bf16.mxu0 0
    %2193 = vmatpush1.bf16.xpose.msra.mxu0 0
    %2194 = vmatprep.subr.bf16.mxu0 0
    %2195 = vmatpush1.bf16.xpose.msra.mxu0 0
    %2196 = vmatprep.subr.bf16.mxu0 0
    %2197 = vmatpush1.bf16.xpose.msra.mxu0 0
    %2198 = vmatprep.mubr.bf16.mxu0 0
    %2199 = vmatmul.mubr.bf16.gmra.mrb[0].mxu0 %v2161
    %v2200 = vpop.f32.mrb[0].mxu0
    %v2201 = vadd.f32 0.0, %v2200
    %v2202 = vpop.f32.mrb[0].mxu0
    %v2203 = vpop.f32.mrb[0].mxu0
    %v2204 = vadd.f32 0.0, %v2203
    %v2205 = vpop.f32.mrb[0].mxu0
    %2206 = vdwg.mxu0
    %v2207 = vsel %vm1153, %v2148, -inf
    %2208 = vmax.xlane.f32.xlu0 %v2207
    %v2209 = vpop.xlane.xlu0 %2208
    %v2210 = vsel %vm1153, %v2151, -inf
    %2211 = vmax.xlane.f32.xlu0 %v2210
    %v2212 = vpop.xlane.xlu0 %2211
    %v2213 = vsel %vm1153, %v2201, -inf
    %2214 = vmax.xlane.f32.xlu0 %v2213
    %v2215 = vpop.xlane.xlu0 %2214
    %v2216 = vsel %vm1153, %v2204, -inf
    %2217 = vmax.xlane.f32.xlu0 %v2216
    %v2218 = vpop.xlane.xlu0 %2217
    %v2219 = vsub.f32 %v2148, %v2209
    %v2220 = vsub.f32 %v2151, %v2212
    %v2221 = vsub.f32 %v2201, %v2215
    %v2222 = vsub.f32 %v2204, %v2218
    %v2223 = vmul.f32 %v2219, 1.442695
    %v2224 = vpow.pop %v2223
    %v2225 = vmul.f32 %v2220, 1.442695
    %v2226 = vpow.pop %v2225
    %v2227 = vmul.f32 %v2221, 1.442695
    %v2228 = vpow.pop %v2227
    %v2229 = vmul.f32 %v2222, 1.442695
    %v2230 = vpow.pop %v2229
    %v2231 = vsel %vm1153, %v2224, 0.0
    %2232 = vadd.xlane.f32.xlu0 %v2231
    %v2233 = vpop.xlane.xlu0 %2232
    %v2234 = vsel %vm1153, %v2226, 0.0
    %2235 = vadd.xlane.f32.xlu0 %v2234
    %v2236 = vpop.xlane.xlu0 %2235
    %v2237 = vsel %vm1153, %v2228, 0.0
    %2238 = vadd.xlane.f32.xlu0 %v2237
    %v2239 = vpop.xlane.xlu0 %2238
    %v2240 = vsel %vm1153, %v2230, 0.0
    %2241 = vadd.xlane.f32.xlu0 %v2240
    %v2242 = vpop.xlane.xlu0 %2241
    %v2243 = vrcp.pop %v2233
    %v2244 = vrcp.pop %v2236
    %v2245 = vrcp.pop %v2239
    %v2246 = vrcp.pop %v2242
    %v2247 = vmul.f32 %v2224, %v2243
    %v2248 = vmul.f32 %v2226, %v2244
    %v2249 = vmul.f32 %v2228, %v2245
    %v2250 = vmul.f32 %v2230, %v2246
    %v2251 = vpack.c.bf16 %v2248, %v2247
    %v2252 = vpack.c.bf16 %v2250, %v2249
    %2254 = vrot.lane.b32.xlu0 %v1051, 64
    %v2255 = vpop.permute.xlu0 %2254
    %v2258 = vsel %vm1153, %v2251, 0
    %2260 = vmatprep.subr.bf16.mxu0 0
    %2261 = vmatpush1.bf16.msra.mxu0 %v2255
    %2262 = vmatprep.subr.bf16.mxu0 0
    %2263 = vmatpush1.bf16.msra.mxu0 0
    %2264 = vmatprep.subr.bf16.mxu0 0
    %2265 = vmatpush1.bf16.msra.mxu0 0
    %2266 = vmatprep.subr.bf16.mxu0 0
    %2267 = vmatpush1.bf16.msra.mxu0 0
    %2268 = vmatprep.subr.bf16.mxu0 0
    %2269 = vmatpush1.bf16.msra.mxu0 0
    %2270 = vmatprep.subr.bf16.mxu0 0
    %2271 = vmatpush1.bf16.msra.mxu0 0
    %2272 = vmatprep.subr.bf16.mxu0 0
    %2273 = vmatpush1.bf16.msra.mxu0 0
    %2274 = vmatprep.subr.bf16.mxu0 0
    %2275 = vmatpush1.bf16.msra.mxu0 0
    %2276 = vmatprep.subr.bf16.mxu0 0
    %2277 = vmatpush1.bf16.msra.mxu0 0
    %2278 = vmatprep.subr.bf16.mxu0 0
    %2279 = vmatpush1.bf16.msra.mxu0 0
    %2280 = vmatprep.subr.bf16.mxu0 0
    %2281 = vmatpush1.bf16.msra.mxu0 0
    %2282 = vmatprep.subr.bf16.mxu0 0
    %2283 = vmatpush1.bf16.msra.mxu0 0
    %2284 = vmatprep.subr.bf16.mxu0 0
    %2285 = vmatpush1.bf16.msra.mxu0 0
    %2286 = vmatprep.subr.bf16.mxu0 0
    %2287 = vmatpush1.bf16.msra.mxu0 0
    %2288 = vmatprep.subr.bf16.mxu0 0
    %2289 = vmatpush1.bf16.msra.mxu0 0
    %2290 = vmatprep.subr.bf16.mxu0 0
    %2291 = vmatpush1.bf16.msra.mxu0 0
    %2292 = vmatprep.mubr.bf16.mxu0 0
    %2293 = vmatmul.mubr.bf16.gmra.mrb[0].mxu0 %v2258
    %v2294 = vpop.f32.mrb[0].mxu0
    %v2295 = vadd.f32 0.0, %v2294
    %v2296 = vpop.f32.mrb[0].mxu0
    %v2297 = vpop.f32.mrb[0].mxu0
    %v2298 = vadd.f32 0.0, %v2297
    %v2299 = vpop.f32.mrb[0].mxu0
    %2300 = vdwg.mxu0
    %2302 = vrot.lane.b32.xlu0 %v1057, 64
    %v2303 = vpop.permute.xlu0 %2302
    %v2306 = vsel %vm1153, %v2252, 0
    %2308 = vmatprep.subr.bf16.mxu0 0
    %2309 = vmatpush1.bf16.msra.mxu0 %v2303
    %2310 = vmatprep.subr.bf16.mxu0 0
    %2311 = vmatpush1.bf16.msra.mxu0 0
    %2312 = vmatprep.subr.bf16.mxu0 0
    %2313 = vmatpush1.bf16.msra.mxu0 0
    %2314 = vmatprep.subr.bf16.mxu0 0
    %2315 = vmatpush1.bf16.msra.mxu0 0
    %2316 = vmatprep.subr.bf16.mxu0 0
    %2317 = vmatpush1.bf16.msra.mxu0 0
    %2318 = vmatprep.subr.bf16.mxu0 0
    %2319 = vmatpush1.bf16.msra.mxu0 0
    %2320 = vmatprep.subr.bf16.mxu0 0
    %2321 = vmatpush1.bf16.msra.mxu0 0
    %2322 = vmatprep.subr.bf16.mxu0 0
    %2323 = vmatpush1.bf16.msra.mxu0 0
    %2324 = vmatprep.subr.bf16.mxu0 0
    %2325 = vmatpush1.bf16.msra.mxu0 0
    %2326 = vmatprep.subr.bf16.mxu0 0
    %2327 = vmatpush1.bf16.msra.mxu0 0
    %2328 = vmatprep.subr.bf16.mxu0 0
    %2329 = vmatpush1.bf16.msra.mxu0 0
    %2330 = vmatprep.subr.bf16.mxu0 0
    %2331 = vmatpush1.bf16.msra.mxu0 0
    %2332 = vmatprep.subr.bf16.mxu0 0
    %2333 = vmatpush1.bf16.msra.mxu0 0
    %2334 = vmatprep.subr.bf16.mxu0 0
    %2335 = vmatpush1.bf16.msra.mxu0 0
    %2336 = vmatprep.subr.bf16.mxu0 0
    %2337 = vmatpush1.bf16.msra.mxu0 0
    %2338 = vmatprep.subr.bf16.mxu0 0
    %2339 = vmatpush1.bf16.msra.mxu0 0
    %2340 = vmatprep.mubr.bf16.mxu0 0
    %2341 = vmatmul.mubr.bf16.gmra.mrb[0].mxu0 %v2306
    %v2342 = vpop.f32.mrb[0].mxu0
    %v2343 = vadd.f32 0.0, %v2342
    %v2344 = vpop.f32.mrb[0].mxu0
    %v2345 = vpop.f32.mrb[0].mxu0
    %v2346 = vadd.f32 0.0, %v2345
    %v2347 = vpop.f32.mrb[0].mxu0
    %2348 = vdwg.mxu0
    %v2349 = vpack.c.bf16 %v2298, %v2295
    %v2350 = vpack.c.bf16 %v2346, %v2343
    %s2351 = scalar_lea.vmem [#allocation13], 192
    %v2352 = vld [vmem:[%s2351] sm:$0xff]
    %v2353 = vld [vmem:[%s2351 + $0x8] sm:$0xff]
    %v2354 = vld [vmem:[%s2351 + $0x10] sm:$0xff]
    %v2355 = vld [vmem:[%s2351 + $0x18] sm:$0xff]
    %v2356 = vld [vmem:[%s2351 + $0x20] sm:$0xff]
    %v2357 = vld [vmem:[%s2351 + $0x28] sm:$0xff]
    %v2358 = vld [vmem:[%s2351 + $0x30] sm:$0xff]
    %v2359 = vld [vmem:[%s2351 + $0x38] sm:$0xff]
    %v2368 = vunpack.c.l.b16 %v2352
    %v2369 = vunpack.c.h.b16 %v2352
    %v2370 = vunpack.c.l.b16 %v2353
    %v2371 = vunpack.c.h.b16 %v2353
    %v2372 = vunpack.c.l.b16 %v2354
    %v2373 = vunpack.c.h.b16 %v2354
    %v2374 = vunpack.c.l.b16 %v2355
    %v2375 = vunpack.c.h.b16 %v2355
    %v2376 = vunpack.c.l.b16 %v2356
    %v2377 = vunpack.c.h.b16 %v2356
    %v2378 = vunpack.c.l.b16 %v2357
    %v2379 = vunpack.c.h.b16 %v2357
    %v2380 = vunpack.c.l.b16 %v2358
    %v2381 = vunpack.c.h.b16 %v2358
    %v2382 = vunpack.c.l.b16 %v2359
    %v2383 = vunpack.c.h.b16 %v2359
    %v2384 = vpack.c.b16 %v2370, %v2368
    %v2385 = vpack.c.b16 %v2371, %v2369
    %v2386 = vpack.c.b16 %v2374, %v2372
    %v2387 = vpack.c.b16 %v2375, %v2373
    %v2388 = vpack.c.b16 %v2378, %v2376
    %v2389 = vpack.c.b16 %v2379, %v2377
    %v2390 = vpack.c.b16 %v2382, %v2380
    %v2391 = vpack.c.b16 %v2383, %v2381
    %v2401 = vsel %vm1058, %v2349, 0
    %v2404 = vsel %vm1058, %v2350, 0
    %2406 = vmatprep.subr.bf16.mxu0 %v2385
    %2407 = vmatpush1.bf16.msra.mxu0 %v2384
    %2408 = vmatprep.subr.bf16.mxu0 %v2387
    %2409 = vmatpush1.bf16.msra.mxu0 %v2386
    %2410 = vmatprep.subr.bf16.mxu0 %v2389
    %2411 = vmatpush1.bf16.msra.mxu0 %v2388
    %2412 = vmatprep.subr.bf16.mxu0 %v2391
    %2413 = vmatpush1.bf16.msra.mxu0 %v2390
    %2414 = vmatprep.subr.bf16.mxu0 0
    %2415 = vmatpush1.bf16.msra.mxu0 0
    %2416 = vmatprep.subr.bf16.mxu0 0
    %2417 = vmatpush1.bf16.msra.mxu0 0
    %2418 = vmatprep.subr.bf16.mxu0 0
    %2419 = vmatpush1.bf16.msra.mxu0 0
    %2420 = vmatprep.subr.bf16.mxu0 0
    %2421 = vmatpush1.bf16.msra.mxu0 0
    %2422 = vmatprep.subr.bf16.mxu0 0
    %2423 = vmatpush1.bf16.msra.mxu0 0
    %2424 = vmatprep.subr.bf16.mxu0 0
    %2425 = vmatpush1.bf16.msra.mxu0 0
    %2426 = vmatprep.subr.bf16.mxu0 0
    %2427 = vmatpush1.bf16.msra.mxu0 0
    %2428 = vmatprep.subr.bf16.mxu0 0
    %2429 = vmatpush1.bf16.msra.mxu0 0
    %2430 = vmatprep.subr.bf16.mxu0 0
    %2431 = vmatpush1.bf16.msra.mxu0 0
    %2432 = vmatprep.subr.bf16.mxu0 0
    %2433 = vmatpush1.bf16.msra.mxu0 0
    %2434 = vmatprep.subr.bf16.mxu0 0
    %2435 = vmatpush1.bf16.msra.mxu0 0
    %2436 = vmatprep.subr.bf16.mxu0 0
    %2437 = vmatpush1.bf16.msra.mxu0 0
    %2438 = vmatprep.mubr.bf16.mxu0 0
    %2439 = vmatmul.mubr.bf16.gmra.mrb[0].mxu0 %v2401
    %v2440 = vpop.f32.mrb[0].mxu0
    %v2441 = vadd.f32 0.0, %v2440
    %v2442 = vpop.f32.mrb[0].mxu0
    %v2443 = vadd.f32 0.0, %v2442
    %v2444 = vpop.f32.mrb[0].mxu0
    %v2445 = vadd.f32 0.0, %v2444
    %v2446 = vpop.f32.mrb[0].mxu0
    %v2447 = vadd.f32 0.0, %v2446
    %2448 = vmatprep.mubr.bf16.mxu0 0
    %2449 = vmatmul.mubr.bf16.gmra.mrb[0].mxu0 %v2404
    %v2450 = vpop.f32.mrb[0].mxu0
    %v2451 = vadd.f32 0.0, %v2450
    %v2452 = vpop.f32.mrb[0].mxu0
    %v2453 = vadd.f32 0.0, %v2452
    %v2454 = vpop.f32.mrb[0].mxu0
    %v2455 = vadd.f32 0.0, %v2454
    %v2456 = vpop.f32.mrb[0].mxu0
    %v2457 = vadd.f32 0.0, %v2456
    %2458 = vdwg.mxu0
    %v2459 = vadd.f32 %v2093, %v2441
    %v2460 = vadd.f32 %v2094, %v2443
    %v2461 = vadd.f32 %v2095, %v2445
    %v2462 = vadd.f32 %v2096, %v2447
    %v2463 = vadd.f32 %v2097, %v2451
    %v2464 = vadd.f32 %v2098, %v2453
    %v2465 = vadd.f32 %v2099, %v2455
    %v2466 = vadd.f32 %v2100, %v2457
    %v2467 = vadd.f32 %v160, %v2459
    %v2468 = vadd.f32 %v161, %v2460
    %v2469 = vadd.f32 %v162, %v2461
    %v2470 = vadd.f32 %v163, %v2462
    %v2471 = vadd.f32 %v164, %v2463
    %v2472 = vadd.f32 %v165, %v2464
    %v2473 = vadd.f32 %v166, %v2465
    %v2474 = vadd.f32 %v167, %v2466
    %v2476 = vlaneseq
    %v2477 = vshrl.u32 %v2476, 7
    %v2478 = vsub.s32 0, %v2477
    %v2479 = vrot.slane %v169, %v2478
    %v2480 = vlaneseq
    %v2481 = vshrl.u32 %v2480, 7
    %v2482 = vsub.s32 1, %v2481
    %v2483 = vrot.slane %v169, %v2482
    %v2486 = vadd.f32 %v2467, %v2479
    %v2487 = vadd.f32 %v2468, %v2483
    %v2488 = vadd.f32 %v2469, %v2479
    %v2489 = vadd.f32 %v2470, %v2483
    %v2490 = vadd.f32 %v2471, %v2479
    %v2491 = vadd.f32 %v2472, %v2483
    %v2492 = vadd.f32 %v2473, %v2479
    %v2493 = vadd.f32 %v2474, %v2483
    %v2494 = vld [vmem:[#allocation8] sm:$0x3]
    %v2495 = vld [vmem:[#allocation10] sm:$0x3]
    %v2496 = vadd.f32 %v2486, %v2487
    %2497 = vadd.xlane.f32.xlu0 %v2496
    %v2498 = vpop.xlane.xlu0 %2497
    %v2499 = vadd.f32 %v2488, %v2489
    %2500 = vadd.xlane.f32.xlu0 %v2499
    %v2501 = vpop.xlane.xlu0 %2500
    %v2502 = vadd.f32 %v2490, %v2491
    %2503 = vadd.xlane.f32.xlu0 %v2502
    %v2504 = vpop.xlane.xlu0 %2503
    %v2505 = vadd.f32 %v2492, %v2493
    %2506 = vadd.xlane.f32.xlu0 %v2505
    %v2507 = vpop.xlane.xlu0 %2506
    %v2508 = vmul.f32 %v2498, %v185
    %v2509 = vmul.f32 %v2501, %v185
    %v2510 = vmul.f32 %v2504, %v185
    %v2511 = vmul.f32 %v2507, %v185
    %v2512 = vsub.f32 %v2486, %v2508
    %v2513 = vsub.f32 %v2487, %v2508
    %v2514 = vsub.f32 %v2488, %v2509
    %v2515 = vsub.f32 %v2489, %v2509
    %v2516 = vsub.f32 %v2490, %v2510
    %v2517 = vsub.f32 %v2491, %v2510
    %v2518 = vsub.f32 %v2492, %v2511
    %v2519 = vsub.f32 %v2493, %v2511
    %v2520 = vmul.f32 %v2512, %v2512
    %v2521 = vmul.f32 %v2513, %v2513
    %v2522 = vmul.f32 %v2514, %v2514
    %v2523 = vmul.f32 %v2515, %v2515
    %v2524 = vmul.f32 %v2516, %v2516
    %v2525 = vmul.f32 %v2517, %v2517
    %v2526 = vmul.f32 %v2518, %v2518
    %v2527 = vmul.f32 %v2519, %v2519
    %v2528 = vadd.f32 %v2520, %v2521
    %2529 = vadd.xlane.f32.xlu0 %v2528
    %v2530 = vpop.xlane.xlu0 %2529
    %v2531 = vadd.f32 %v2522, %v2523
    %2532 = vadd.xlane.f32.xlu0 %v2531
    %v2533 = vpop.xlane.xlu0 %2532
    %v2534 = vadd.f32 %v2524, %v2525
    %2535 = vadd.xlane.f32.xlu0 %v2534
    %v2536 = vpop.xlane.xlu0 %2535
    %v2537 = vadd.f32 %v2526, %v2527
    %2538 = vadd.xlane.f32.xlu0 %v2537
    %v2539 = vpop.xlane.xlu0 %2538
    %v2540 = vmul.f32 %v2530, %v185
    %v2541 = vmul.f32 %v2533, %v185
    %v2542 = vmul.f32 %v2536, %v185
    %v2543 = vmul.f32 %v2539, %v185
    %v2544 = vadd.f32 %v2540, 1e-05
    %v2545 = vadd.f32 %v2541, 1e-05
    %v2546 = vadd.f32 %v2542, 1e-05
    %v2547 = vadd.f32 %v2543, 1e-05
    %v2548 = vrsqrt.pop %v2544
    %v2549 = vrsqrt.pop %v2545
    %v2550 = vrsqrt.pop %v2546
    %v2551 = vrsqrt.pop %v2547
    %v2552 = vmul.f32 %v2512, %v2548
    %v2553 = vmul.f32 %v2513, %v2548
    %v2554 = vmul.f32 %v2514, %v2549
    %v2555 = vmul.f32 %v2515, %v2549
    %v2556 = vmul.f32 %v2516, %v2550
    %v2557 = vmul.f32 %v2517, %v2550
    %v2558 = vmul.f32 %v2518, %v2551
    %v2559 = vmul.f32 %v2519, %v2551
    %v2561 = vlaneseq
    %v2562 = vshrl.u32 %v2561, 7
    %v2563 = vsub.s32 0, %v2562
    %v2564 = vrot.slane %v2494, %v2563
    %v2565 = vlaneseq
    %v2566 = vshrl.u32 %v2565, 7
    %v2567 = vsub.s32 1, %v2566
    %v2568 = vrot.slane %v2494, %v2567
    %v2571 = vmul.f32 %v2552, %v2564
    %v2572 = vmul.f32 %v2553, %v2568
    %v2573 = vmul.f32 %v2554, %v2564
    %v2574 = vmul.f32 %v2555, %v2568
    %v2575 = vmul.f32 %v2556, %v2564
    %v2576 = vmul.f32 %v2557, %v2568
    %v2577 = vmul.f32 %v2558, %v2564
    %v2578 = vmul.f32 %v2559, %v2568
    %v2580 = vlaneseq
    %v2581 = vshrl.u32 %v2580, 7
    %v2582 = vsub.s32 0, %v2581
    %v2583 = vrot.slane %v2495, %v2582
    %v2584 = vlaneseq
    %v2585 = vshrl.u32 %v2584, 7
    %v2586 = vsub.s32 1, %v2585
    %v2587 = vrot.slane %v2495, %v2586
    %v2590 = vadd.f32 %v2571, %v2583
    %v2591 = vadd.f32 %v2572, %v2587
    %v2592 = vadd.f32 %v2573, %v2583
    %v2593 = vadd.f32 %v2574, %v2587
    %v2594 = vadd.f32 %v2575, %v2583
    %v2595 = vadd.f32 %v2576, %v2587
    %v2596 = vadd.f32 %v2577, %v2583
    %v2597 = vadd.f32 %v2578, %v2587
    %v2598 = vpack.c.bf16 %v2592, %v2590
    %v2599 = vpack.c.bf16 %v2593, %v2591
    %v2600 = vpack.c.bf16 %v2596, %v2594
    %v2601 = vpack.c.bf16 %v2597, %v2595
    %v2602 = vld [vmem:[#allocation14] sm:$0xff]
    %v2603 = vld [vmem:[#allocation14 + $0x8] sm:$0xff]
    %v2604 = vld [vmem:[#allocation14 + $0x20] sm:$0xff]
    %v2605 = vld [vmem:[#allocation14 + $0x28] sm:$0xff]
    %v2606 = vld [vmem:[#allocation14 + $0x40] sm:$0xff]
    %v2607 = vld [vmem:[#allocation14 + $0x48] sm:$0xff]
    %v2608 = vld [vmem:[#allocation14 + $0x60] sm:$0xff]
    %v2609 = vld [vmem:[#allocation14 + $0x68] sm:$0xff]
    %v2610 = vld [vmem:[#allocation14 + $0x80] sm:$0xff]
    %v2611 = vld [vmem:[#allocation14 + $0x88] sm:$0xff]
    %v2612 = vld [vmem:[#allocation14 + $0xa0] sm:$0xff]
    %v2613 = vld [vmem:[#allocation14 + $0xa8] sm:$0xff]
    %v2614 = vld [vmem:[#allocation14 + $0xc0] sm:$0xff]
    %v2615 = vld [vmem:[#allocation14 + $0xc8] sm:$0xff]
    %v2616 = vld [vmem:[#allocation14 + $0xe0] sm:$0xff]
    %v2617 = vld [vmem:[#allocation14 + $0xe8] sm:$0xff]
    %v2618 = vld [vmem:[#allocation14 + $0x100] sm:$0xff]
    %v2619 = vld [vmem:[#allocation14 + $0x108] sm:$0xff]
    %v2620 = vld [vmem:[#allocation14 + $0x120] sm:$0xff]
    %v2621 = vld [vmem:[#allocation14 + $0x128] sm:$0xff]
    %v2622 = vld [vmem:[#allocation14 + $0x140] sm:$0xff]
    %v2623 = vld [vmem:[#allocation14 + $0x148] sm:$0xff]
    %v2624 = vld [vmem:[#allocation14 + $0x160] sm:$0xff]
    %v2625 = vld [vmem:[#allocation14 + $0x168] sm:$0xff]
    %v2626 = vld [vmem:[#allocation14 + $0x180] sm:$0xff]
    %v2627 = vld [vmem:[#allocation14 + $0x188] sm:$0xff]
    %v2628 = vld [vmem:[#allocation14 + $0x1a0] sm:$0xff]
    %v2629 = vld [vmem:[#allocation14 + $0x1a8] sm:$0xff]
    %v2630 = vld [vmem:[#allocation14 + $0x1c0] sm:$0xff]
    %v2631 = vld [vmem:[#allocation14 + $0x1c8] sm:$0xff]
    %v2632 = vld [vmem:[#allocation14 + $0x1e0] sm:$0xff]
    %v2633 = vld [vmem:[#allocation14 + $0x1e8] sm:$0xff]
    %v2634 = vld [vmem:[#allocation14 + $0x200] sm:$0xff]
    %v2635 = vld [vmem:[#allocation14 + $0x208] sm:$0xff]
    %v2636 = vld [vmem:[#allocation14 + $0x220] sm:$0xff]
    %v2637 = vld [vmem:[#allocation14 + $0x228] sm:$0xff]
    %v2638 = vld [vmem:[#allocation14 + $0x240] sm:$0xff]
    %v2639 = vld [vmem:[#allocation14 + $0x248] sm:$0xff]
    %v2640 = vld [vmem:[#allocation14 + $0x260] sm:$0xff]
    %v2641 = vld [vmem:[#allocation14 + $0x268] sm:$0xff]
    %v2642 = vld [vmem:[#allocation14 + $0x280] sm:$0xff]
    %v2643 = vld [vmem:[#allocation14 + $0x288] sm:$0xff]
    %v2644 = vld [vmem:[#allocation14 + $0x2a0] sm:$0xff]
    %v2645 = vld [vmem:[#allocation14 + $0x2a8] sm:$0xff]
    %v2646 = vld [vmem:[#allocation14 + $0x2c0] sm:$0xff]
    %v2647 = vld [vmem:[#allocation14 + $0x2c8] sm:$0xff]
    %v2648 = vld [vmem:[#allocation14 + $0x2e0] sm:$0xff]
    %v2649 = vld [vmem:[#allocation14 + $0x2e8] sm:$0xff]
    %v2650 = vld [vmem:[#allocation14 + $0x300] sm:$0xff]
    %v2651 = vld [vmem:[#allocation14 + $0x308] sm:$0xff]
    %v2652 = vld [vmem:[#allocation14 + $0x320] sm:$0xff]
    %v2653 = vld [vmem:[#allocation14 + $0x328] sm:$0xff]
    %v2654 = vld [vmem:[#allocation14 + $0x340] sm:$0xff]
    %v2655 = vld [vmem:[#allocation14 + $0x348] sm:$0xff]
    %v2656 = vld [vmem:[#allocation14 + $0x360] sm:$0xff]
    %v2657 = vld [vmem:[#allocation14 + $0x368] sm:$0xff]
    %v2658 = vld [vmem:[#allocation14 + $0x380] sm:$0xff]
    %v2659 = vld [vmem:[#allocation14 + $0x388] sm:$0xff]
    %v2660 = vld [vmem:[#allocation14 + $0x3a0] sm:$0xff]
    %v2661 = vld [vmem:[#allocation14 + $0x3a8] sm:$0xff]
    %v2662 = vld [vmem:[#allocation14 + $0x3c0] sm:$0xff]
    %v2663 = vld [vmem:[#allocation14 + $0x3c8] sm:$0xff]
    %v2664 = vld [vmem:[#allocation14 + $0x3e0] sm:$0xff]
    %v2665 = vld [vmem:[#allocation14 + $0x3e8] sm:$0xff]
    %v2666 = vld [vmem:[%s10] sm:$0xf]
    %v2668 = vlaneseq
    %v2669 = vshrl.u32 %v2668, 7
    %v2670 = vsub.s32 0, %v2669
    %v2671 = vrot.slane %v2666, %v2670
    %v2672 = vlaneseq
    %v2673 = vshrl.u32 %v2672, 7
    %v2674 = vsub.s32 1, %v2673
    %v2675 = vrot.slane %v2666, %v2674
    %v2676 = vlaneseq
    %v2677 = vshrl.u32 %v2676, 7
    %v2678 = vsub.s32 2, %v2677
    %v2679 = vrot.slane %v2666, %v2678
    %v2680 = vlaneseq
    %v2681 = vshrl.u32 %v2680, 7
    %v2682 = vsub.s32 3, %v2681
    %v2683 = vrot.slane %v2666, %v2682
    %v2752 = vunpack.c.l.b16 %v2602
    %v2753 = vunpack.c.h.b16 %v2602
    %v2754 = vunpack.c.l.b16 %v2603
    %v2755 = vunpack.c.h.b16 %v2603
    %v2756 = vunpack.c.l.b16 %v2604
    %v2757 = vunpack.c.h.b16 %v2604
    %v2758 = vunpack.c.l.b16 %v2605
    %v2759 = vunpack.c.h.b16 %v2605
    %v2760 = vunpack.c.l.b16 %v2606
    %v2761 = vunpack.c.h.b16 %v2606
    %v2762 = vunpack.c.l.b16 %v2607
    %v2763 = vunpack.c.h.b16 %v2607
    %v2764 = vunpack.c.l.b16 %v2608
    %v2765 = vunpack.c.h.b16 %v2608
    %v2766 = vunpack.c.l.b16 %v2609
    %v2767 = vunpack.c.h.b16 %v2609
    %v2768 = vunpack.c.l.b16 %v2610
    %v2769 = vunpack.c.h.b16 %v2610
    %v2770 = vunpack.c.l.b16 %v2611
    %v2771 = vunpack.c.h.b16 %v2611
    %v2772 = vunpack.c.l.b16 %v2612
    %v2773 = vunpack.c.h.b16 %v2612
    %v2774 = vunpack.c.l.b16 %v2613
    %v2775 = vunpack.c.h.b16 %v2613
    %v2776 = vunpack.c.l.b16 %v2614
    %v2777 = vunpack.c.h.b16 %v2614
    %v2778 = vunpack.c.l.b16 %v2615
    %v2779 = vunpack.c.h.b16 %v2615
    %v2780 = vunpack.c.l.b16 %v2616
    %v2781 = vunpack.c.h.b16 %v2616
    %v2782 = vunpack.c.l.b16 %v2617
    %v2783 = vunpack.c.h.b16 %v2617
    %v2784 = vunpack.c.l.b16 %v2618
    %v2785 = vunpack.c.h.b16 %v2618
    %v2786 = vunpack.c.l.b16 %v2619
    %v2787 = vunpack.c.h.b16 %v2619
    %v2788 = vunpack.c.l.b16 %v2620
    %v2789 = vunpack.c.h.b16 %v2620
    %v2790 = vunpack.c.l.b16 %v2621
    %v2791 = vunpack.c.h.b16 %v2621
    %v2792 = vunpack.c.l.b16 %v2622
    %v2793 = vunpack.c.h.b16 %v2622
    %v2794 = vunpack.c.l.b16 %v2623
    %v2795 = vunpack.c.h.b16 %v2623
    %v2796 = vunpack.c.l.b16 %v2624
    %v2797 = vunpack.c.h.b16 %v2624
    %v2798 = vunpack.c.l.b16 %v2625
    %v2799 = vunpack.c.h.b16 %v2625
    %v2800 = vunpack.c.l.b16 %v2626
    %v2801 = vunpack.c.h.b16 %v2626
    %v2802 = vunpack.c.l.b16 %v2627
    %v2803 = vunpack.c.h.b16 %v2627
    %v2804 = vunpack.c.l.b16 %v2628
    %v2805 = vunpack.c.h.b16 %v2628
    %v2806 = vunpack.c.l.b16 %v2629
    %v2807 = vunpack.c.h.b16 %v2629
    %v2808 = vunpack.c.l.b16 %v2630
    %v2809 = vunpack.c.h.b16 %v2630
    %v2810 = vunpack.c.l.b16 %v2631
    %v2811 = vunpack.c.h.b16 %v2631
    %v2812 = vunpack.c.l.b16 %v2632
    %v2813 = vunpack.c.h.b16 %v2632
    %v2814 = vunpack.c.l.b16 %v2633
    %v2815 = vunpack.c.h.b16 %v2633
    %v2816 = vunpack.c.l.b16 %v2634
    %v2817 = vunpack.c.h.b16 %v2634
    %v2818 = vunpack.c.l.b16 %v2635
    %v2819 = vunpack.c.h.b16 %v2635
    %v2820 = vunpack.c.l.b16 %v2636
    %v2821 = vunpack.c.h.b16 %v2636
    %v2822 = vunpack.c.l.b16 %v2637
    %v2823 = vunpack.c.h.b16 %v2637
    %v2824 = vunpack.c.l.b16 %v2638
    %v2825 = vunpack.c.h.b16 %v2638
    %v2826 = vunpack.c.l.b16 %v2639
    %v2827 = vunpack.c.h.b16 %v2639
    %v2828 = vunpack.c.l.b16 %v2640
    %v2829 = vunpack.c.h.b16 %v2640
    %v2830 = vunpack.c.l.b16 %v2641
    %v2831 = vunpack.c.h.b16 %v2641
    %v2832 = vunpack.c.l.b16 %v2642
    %v2833 = vunpack.c.h.b16 %v2642
    %v2834 = vunpack.c.l.b16 %v2643
    %v2835 = vunpack.c.h.b16 %v2643
    %v2836 = vunpack.c.l.b16 %v2644
    %v2837 = vunpack.c.h.b16 %v2644
    %v2838 = vunpack.c.l.b16 %v2645
    %v2839 = vunpack.c.h.b16 %v2645
    %v2840 = vunpack.c.l.b16 %v2646
    %v2841 = vunpack.c.h.b16 %v2646
    %v2842 = vunpack.c.l.b16 %v2647
    %v2843 = vunpack.c.h.b16 %v2647
    %v2844 = vunpack.c.l.b16 %v2648
    %v2845 = vunpack.c.h.b16 %v2648
    %v2846 = vunpack.c.l.b16 %v2649
    %v2847 = vunpack.c.h.b16 %v2649
    %v2848 = vunpack.c.l.b16 %v2650
    %v2849 = vunpack.c.h.b16 %v2650
    %v2850 = vunpack.c.l.b16 %v2651
    %v2851 = vunpack.c.h.b16 %v2651
    %v2852 = vunpack.c.l.b16 %v2652
    %v2853 = vunpack.c.h.b16 %v2652
    %v2854 = vunpack.c.l.b16 %v2653
    %v2855 = vunpack.c.h.b16 %v2653
    %v2856 = vunpack.c.l.b16 %v2654
    %v2857 = vunpack.c.h.b16 %v2654
    %v2858 = vunpack.c.l.b16 %v2655
    %v2859 = vunpack.c.h.b16 %v2655
    %v2860 = vunpack.c.l.b16 %v2656
    %v2861 = vunpack.c.h.b16 %v2656
    %v2862 = vunpack.c.l.b16 %v2657
    %v2863 = vunpack.c.h.b16 %v2657
    %v2864 = vunpack.c.l.b16 %v2658
    %v2865 = vunpack.c.h.b16 %v2658
    %v2866 = vunpack.c.l.b16 %v2659
    %v2867 = vunpack.c.h.b16 %v2659
    %v2868 = vunpack.c.l.b16 %v2660
    %v2869 = vunpack.c.h.b16 %v2660
    %v2870 = vunpack.c.l.b16 %v2661
    %v2871 = vunpack.c.h.b16 %v2661
    %v2872 = vunpack.c.l.b16 %v2662
    %v2873 = vunpack.c.h.b16 %v2662
    %v2874 = vunpack.c.l.b16 %v2663
    %v2875 = vunpack.c.h.b16 %v2663
    %v2876 = vunpack.c.l.b16 %v2664
    %v2877 = vunpack.c.h.b16 %v2664
    %v2878 = vunpack.c.l.b16 %v2665
    %v2879 = vunpack.c.h.b16 %v2665
    %v2880 = vpack.c.b16 %v2756, %v2752
    %v2881 = vpack.c.b16 %v2757, %v2753
    %v2882 = vpack.c.b16 %v2758, %v2754
    %v2883 = vpack.c.b16 %v2759, %v2755
    %v2884 = vpack.c.b16 %v2764, %v2760
    %v2885 = vpack.c.b16 %v2765, %v2761
    %v2886 = vpack.c.b16 %v2766, %v2762
    %v2887 = vpack.c.b16 %v2767, %v2763
    %v2888 = vpack.c.b16 %v2772, %v2768
    %v2889 = vpack.c.b16 %v2773, %v2769
    %v2890 = vpack.c.b16 %v2774, %v2770
    %v2891 = vpack.c.b16 %v2775, %v2771
    %v2892 = vpack.c.b16 %v2780, %v2776
    %v2893 = vpack.c.b16 %v2781, %v2777
    %v2894 = vpack.c.b16 %v2782, %v2778
    %v2895 = vpack.c.b16 %v2783, %v2779
    %v2896 = vpack.c.b16 %v2788, %v2784
    %v2897 = vpack.c.b16 %v2789, %v2785
    %v2898 = vpack.c.b16 %v2790, %v2786
    %v2899 = vpack.c.b16 %v2791, %v2787
    %v2900 = vpack.c.b16 %v2796, %v2792
    %v2901 = vpack.c.b16 %v2797, %v2793
    %v2902 = vpack.c.b16 %v2798, %v2794
    %v2903 = vpack.c.b16 %v2799, %v2795
    %v2904 = vpack.c.b16 %v2804, %v2800
    %v2905 = vpack.c.b16 %v2805, %v2801
    %v2906 = vpack.c.b16 %v2806, %v2802
    %v2907 = vpack.c.b16 %v2807, %v2803
    %v2908 = vpack.c.b16 %v2812, %v2808
    %v2909 = vpack.c.b16 %v2813, %v2809
    %v2910 = vpack.c.b16 %v2814, %v2810
    %v2911 = vpack.c.b16 %v2815, %v2811
    %v2912 = vpack.c.b16 %v2820, %v2816
    %v2913 = vpack.c.b16 %v2821, %v2817
    %v2914 = vpack.c.b16 %v2822, %v2818
    %v2915 = vpack.c.b16 %v2823, %v2819
    %v2916 = vpack.c.b16 %v2828, %v2824
    %v2917 = vpack.c.b16 %v2829, %v2825
    %v2918 = vpack.c.b16 %v2830, %v2826
    %v2919 = vpack.c.b16 %v2831, %v2827
    %v2920 = vpack.c.b16 %v2836, %v2832
    %v2921 = vpack.c.b16 %v2837, %v2833
    %v2922 = vpack.c.b16 %v2838, %v2834
    %v2923 = vpack.c.b16 %v2839, %v2835
    %v2924 = vpack.c.b16 %v2844, %v2840
    %v2925 = vpack.c.b16 %v2845, %v2841
    %v2926 = vpack.c.b16 %v2846, %v2842
    %v2927 = vpack.c.b16 %v2847, %v2843
    %v2928 = vpack.c.b16 %v2852, %v2848
    %v2929 = vpack.c.b16 %v2853, %v2849
    %v2930 = vpack.c.b16 %v2854, %v2850
    %v2931 = vpack.c.b16 %v2855, %v2851
    %v2932 = vpack.c.b16 %v2860, %v2856
    %v2933 = vpack.c.b16 %v2861, %v2857
    %v2934 = vpack.c.b16 %v2862, %v2858
    %v2935 = vpack.c.b16 %v2863, %v2859
    %v2936 = vpack.c.b16 %v2868, %v2864
    %v2937 = vpack.c.b16 %v2869, %v2865
    %v2938 = vpack.c.b16 %v2870, %v2866
    %v2939 = vpack.c.b16 %v2871, %v2867
    %v2940 = vpack.c.b16 %v2876, %v2872
    %v2941 = vpack.c.b16 %v2877, %v2873
    %v2942 = vpack.c.b16 %v2878, %v2874
    %v2943 = vpack.c.b16 %v2879, %v2875
    %3008 = vmatprep.subr.bf16.mxu0 %v2881
    %3009 = vmatpush1.bf16.msra.mxu0 %v2880
    %3010 = vmatprep.subr.bf16.mxu0 %v2885
    %3011 = vmatpush1.bf16.msra.mxu0 %v2884
    %3012 = vmatprep.subr.bf16.mxu0 %v2889
    %3013 = vmatpush1.bf16.msra.mxu0 %v2888
    %3014 = vmatprep.subr.bf16.mxu0 %v2893
    %3015 = vmatpush1.bf16.msra.mxu0 %v2892
    %3016 = vmatprep.subr.bf16.mxu0 %v2897
    %3017 = vmatpush1.bf16.msra.mxu0 %v2896
    %3018 = vmatprep.subr.bf16.mxu0 %v2901
    %3019 = vmatpush1.bf16.msra.mxu0 %v2900
    %3020 = vmatprep.subr.bf16.mxu0 %v2905
    %3021 = vmatpush1.bf16.msra.mxu0 %v2904
    %3022 = vmatprep.subr.bf16.mxu0 %v2909
    %3023 = vmatpush1.bf16.msra.mxu0 %v2908
    %3024 = vmatprep.subr.bf16.mxu0 %v2913
    %3025 = vmatpush1.bf16.msra.mxu0 %v2912
    %3026 = vmatprep.subr.bf16.mxu0 %v2917
    %3027 = vmatpush1.bf16.msra.mxu0 %v2916
    %3028 = vmatprep.subr.bf16.mxu0 %v2921
    %3029 = vmatpush1.bf16.msra.mxu0 %v2920
    %3030 = vmatprep.subr.bf16.mxu0 %v2925
    %3031 = vmatpush1.bf16.msra.mxu0 %v2924
    %3032 = vmatprep.subr.bf16.mxu0 %v2929
    %3033 = vmatpush1.bf16.msra.mxu0 %v2928
    %3034 = vmatprep.subr.bf16.mxu0 %v2933
    %3035 = vmatpush1.bf16.msra.mxu0 %v2932
    %3036 = vmatprep.subr.bf16.mxu0 %v2937
    %3037 = vmatpush1.bf16.msra.mxu0 %v2936
    %3038 = vmatprep.subr.bf16.mxu0 %v2941
    %3039 = vmatpush1.bf16.msra.mxu0 %v2940
    %3040 = vmatprep.mubr.bf16.mxu0 %v2599
    %3041 = vmatmul.mubr.bf16.gmra.mrb[0].mxu0 %v2598
    %v3042 = vpop.f32.mrb[0].mxu0
    %v3043 = vadd.f32 %v2671, %v3042
    %v3044 = vpop.f32.mrb[0].mxu0
    %v3045 = vadd.f32 %v2675, %v3044
    %v3046 = vpop.f32.mrb[0].mxu0
    %v3047 = vadd.f32 %v2671, %v3046
    %v3048 = vpop.f32.mrb[0].mxu0
    %v3049 = vadd.f32 %v2675, %v3048
    %3050 = vmatprep.mubr.bf16.mxu0 %v2601
    %3051 = vmatmul.mubr.bf16.gmra.mrb[0].mxu0 %v2600
    %v3052 = vpop.f32.mrb[0].mxu0
    %v3053 = vadd.f32 %v2671, %v3052
    %v3054 = vpop.f32.mrb[0].mxu0
    %v3055 = vadd.f32 %v2675, %v3054
    %v3056 = vpop.f32.mrb[0].mxu0
    %v3057 = vadd.f32 %v2671, %v3056
    %v3058 = vpop.f32.mrb[0].mxu0
    %v3059 = vadd.f32 %v2675, %v3058
    %3060 = vdwg.mxu0
    %3061 = vmatprep.subr.bf16.mxu0 %v2883
    %3062 = vmatpush1.bf16.msra.mxu0 %v2882
    %3063 = vmatprep.subr.bf16.mxu0 %v2887
    %3064 = vmatpush1.bf16.msra.mxu0 %v2886
    %3065 = vmatprep.subr.bf16.mxu0 %v2891
    %3066 = vmatpush1.bf16.msra.mxu0 %v2890
    %3067 = vmatprep.subr.bf16.mxu0 %v2895
    %3068 = vmatpush1.bf16.msra.mxu0 %v2894
    %3069 = vmatprep.subr.bf16.mxu0 %v2899
    %3070 = vmatpush1.bf16.msra.mxu0 %v2898
    %3071 = vmatprep.subr.bf16.mxu0 %v2903
    %3072 = vmatpush1.bf16.msra.mxu0 %v2902
    %3073 = vmatprep.subr.bf16.mxu0 %v2907
    %3074 = vmatpush1.bf16.msra.mxu0 %v2906
    %3075 = vmatprep.subr.bf16.mxu0 %v2911
    %3076 = vmatpush1.bf16.msra.mxu0 %v2910
    %3077 = vmatprep.subr.bf16.mxu0 %v2915
    %3078 = vmatpush1.bf16.msra.mxu0 %v2914
    %3079 = vmatprep.subr.bf16.mxu0 %v2919
    %3080 = vmatpush1.bf16.msra.mxu0 %v2918
    %3081 = vmatprep.subr.bf16.mxu0 %v2923
    %3082 = vmatpush1.bf16.msra.mxu0 %v2922
    %3083 = vmatprep.subr.bf16.mxu0 %v2927
    %3084 = vmatpush1.bf16.msra.mxu0 %v2926
    %3085 = vmatprep.subr.bf16.mxu0 %v2931
    %3086 = vmatpush1.bf16.msra.mxu0 %v2930
    %3087 = vmatprep.subr.bf16.mxu0 %v2935
    %3088 = vmatpush1.bf16.msra.mxu0 %v2934
    %3089 = vmatprep.subr.bf16.mxu0 %v2939
    %3090 = vmatpush1.bf16.msra.mxu0 %v2938
    %3091 = vmatprep.subr.bf16.mxu0 %v2943
    %3092 = vmatpush1.bf16.msra.mxu0 %v2942
    %3093 = vmatprep.mubr.bf16.mxu0 %v2599
    %3094 = vmatmul.mubr.bf16.gmra.mrb[0].mxu0 %v2598
    %v3095 = vpop.f32.mrb[0].mxu0
    %v3096 = vadd.f32 %v2679, %v3095
    %v3097 = vpop.f32.mrb[0].mxu0
    %v3098 = vadd.f32 %v2683, %v3097
    %v3099 = vpop.f32.mrb[0].mxu0
    %v3100 = vadd.f32 %v2679, %v3099
    %v3101 = vpop.f32.mrb[0].mxu0
    %v3102 = vadd.f32 %v2683, %v3101
    %3103 = vmatprep.mubr.bf16.mxu0 %v2601
    %3104 = vmatmul.mubr.bf16.gmra.mrb[0].mxu0 %v2600
    %v3105 = vpop.f32.mrb[0].mxu0
    %v3106 = vadd.f32 %v2679, %v3105
    %v3107 = vpop.f32.mrb[0].mxu0
    %v3108 = vadd.f32 %v2683, %v3107
    %v3109 = vpop.f32.mrb[0].mxu0
    %v3110 = vadd.f32 %v2679, %v3109
    %v3111 = vpop.f32.mrb[0].mxu0
    %v3112 = vadd.f32 %v2683, %v3111
    %3113 = vdwg.mxu0
    %v3114 = vmul.f32 %v3043, 1.702
    %v3115 = vmul.f32 %v3045, 1.702
    %v3116 = vmul.f32 %v3096, 1.702
    %v3117 = vmul.f32 %v3098, 1.702
    %v3118 = vmul.f32 %v3047, 1.702
    %v3119 = vmul.f32 %v3049, 1.702
    %v3120 = vmul.f32 %v3100, 1.702
    %v3121 = vmul.f32 %v3102, 1.702
    %v3122 = vmul.f32 %v3053, 1.702
    %v3123 = vmul.f32 %v3055, 1.702
    %v3124 = vmul.f32 %v3106, 1.702
    %v3125 = vmul.f32 %v3108, 1.702
    %v3126 = vmul.f32 %v3057, 1.702
    %v3127 = vmul.f32 %v3059, 1.702
    %v3128 = vmul.f32 %v3110, 1.702
    %v3129 = vmul.f32 %v3112, 1.702
    %v3130 = vxor.u32 %v3114, 2147483648
    %v3131 = vxor.u32 %v3115, 2147483648
    %v3132 = vxor.u32 %v3116, 2147483648
    %v3133 = vxor.u32 %v3117, 2147483648
    %v3134 = vxor.u32 %v3118, 2147483648
    %v3135 = vxor.u32 %v3119, 2147483648
    %v3136 = vxor.u32 %v3120, 2147483648
    %v3137 = vxor.u32 %v3121, 2147483648
    %v3138 = vxor.u32 %v3122, 2147483648
    %v3139 = vxor.u32 %v3123, 2147483648
    %v3140 = vxor.u32 %v3124, 2147483648
    %v3141 = vxor.u32 %v3125, 2147483648
    %v3142 = vxor.u32 %v3126, 2147483648
    %v3143 = vxor.u32 %v3127, 2147483648
    %v3144 = vxor.u32 %v3128, 2147483648
    %v3145 = vxor.u32 %v3129, 2147483648
    %v3146 = vmul.f32 %v3130, 1.442695
    %v3147 = vpow.pop %v3146
    %v3148 = vmul.f32 %v3131, 1.442695
    %v3149 = vpow.pop %v3148
    %v3150 = vmul.f32 %v3132, 1.442695
    %v3151 = vpow.pop %v3150
    %v3152 = vmul.f32 %v3133, 1.442695
    %v3153 = vpow.pop %v3152
    %v3154 = vmul.f32 %v3134, 1.442695
    %v3155 = vpow.pop %v3154
    %v3156 = vmul.f32 %v3135, 1.442695
    %v3157 = vpow.pop %v3156
    %v3158 = vmul.f32 %v3136, 1.442695
    %v3159 = vpow.pop %v3158
    %v3160 = vmul.f32 %v3137, 1.442695
    %v3161 = vpow.pop %v3160
    %v3162 = vmul.f32 %v3138, 1.442695
    %v3163 = vpow.pop %v3162
    %v3164 = vmul.f32 %v3139, 1.442695
    %v3165 = vpow.pop %v3164
    %v3166 = vmul.f32 %v3140, 1.442695
    %v3167 = vpow.pop %v3166
    %v3168 = vmul.f32 %v3141, 1.442695
    %v3169 = vpow.pop %v3168
    %v3170 = vmul.f32 %v3142, 1.442695
    %v3171 = vpow.pop %v3170
    %v3172 = vmul.f32 %v3143, 1.442695
    %v3173 = vpow.pop %v3172
    %v3174 = vmul.f32 %v3144, 1.442695
    %v3175 = vpow.pop %v3174
    %v3176 = vmul.f32 %v3145, 1.442695
    %v3177 = vpow.pop %v3176
    %v3178 = vadd.f32 %v3147, 1.0
    %v3179 = vadd.f32 %v3149, 1.0
    %v3180 = vadd.f32 %v3151, 1.0
    %v3181 = vadd.f32 %v3153, 1.0
    %v3182 = vadd.f32 %v3155, 1.0
    %v3183 = vadd.f32 %v3157, 1.0
    %v3184 = vadd.f32 %v3159, 1.0
    %v3185 = vadd.f32 %v3161, 1.0
    %v3186 = vadd.f32 %v3163, 1.0
    %v3187 = vadd.f32 %v3165, 1.0
    %v3188 = vadd.f32 %v3167, 1.0
    %v3189 = vadd.f32 %v3169, 1.0
    %v3190 = vadd.f32 %v3171, 1.0
    %v3191 = vadd.f32 %v3173, 1.0
    %v3192 = vadd.f32 %v3175, 1.0
    %v3193 = vadd.f32 %v3177, 1.0
    %v3194 = vrcp.pop %v3178
    %v3195 = vmul.f32 1.0, %v3194
    %v3196 = vrcp.pop %v3179
    %v3197 = vmul.f32 1.0, %v3196
    %v3198 = vrcp.pop %v3180
    %v3199 = vmul.f32 1.0, %v3198
    %v3200 = vrcp.pop %v3181
    %v3201 = vmul.f32 1.0, %v3200
    %v3202 = vrcp.pop %v3182
    %v3203 = vmul.f32 1.0, %v3202
    %v3204 = vrcp.pop %v3183
    %v3205 = vmul.f32 1.0, %v3204
    %v3206 = vrcp.pop %v3184
    %v3207 = vmul.f32 1.0, %v3206
    %v3208 = vrcp.pop %v3185
    %v3209 = vmul.f32 1.0, %v3208
    %v3210 = vrcp.pop %v3186
    %v3211 = vmul.f32 1.0, %v3210
    %v3212 = vrcp.pop %v3187
    %v3213 = vmul.f32 1.0, %v3212
    %v3214 = vrcp.pop %v3188
    %v3215 = vmul.f32 1.0, %v3214
    %v3216 = vrcp.pop %v3189
    %v3217 = vmul.f32 1.0, %v3216
    %v3218 = vrcp.pop %v3190
    %v3219 = vmul.f32 1.0, %v3218
    %v3220 = vrcp.pop %v3191
    %v3221 = vmul.f32 1.0, %v3220
    %v3222 = vrcp.pop %v3192
    %v3223 = vmul.f32 1.0, %v3222
    %v3224 = vrcp.pop %v3193
    %v3225 = vmul.f32 1.0, %v3224
    %v3226 = vmul.f32 %v3043, %v3195
    %v3227 = vmul.f32 %v3045, %v3197
    %v3228 = vmul.f32 %v3096, %v3199
    %v3229 = vmul.f32 %v3098, %v3201
    %v3230 = vmul.f32 %v3047, %v3203
    %v3231 = vmul.f32 %v3049, %v3205
    %v3232 = vmul.f32 %v3100, %v3207
    %v3233 = vmul.f32 %v3102, %v3209
    %v3234 = vmul.f32 %v3053, %v3211
    %v3235 = vmul.f32 %v3055, %v3213
    %v3236 = vmul.f32 %v3106, %v3215
    %v3237 = vmul.f32 %v3108, %v3217
    %v3238 = vmul.f32 %v3057, %v3219
    %v3239 = vmul.f32 %v3059, %v3221
    %v3240 = vmul.f32 %v3110, %v3223
    %v3241 = vmul.f32 %v3112, %v3225
    %v3242 = vpack.c.bf16 %v3230, %v3226
    %v3243 = vpack.c.bf16 %v3231, %v3227
    %v3244 = vpack.c.bf16 %v3232, %v3228
    %v3245 = vpack.c.bf16 %v3233, %v3229
    %v3246 = vpack.c.bf16 %v3238, %v3234
    %v3247 = vpack.c.bf16 %v3239, %v3235
    %v3248 = vpack.c.bf16 %v3240, %v3236
    %v3249 = vpack.c.bf16 %v3241, %v3237
    %v3250 = vld [vmem:[#allocation16] sm:$0xff]
    %v3251 = vld [vmem:[#allocation16 + $0x8] sm:$0xff]
    %v3252 = vld [vmem:[#allocation16 + $0x10] sm:$0xff]
    %v3253 = vld [vmem:[#allocation16 + $0x18] sm:$0xff]
    %v3254 = vld [vmem:[#allocation16 + $0x20] sm:$0xff]
    %v3255 = vld [vmem:[#allocation16 + $0x28] sm:$0xff]
    %v3256 = vld [vmem:[#allocation16 + $0x30] sm:$0xff]
    %v3257 = vld [vmem:[#allocation16 + $0x38] sm:$0xff]
    %v3258 = vld [vmem:[#allocation16 + $0x40] sm:$0xff]
    %v3259 = vld [vmem:[#allocation16 + $0x48] sm:$0xff]
    %v3260 = vld [vmem:[#allocation16 + $0x50] sm:$0xff]
    %v3261 = vld [vmem:[#allocation16 + $0x58] sm:$0xff]
    %v3262 = vld [vmem:[#allocation16 + $0x60] sm:$0xff]
    %v3263 = vld [vmem:[#allocation16 + $0x68] sm:$0xff]
    %v3264 = vld [vmem:[#allocation16 + $0x70] sm:$0xff]
    %v3265 = vld [vmem:[#allocation16 + $0x78] sm:$0xff]
    %v3266 = vld [vmem:[#allocation16 + $0x80] sm:$0xff]
    %v3267 = vld [vmem:[#allocation16 + $0x88] sm:$0xff]
    %v3268 = vld [vmem:[#allocation16 + $0x90] sm:$0xff]
    %v3269 = vld [vmem:[#allocation16 + $0x98] sm:$0xff]
    %v3270 = vld [vmem:[#allocation16 + $0xa0] sm:$0xff]
    %v3271 = vld [vmem:[#allocation16 + $0xa8] sm:$0xff]
    %v3272 = vld [vmem:[#allocation16 + $0xb0] sm:$0xff]
    %v3273 = vld [vmem:[#allocation16 + $0xb8] sm:$0xff]
    %v3274 = vld [vmem:[#allocation16 + $0xc0] sm:$0xff]
    %v3275 = vld [vmem:[#allocation16 + $0xc8] sm:$0xff]
    %v3276 = vld [vmem:[#allocation16 + $0xd0] sm:$0xff]
    %v3277 = vld [vmem:[#allocation16 + $0xd8] sm:$0xff]
    %v3278 = vld [vmem:[#allocation16 + $0xe0] sm:$0xff]
    %v3279 = vld [vmem:[#allocation16 + $0xe8] sm:$0xff]
    %v3280 = vld [vmem:[#allocation16 + $0xf0] sm:$0xff]
    %v3281 = vld [vmem:[#allocation16 + $0xf8] sm:$0xff]
    %v3282 = vld [vmem:[#allocation16 + $0x100] sm:$0xff]
    %v3283 = vld [vmem:[#allocation16 + $0x108] sm:$0xff]
    %v3284 = vld [vmem:[#allocation16 + $0x110] sm:$0xff]
    %v3285 = vld [vmem:[#allocation16 + $0x118] sm:$0xff]
    %v3286 = vld [vmem:[#allocation16 + $0x120] sm:$0xff]
    %v3287 = vld [vmem:[#allocation16 + $0x128] sm:$0xff]
    %v3288 = vld [vmem:[#allocation16 + $0x130] sm:$0xff]
    %v3289 = vld [vmem:[#allocation16 + $0x138] sm:$0xff]
    %v3290 = vld [vmem:[#allocation16 + $0x140] sm:$0xff]
    %v3291 = vld [vmem:[#allocation16 + $0x148] sm:$0xff]
    %v3292 = vld [vmem:[#allocation16 + $0x150] sm:$0xff]
    %v3293 = vld [vmem:[#allocation16 + $0x158] sm:$0xff]
    %v3294 = vld [vmem:[#allocation16 + $0x160] sm:$0xff]
    %v3295 = vld [vmem:[#allocation16 + $0x168] sm:$0xff]
    %v3296 = vld [vmem:[#allocation16 + $0x170] sm:$0xff]
    %v3297 = vld [vmem:[#allocation16 + $0x178] sm:$0xff]
    %v3298 = vld [vmem:[#allocation16 + $0x180] sm:$0xff]
    %v3299 = vld [vmem:[#allocation16 + $0x188] sm:$0xff]
    %v3300 = vld [vmem:[#allocation16 + $0x190] sm:$0xff]
    %v3301 = vld [vmem:[#allocation16 + $0x198] sm:$0xff]
    %v3302 = vld [vmem:[#allocation16 + $0x1a0] sm:$0xff]
    %v3303 = vld [vmem:[#allocation16 + $0x1a8] sm:$0xff]
    %v3304 = vld [vmem:[#allocation16 + $0x1b0] sm:$0xff]
    %v3305 = vld [vmem:[#allocation16 + $0x1b8] sm:$0xff]
    %v3306 = vld [vmem:[#allocation16 + $0x1c0] sm:$0xff]
    %v3307 = vld [vmem:[#allocation16 + $0x1c8] sm:$0xff]
    %v3308 = vld [vmem:[#allocation16 + $0x1d0] sm:$0xff]
    %v3309 = vld [vmem:[#allocation16 + $0x1d8] sm:$0xff]
    %v3310 = vld [vmem:[#allocation16 + $0x1e0] sm:$0xff]
    %v3311 = vld [vmem:[#allocation16 + $0x1e8] sm:$0xff]
    %v3312 = vld [vmem:[#allocation16 + $0x1f0] sm:$0xff]
    %v3313 = vld [vmem:[#allocation16 + $0x1f8] sm:$0xff]
    %v3314 = vld [vmem:[#allocation14 + $0x10] sm:$0xff]
    %v3315 = vld [vmem:[#allocation14 + $0x18] sm:$0xff]
    %v3316 = vld [vmem:[#allocation14 + $0x30] sm:$0xff]
    %v3317 = vld [vmem:[#allocation14 + $0x38] sm:$0xff]
    %v3318 = vld [vmem:[#allocation14 + $0x50] sm:$0xff]
    %v3319 = vld [vmem:[#allocation14 + $0x58] sm:$0xff]
    %v3320 = vld [vmem:[#allocation14 + $0x70] sm:$0xff]
    %v3321 = vld [vmem:[#allocation14 + $0x78] sm:$0xff]
    %v3322 = vld [vmem:[#allocation14 + $0x90] sm:$0xff]
    %v3323 = vld [vmem:[#allocation14 + $0x98] sm:$0xff]
    %v3324 = vld [vmem:[#allocation14 + $0xb0] sm:$0xff]
    %v3325 = vld [vmem:[#allocation14 + $0xb8] sm:$0xff]
    %v3326 = vld [vmem:[#allocation14 + $0xd0] sm:$0xff]
    %v3327 = vld [vmem:[#allocation14 + $0xd8] sm:$0xff]
    %v3328 = vld [vmem:[#allocation14 + $0xf0] sm:$0xff]
    %v3329 = vld [vmem:[#allocation14 + $0xf8] sm:$0xff]
    %v3330 = vld [vmem:[#allocation14 + $0x110] sm:$0xff]
    %v3331 = vld [vmem:[#allocation14 + $0x118] sm:$0xff]
    %v3332 = vld [vmem:[#allocation14 + $0x130] sm:$0xff]
    %v3333 = vld [vmem:[#allocation14 + $0x138] sm:$0xff]
    %v3334 = vld [vmem:[#allocation14 + $0x150] sm:$0xff]
    %v3335 = vld [vmem:[#allocation14 + $0x158] sm:$0xff]
    %v3336 = vld [vmem:[#allocation14 + $0x170] sm:$0xff]
    %v3337 = vld [vmem:[#allocation14 + $0x178] sm:$0xff]
    %v3338 = vld [vmem:[#allocation14 + $0x190] sm:$0xff]
    %v3339 = vld [vmem:[#allocation14 + $0x198] sm:$0xff]
    %v3340 = vld [vmem:[#allocation14 + $0x1b0] sm:$0xff]
    %v3341 = vld [vmem:[#allocation14 + $0x1b8] sm:$0xff]
    %v3342 = vld [vmem:[#allocation14 + $0x1d0] sm:$0xff]
    %v3343 = vld [vmem:[#allocation14 + $0x1d8] sm:$0xff]
    %v3344 = vld [vmem:[#allocation14 + $0x1f0] sm:$0xff]
    %v3345 = vld [vmem:[#allocation14 + $0x1f8] sm:$0xff]
    %v3346 = vld [vmem:[#allocation14 + $0x210] sm:$0xff]
    %v3347 = vld [vmem:[#allocation14 + $0x218] sm:$0xff]
    %v3348 = vld [vmem:[#allocation14 + $0x230] sm:$0xff]
    %v3349 = vld [vmem:[#allocation14 + $0x238] sm:$0xff]
    %v3350 = vld [vmem:[#allocation14 + $0x250] sm:$0xff]
    %v3351 = vld [vmem:[#allocation14 + $0x258] sm:$0xff]
    %v3352 = vld [vmem:[#allocation14 + $0x270] sm:$0xff]
    %v3353 = vld [vmem:[#allocation14 + $0x278] sm:$0xff]
    %v3354 = vld [vmem:[#allocation14 + $0x290] sm:$0xff]
    %v3355 = vld [vmem:[#allocation14 + $0x298] sm:$0xff]
    %v3356 = vld [vmem:[#allocation14 + $0x2b0] sm:$0xff]
    %v3357 = vld [vmem:[#allocation14 + $0x2b8] sm:$0xff]
    %v3358 = vld [vmem:[#allocation14 + $0x2d0] sm:$0xff]
    %v3359 = vld [vmem:[#allocation14 + $0x2d8] sm:$0xff]
    %v3360 = vld [vmem:[#allocation14 + $0x2f0] sm:$0xff]
    %v3361 = vld [vmem:[#allocation14 + $0x2f8] sm:$0xff]
    %v3362 = vld [vmem:[#allocation14 + $0x310] sm:$0xff]
    %v3363 = vld [vmem:[#allocation14 + $0x318] sm:$0xff]
    %v3364 = vld [vmem:[#allocation14 + $0x330] sm:$0xff]
    %v3365 = vld [vmem:[#allocation14 + $0x338] sm:$0xff]
    %v3366 = vld [vmem:[#allocation14 + $0x350] sm:$0xff]
    %v3367 = vld [vmem:[#allocation14 + $0x358] sm:$0xff]
    %v3368 = vld [vmem:[#allocation14 + $0x370] sm:$0xff]
    %v3369 = vld [vmem:[#allocation14 + $0x378] sm:$0xff]
    %v3370 = vld [vmem:[#allocation14 + $0x390] sm:$0xff]
    %v3371 = vld [vmem:[#allocation14 + $0x398] sm:$0xff]
    %v3372 = vld [vmem:[#allocation14 + $0x3b0] sm:$0xff]
    %v3373 = vld [vmem:[#allocation14 + $0x3b8] sm:$0xff]
    %v3374 = vld [vmem:[#allocation14 + $0x3d0] sm:$0xff]
    %v3375 = vld [vmem:[#allocation14 + $0x3d8] sm:$0xff]
    %v3376 = vld [vmem:[#allocation14 + $0x3f0] sm:$0xff]
    %v3377 = vld [vmem:[#allocation14 + $0x3f8] sm:$0xff]
    %v3378 = vld [vmem:[%s10 + $0x4] sm:$0xf]
    %v3380 = vlaneseq
    %v3381 = vshrl.u32 %v3380, 7
    %v3382 = vsub.s32 0, %v3381
    %v3383 = vrot.slane %v3378, %v3382
    %v3384 = vlaneseq
    %v3385 = vshrl.u32 %v3384, 7
    %v3386 = vsub.s32 1, %v3385
    %v3387 = vrot.slane %v3378, %v3386
    %v3388 = vlaneseq
    %v3389 = vshrl.u32 %v3388, 7
    %v3390 = vsub.s32 2, %v3389
    %v3391 = vrot.slane %v3378, %v3390
    %v3392 = vlaneseq
    %v3393 = vshrl.u32 %v3392, 7
    %v3394 = vsub.s32 3, %v3393
    %v3395 = vrot.slane %v3378, %v3394
    %v3464 = vunpack.c.l.b16 %v3314
    %v3465 = vunpack.c.h.b16 %v3314
    %v3466 = vunpack.c.l.b16 %v3315
    %v3467 = vunpack.c.h.b16 %v3315
    %v3468 = vunpack.c.l.b16 %v3316
    %v3469 = vunpack.c.h.b16 %v3316
    %v3470 = vunpack.c.l.b16 %v3317
    %v3471 = vunpack.c.h.b16 %v3317
    %v3472 = vunpack.c.l.b16 %v3318
    %v3473 = vunpack.c.h.b16 %v3318
    %v3474 = vunpack.c.l.b16 %v3319
    %v3475 = vunpack.c.h.b16 %v3319
    %v3476 = vunpack.c.l.b16 %v3320
    %v3477 = vunpack.c.h.b16 %v3320
    %v3478 = vunpack.c.l.b16 %v3321
    %v3479 = vunpack.c.h.b16 %v3321
    %v3480 = vunpack.c.l.b16 %v3322
    %v3481 = vunpack.c.h.b16 %v3322
    %v3482 = vunpack.c.l.b16 %v3323
    %v3483 = vunpack.c.h.b16 %v3323
    %v3484 = vunpack.c.l.b16 %v3324
    %v3485 = vunpack.c.h.b16 %v3324
    %v3486 = vunpack.c.l.b16 %v3325
    %v3487 = vunpack.c.h.b16 %v3325
    %v3488 = vunpack.c.l.b16 %v3326
    %v3489 = vunpack.c.h.b16 %v3326
    %v3490 = vunpack.c.l.b16 %v3327
    %v3491 = vunpack.c.h.b16 %v3327
    %v3492 = vunpack.c.l.b16 %v3328
    %v3493 = vunpack.c.h.b16 %v3328
    %v3494 = vunpack.c.l.b16 %v3329
    %v3495 = vunpack.c.h.b16 %v3329
    %v3496 = vunpack.c.l.b16 %v3330
    %v3497 = vunpack.c.h.b16 %v3330
    %v3498 = vunpack.c.l.b16 %v3331
    %v3499 = vunpack.c.h.b16 %v3331
    %v3500 = vunpack.c.l.b16 %v3332
    %v3501 = vunpack.c.h.b16 %v3332
    %v3502 = vunpack.c.l.b16 %v3333
    %v3503 = vunpack.c.h.b16 %v3333
    %v3504 = vunpack.c.l.b16 %v3334
    %v3505 = vunpack.c.h.b16 %v3334
    %v3506 = vunpack.c.l.b16 %v3335
    %v3507 = vunpack.c.h.b16 %v3335
    %v3508 = vunpack.c.l.b16 %v3336
    %v3509 = vunpack.c.h.b16 %v3336
    %v3510 = vunpack.c.l.b16 %v3337
    %v3511 = vunpack.c.h.b16 %v3337
    %v3512 = vunpack.c.l.b16 %v3338
    %v3513 = vunpack.c.h.b16 %v3338
    %v3514 = vunpack.c.l.b16 %v3339
    %v3515 = vunpack.c.h.b16 %v3339
    %v3516 = vunpack.c.l.b16 %v3340
    %v3517 = vunpack.c.h.b16 %v3340
    %v3518 = vunpack.c.l.b16 %v3341
    %v3519 = vunpack.c.h.b16 %v3341
    %v3520 = vunpack.c.l.b16 %v3342
    %v3521 = vunpack.c.h.b16 %v3342
    %v3522 = vunpack.c.l.b16 %v3343
    %v3523 = vunpack.c.h.b16 %v3343
    %v3524 = vunpack.c.l.b16 %v3344
    %v3525 = vunpack.c.h.b16 %v3344
    %v3526 = vunpack.c.l.b16 %v3345
    %v3527 = vunpack.c.h.b16 %v3345
    %v3528 = vunpack.c.l.b16 %v3346
    %v3529 = vunpack.c.h.b16 %v3346
    %v3530 = vunpack.c.l.b16 %v3347
    %v3531 = vunpack.c.h.b16 %v3347
    %v3532 = vunpack.c.l.b16 %v3348
    %v3533 = vunpack.c.h.b16 %v3348
    %v3534 = vunpack.c.l.b16 %v3349
    %v3535 = vunpack.c.h.b16 %v3349
    %v3536 = vunpack.c.l.b16 %v3350
    %v3537 = vunpack.c.h.b16 %v3350
    %v3538 = vunpack.c.l.b16 %v3351
    %v3539 = vunpack.c.h.b16 %v3351
    %v3540 = vunpack.c.l.b16 %v3352
    %v3541 = vunpack.c.h.b16 %v3352
    %v3542 = vunpack.c.l.b16 %v3353
    %v3543 = vunpack.c.h.b16 %v3353
    %v3544 = vunpack.c.l.b16 %v3354
    %v3545 = vunpack.c.h.b16 %v3354
    %v3546 = vunpack.c.l.b16 %v3355
    %v3547 = vunpack.c.h.b16 %v3355
    %v3548 = vunpack.c.l.b16 %v3356
    %v3549 = vunpack.c.h.b16 %v3356
    %v3550 = vunpack.c.l.b16 %v3357
    %v3551 = vunpack.c.h.b16 %v3357
    %v3552 = vunpack.c.l.b16 %v3358
    %v3553 = vunpack.c.h.b16 %v3358
    %v3554 = vunpack.c.l.b16 %v3359
    %v3555 = vunpack.c.h.b16 %v3359
    %v3556 = vunpack.c.l.b16 %v3360
    %v3557 = vunpack.c.h.b16 %v3360
    %v3558 = vunpack.c.l.b16 %v3361
    %v3559 = vunpack.c.h.b16 %v3361
    %v3560 = vunpack.c.l.b16 %v3362
    %v3561 = vunpack.c.h.b16 %v3362
    %v3562 = vunpack.c.l.b16 %v3363
    %v3563 = vunpack.c.h.b16 %v3363
    %v3564 = vunpack.c.l.b16 %v3364
    %v3565 = vunpack.c.h.b16 %v3364
    %v3566 = vunpack.c.l.b16 %v3365
    %v3567 = vunpack.c.h.b16 %v3365
    %v3568 = vunpack.c.l.b16 %v3366
    %v3569 = vunpack.c.h.b16 %v3366
    %v3570 = vunpack.c.l.b16 %v3367
    %v3571 = vunpack.c.h.b16 %v3367
    %v3572 = vunpack.c.l.b16 %v3368
    %v3573 = vunpack.c.h.b16 %v3368
    %v3574 = vunpack.c.l.b16 %v3369
    %v3575 = vunpack.c.h.b16 %v3369
    %v3576 = vunpack.c.l.b16 %v3370
    %v3577 = vunpack.c.h.b16 %v3370
    %v3578 = vunpack.c.l.b16 %v3371
    %v3579 = vunpack.c.h.b16 %v3371
    %v3580 = vunpack.c.l.b16 %v3372
    %v3581 = vunpack.c.h.b16 %v3372
    %v3582 = vunpack.c.l.b16 %v3373
    %v3583 = vunpack.c.h.b16 %v3373
    %v3584 = vunpack.c.l.b16 %v3374
    %v3585 = vunpack.c.h.b16 %v3374
    %v3586 = vunpack.c.l.b16 %v3375
    %v3587 = vunpack.c.h.b16 %v3375
    %v3588 = vunpack.c.l.b16 %v3376
    %v3589 = vunpack.c.h.b16 %v3376
    %v3590 = vunpack.c.l.b16 %v3377
    %v3591 = vunpack.c.h.b16 %v3377
    %v3592 = vpack.c.b16 %v3468, %v3464
    %v3593 = vpack.c.b16 %v3469, %v3465
    %v3594 = vpack.c.b16 %v3470, %v3466
    %v3595 = vpack.c.b16 %v3471, %v3467
    %v3596 = vpack.c.b16 %v3476, %v3472
    %v3597 = vpack.c.b16 %v3477, %v3473
    %v3598 = vpack.c.b16 %v3478, %v3474
    %v3599 = vpack.c.b16 %v3479, %v3475
    %v3600 = vpack.c.b16 %v3484, %v3480
    %v3601 = vpack.c.b16 %v3485, %v3481
    %v3602 = vpack.c.b16 %v3486, %v3482
    %v3603 = vpack.c.b16 %v3487, %v3483
    %v3604 = vpack.c.b16 %v3492, %v3488
    %v3605 = vpack.c.b16 %v3493, %v3489
    %v3606 = vpack.c.b16 %v3494, %v3490
    %v3607 = vpack.c.b16 %v3495, %v3491
    %v3608 = vpack.c.b16 %v3500, %v3496
    %v3609 = vpack.c.b16 %v3501, %v3497
    %v3610 = vpack.c.b16 %v3502, %v3498
    %v3611 = vpack.c.b16 %v3503, %v3499
    %v3612 = vpack.c.b16 %v3508, %v3504
    %v3613 = vpack.c.b16 %v3509, %v3505
    %v3614 = vpack.c.b16 %v3510, %v3506
    %v3615 = vpack.c.b16 %v3511, %v3507
    %v3616 = vpack.c.b16 %v3516, %v3512
    %v3617 = vpack.c.b16 %v3517, %v3513
    %v3618 = vpack.c.b16 %v3518, %v3514
    %v3619 = vpack.c.b16 %v3519, %v3515
    %v3620 = vpack.c.b16 %v3524, %v3520
    %v3621 = vpack.c.b16 %v3525, %v3521
    %v3622 = vpack.c.b16 %v3526, %v3522
    %v3623 = vpack.c.b16 %v3527, %v3523
    %v3624 = vpack.c.b16 %v3532, %v3528
    %v3625 = vpack.c.b16 %v3533, %v3529
    %v3626 = vpack.c.b16 %v3534, %v3530
    %v3627 = vpack.c.b16 %v3535, %v3531
    %v3628 = vpack.c.b16 %v3540, %v3536
    %v3629 = vpack.c.b16 %v3541, %v3537
    %v3630 = vpack.c.b16 %v3542, %v3538
    %v3631 = vpack.c.b16 %v3543, %v3539
    %v3632 = vpack.c.b16 %v3548, %v3544
    %v3633 = vpack.c.b16 %v3549, %v3545
    %v3634 = vpack.c.b16 %v3550, %v3546
    %v3635 = vpack.c.b16 %v3551, %v3547
    %v3636 = vpack.c.b16 %v3556, %v3552
    %v3637 = vpack.c.b16 %v3557, %v3553
    %v3638 = vpack.c.b16 %v3558, %v3554
    %v3639 = vpack.c.b16 %v3559, %v3555
    %v3640 = vpack.c.b16 %v3564, %v3560
    %v3641 = vpack.c.b16 %v3565, %v3561
    %v3642 = vpack.c.b16 %v3566, %v3562
    %v3643 = vpack.c.b16 %v3567, %v3563
    %v3644 = vpack.c.b16 %v3572, %v3568
    %v3645 = vpack.c.b16 %v3573, %v3569
    %v3646 = vpack.c.b16 %v3574, %v3570
    %v3647 = vpack.c.b16 %v3575, %v3571
    %v3648 = vpack.c.b16 %v3580, %v3576
    %v3649 = vpack.c.b16 %v3581, %v3577
    %v3650 = vpack.c.b16 %v3582, %v3578
    %v3651 = vpack.c.b16 %v3583, %v3579
    %v3652 = vpack.c.b16 %v3588, %v3584
    %v3653 = vpack.c.b16 %v3589, %v3585
    %v3654 = vpack.c.b16 %v3590, %v3586
    %v3655 = vpack.c.b16 %v3591, %v3587
    %3720 = vmatprep.subr.bf16.mxu0 %v3593
    %3721 = vmatpush1.bf16.msra.mxu0 %v3592
    %3722 = vmatprep.subr.bf16.mxu0 %v3597
    %3723 = vmatpush1.bf16.msra.mxu0 %v3596
    %3724 = vmatprep.subr.bf16.mxu0 %v3601
    %3725 = vmatpush1.bf16.msra.mxu0 %v3600
    %3726 = vmatprep.subr.bf16.mxu0 %v3605
    %3727 = vmatpush1.bf16.msra.mxu0 %v3604
    %3728 = vmatprep.subr.bf16.mxu0 %v3609
    %3729 = vmatpush1.bf16.msra.mxu0 %v3608
    %3730 = vmatprep.subr.bf16.mxu0 %v3613
    %3731 = vmatpush1.bf16.msra.mxu0 %v3612
    %3732 = vmatprep.subr.bf16.mxu0 %v3617
    %3733 = vmatpush1.bf16.msra.mxu0 %v3616
    %3734 = vmatprep.subr.bf16.mxu0 %v3621
    %3735 = vmatpush1.bf16.msra.mxu0 %v3620
    %3736 = vmatprep.subr.bf16.mxu0 %v3625
    %3737 = vmatpush1.bf16.msra.mxu0 %v3624
    %3738 = vmatprep.subr.bf16.mxu0 %v3629
    %3739 = vmatpush1.bf16.msra.mxu0 %v3628
    %3740 = vmatprep.subr.bf16.mxu0 %v3633
    %3741 = vmatpush1.bf16.msra.mxu0 %v3632
    %3742 = vmatprep.subr.bf16.mxu0 %v3637
    %3743 = vmatpush1.bf16.msra.mxu0 %v3636
    %3744 = vmatprep.subr.bf16.mxu0 %v3641
    %3745 = vmatpush1.bf16.msra.mxu0 %v3640
    %3746 = vmatprep.subr.bf16.mxu0 %v3645
    %3747 = vmatpush1.bf16.msra.mxu0 %v3644
    %3748 = vmatprep.subr.bf16.mxu0 %v3649
    %3749 = vmatpush1.bf16.msra.mxu0 %v3648
    %3750 = vmatprep.subr.bf16.mxu0 %v3653
    %3751 = vmatpush1.bf16.msra.mxu0 %v3652
    %3752 = vmatprep.mubr.bf16.mxu0 %v2599
    %3753 = vmatmul.mubr.bf16.gmra.mrb[0].mxu0 %v2598
    %v3754 = vpop.f32.mrb[0].mxu0
    %v3755 = vadd.f32 %v3383, %v3754
    %v3756 = vpop.f32.mrb[0].mxu0
    %v3757 = vadd.f32 %v3387, %v3756
    %v3758 = vpop.f32.mrb[0].mxu0
    %v3759 = vadd.f32 %v3383, %v3758
    %v3760 = vpop.f32.mrb[0].mxu0
    %v3761 = vadd.f32 %v3387, %v3760
    %3762 = vmatprep.mubr.bf16.mxu0 %v2601
    %3763 = vmatmul.mubr.bf16.gmra.mrb[0].mxu0 %v2600
    %v3764 = vpop.f32.mrb[0].mxu0
    %v3765 = vadd.f32 %v3383, %v3764
    %v3766 = vpop.f32.mrb[0].mxu0
    %v3767 = vadd.f32 %v3387, %v3766
    %v3768 = vpop.f32.mrb[0].mxu0
    %v3769 = vadd.f32 %v3383, %v3768
    %v3770 = vpop.f32.mrb[0].mxu0
    %v3771 = vadd.f32 %v3387, %v3770
    %3772 = vdwg.mxu0
    %3773 = vmatprep.subr.bf16.mxu0 %v3595
    %3774 = vmatpush1.bf16.msra.mxu0 %v3594
    %3775 = vmatprep.subr.bf16.mxu0 %v3599
    %3776 = vmatpush1.bf16.msra.mxu0 %v3598
    %3777 = vmatprep.subr.bf16.mxu0 %v3603
    %3778 = vmatpush1.bf16.msra.mxu0 %v3602
    %3779 = vmatprep.subr.bf16.mxu0 %v3607
    %3780 = vmatpush1.bf16.msra.mxu0 %v3606
    %3781 = vmatprep.subr.bf16.mxu0 %v3611
    %3782 = vmatpush1.bf16.msra.mxu0 %v3610
    %3783 = vmatprep.subr.bf16.mxu0 %v3615
    %3784 = vmatpush1.bf16.msra.mxu0 %v3614
    %3785 = vmatprep.subr.bf16.mxu0 %v3619
    %3786 = vmatpush1.bf16.msra.mxu0 %v3618
    %3787 = vmatprep.subr.bf16.mxu0 %v3623
    %3788 = vmatpush1.bf16.msra.mxu0 %v3622
    %3789 = vmatprep.subr.bf16.mxu0 %v3627
    %3790 = vmatpush1.bf16.msra.mxu0 %v3626
    %3791 = vmatprep.subr.bf16.mxu0 %v3631
    %3792 = vmatpush1.bf16.msra.mxu0 %v3630
    %3793 = vmatprep.subr.bf16.mxu0 %v3635
    %3794 = vmatpush1.bf16.msra.mxu0 %v3634
    %3795 = vmatprep.subr.bf16.mxu0 %v3639
    %3796 = vmatpush1.bf16.msra.mxu0 %v3638
    %3797 = vmatprep.subr.bf16.mxu0 %v3643
    %3798 = vmatpush1.bf16.msra.mxu0 %v3642
    %3799 = vmatprep.subr.bf16.mxu0 %v3647
    %3800 = vmatpush1.bf16.msra.mxu0 %v3646
    %3801 = vmatprep.subr.bf16.mxu0 %v3651
    %3802 = vmatpush1.bf16.msra.mxu0 %v3650
    %3803 = vmatprep.subr.bf16.mxu0 %v3655
    %3804 = vmatpush1.bf16.msra.mxu0 %v3654
    %3805 = vmatprep.mubr.bf16.mxu0 %v2599
    %3806 = vmatmul.mubr.bf16.gmra.mrb[0].mxu0 %v2598
    %v3807 = vpop.f32.mrb[0].mxu0
    %v3808 = vadd.f32 %v3391, %v3807
    %v3809 = vpop.f32.mrb[0].mxu0
    %v3810 = vadd.f32 %v3395, %v3809
    %v3811 = vpop.f32.mrb[0].mxu0
    %v3812 = vadd.f32 %v3391, %v3811
    %v3813 = vpop.f32.mrb[0].mxu0
    %v3814 = vadd.f32 %v3395, %v3813
    %3815 = vmatprep.mubr.bf16.mxu0 %v2601
    %3816 = vmatmul.mubr.bf16.gmra.mrb[0].mxu0 %v2600
    %v3817 = vpop.f32.mrb[0].mxu0
    %v3818 = vadd.f32 %v3391, %v3817
    %v3819 = vpop.f32.mrb[0].mxu0
    %v3820 = vadd.f32 %v3395, %v3819
    %v3821 = vpop.f32.mrb[0].mxu0
    %v3822 = vadd.f32 %v3391, %v3821
    %v3823 = vpop.f32.mrb[0].mxu0
    %v3824 = vadd.f32 %v3395, %v3823
    %3825 = vdwg.mxu0
    %v3826 = vmul.f32 %v3755, 1.702
    %v3827 = vmul.f32 %v3757, 1.702
    %v3828 = vmul.f32 %v3808, 1.702
    %v3829 = vmul.f32 %v3810, 1.702
    %v3830 = vmul.f32 %v3759, 1.702
    %v3831 = vmul.f32 %v3761, 1.702
    %v3832 = vmul.f32 %v3812, 1.702
    %v3833 = vmul.f32 %v3814, 1.702
    %v3834 = vmul.f32 %v3765, 1.702
    %v3835 = vmul.f32 %v3767, 1.702
    %v3836 = vmul.f32 %v3818, 1.702
    %v3837 = vmul.f32 %v3820, 1.702
    %v3838 = vmul.f32 %v3769, 1.702
    %v3839 = vmul.f32 %v3771, 1.702
    %v3840 = vmul.f32 %v3822, 1.702
    %v3841 = vmul.f32 %v3824, 1.702
    %v3842 = vxor.u32 %v3826, 2147483648
    %v3843 = vxor.u32 %v3827, 2147483648
    %v3844 = vxor.u32 %v3828, 2147483648
    %v3845 = vxor.u32 %v3829, 2147483648
    %v3846 = vxor.u32 %v3830, 2147483648
    %v3847 = vxor.u32 %v3831, 2147483648
    %v3848 = vxor.u32 %v3832, 2147483648
    %v3849 = vxor.u32 %v3833, 2147483648
    %v3850 = vxor.u32 %v3834, 2147483648
    %v3851 = vxor.u32 %v3835, 2147483648
    %v3852 = vxor.u32 %v3836, 2147483648
    %v3853 = vxor.u32 %v3837, 2147483648
    %v3854 = vxor.u32 %v3838, 2147483648
    %v3855 = vxor.u32 %v3839, 2147483648
    %v3856 = vxor.u32 %v3840, 2147483648
    %v3857 = vxor.u32 %v3841, 2147483648
    %v3858 = vmul.f32 %v3842, 1.442695
    %v3859 = vpow.pop %v3858
    %v3860 = vmul.f32 %v3843, 1.442695
    %v3861 = vpow.pop %v3860
    %v3862 = vmul.f32 %v3844, 1.442695
    %v3863 = vpow.pop %v3862
    %v3864 = vmul.f32 %v3845, 1.442695
    %v3865 = vpow.pop %v3864
    %v3866 = vmul.f32 %v3846, 1.442695
    %v3867 = vpow.pop %v3866
    %v3868 = vmul.f32 %v3847, 1.442695
    %v3869 = vpow.pop %v3868
    %v3870 = vmul.f32 %v3848, 1.442695
    %v3871 = vpow.pop %v3870
    %v3872 = vmul.f32 %v3849, 1.442695
    %v3873 = vpow.pop %v3872
    %v3874 = vmul.f32 %v3850, 1.442695
    %v3875 = vpow.pop %v3874
    %v3876 = vmul.f32 %v3851, 1.442695
    %v3877 = vpow.pop %v3876
    %v3878 = vmul.f32 %v3852, 1.442695
    %v3879 = vpow.pop %v3878
    %v3880 = vmul.f32 %v3853, 1.442695
    %v3881 = vpow.pop %v3880
    %v3882 = vmul.f32 %v3854, 1.442695
    %v3883 = vpow.pop %v3882
    %v3884 = vmul.f32 %v3855, 1.442695
    %v3885 = vpow.pop %v3884
    %v3886 = vmul.f32 %v3856, 1.442695
    %v3887 = vpow.pop %v3886
    %v3888 = vmul.f32 %v3857, 1.442695
    %v3889 = vpow.pop %v3888
    %v3890 = vadd.f32 %v3859, 1.0
    %v3891 = vadd.f32 %v3861, 1.0
    %v3892 = vadd.f32 %v3863, 1.0
    %v3893 = vadd.f32 %v3865, 1.0
    %v3894 = vadd.f32 %v3867, 1.0
    %v3895 = vadd.f32 %v3869, 1.0
    %v3896 = vadd.f32 %v3871, 1.0
    %v3897 = vadd.f32 %v3873, 1.0
    %v3898 = vadd.f32 %v3875, 1.0
    %v3899 = vadd.f32 %v3877, 1.0
    %v3900 = vadd.f32 %v3879, 1.0
    %v3901 = vadd.f32 %v3881, 1.0
    %v3902 = vadd.f32 %v3883, 1.0
    %v3903 = vadd.f32 %v3885, 1.0
    %v3904 = vadd.f32 %v3887, 1.0
    %v3905 = vadd.f32 %v3889, 1.0
    %v3906 = vrcp.pop %v3890
    %v3907 = vmul.f32 1.0, %v3906
    %v3908 = vrcp.pop %v3891
    %v3909 = vmul.f32 1.0, %v3908
    %v3910 = vrcp.pop %v3892
    %v3911 = vmul.f32 1.0, %v3910
    %v3912 = vrcp.pop %v3893
    %v3913 = vmul.f32 1.0, %v3912
    %v3914 = vrcp.pop %v3894
    %v3915 = vmul.f32 1.0, %v3914
    %v3916 = vrcp.pop %v3895
    %v3917 = vmul.f32 1.0, %v3916
    %v3918 = vrcp.pop %v3896
    %v3919 = vmul.f32 1.0, %v3918
    %v3920 = vrcp.pop %v3897
    %v3921 = vmul.f32 1.0, %v3920
    %v3922 = vrcp.pop %v3898
    %v3923 = vmul.f32 1.0, %v3922
    %v3924 = vrcp.pop %v3899
    %v3925 = vmul.f32 1.0, %v3924
    %v3926 = vrcp.pop %v3900
    %v3927 = vmul.f32 1.0, %v3926
    %v3928 = vrcp.pop %v3901
    %v3929 = vmul.f32 1.0, %v3928
    %v3930 = vrcp.pop %v3902
    %v3931 = vmul.f32 1.0, %v3930
    %v3932 = vrcp.pop %v3903
    %v3933 = vmul.f32 1.0, %v3932
    %v3934 = vrcp.pop %v3904
    %v3935 = vmul.f32 1.0, %v3934
    %v3936 = vrcp.pop %v3905
    %v3937 = vmul.f32 1.0, %v3936
    %v3938 = vmul.f32 %v3755, %v3907
    %v3939 = vmul.f32 %v3757, %v3909
    %v3940 = vmul.f32 %v3808, %v3911
    %v3941 = vmul.f32 %v3810, %v3913
    %v3942 = vmul.f32 %v3759, %v3915
    %v3943 = vmul.f32 %v3761, %v3917
    %v3944 = vmul.f32 %v3812, %v3919
    %v3945 = vmul.f32 %v3814, %v3921
    %v3946 = vmul.f32 %v3765, %v3923
    %v3947 = vmul.f32 %v3767, %v3925
    %v3948 = vmul.f32 %v3818, %v3927
    %v3949 = vmul.f32 %v3820, %v3929
    %v3950 = vmul.f32 %v3769, %v3931
    %v3951 = vmul.f32 %v3771, %v3933
    %v3952 = vmul.f32 %v3822, %v3935
    %v3953 = vmul.f32 %v3824, %v3937
    %v3954 = vpack.c.bf16 %v3942, %v3938
    %v3955 = vpack.c.bf16 %v3943, %v3939
    %v3956 = vpack.c.bf16 %v3944, %v3940
    %v3957 = vpack.c.bf16 %v3945, %v3941
    %v3958 = vpack.c.bf16 %v3950, %v3946
    %v3959 = vpack.c.bf16 %v3951, %v3947
    %v3960 = vpack.c.bf16 %v3952, %v3948
    %v3961 = vpack.c.bf16 %v3953, %v3949
    %v3962 = vld [vmem:[#allocation16 + $0x200] sm:$0xff]
    %v3963 = vld [vmem:[#allocation16 + $0x208] sm:$0xff]
    %v3964 = vld [vmem:[#allocation16 + $0x210] sm:$0xff]
    %v3965 = vld [vmem:[#allocation16 + $0x218] sm:$0xff]
    %v3966 = vld [vmem:[#allocation16 + $0x220] sm:$0xff]
    %v3967 = vld [vmem:[#allocation16 + $0x228] sm:$0xff]
    %v3968 = vld [vmem:[#allocation16 + $0x230] sm:$0xff]
    %v3969 = vld [vmem:[#allocation16 + $0x238] sm:$0xff]
    %v3970 = vld [vmem:[#allocation16 + $0x240] sm:$0xff]
    %v3971 = vld [vmem:[#allocation16 + $0x248] sm:$0xff]
    %v3972 = vld [vmem:[#allocation16 + $0x250] sm:$0xff]
    %v3973 = vld [vmem:[#allocation16 + $0x258] sm:$0xff]
    %v3974 = vld [vmem:[#allocation16 + $0x260] sm:$0xff]
    %v3975 = vld [vmem:[#allocation16 + $0x268] sm:$0xff]
    %v3976 = vld [vmem:[#allocation16 + $0x270] sm:$0xff]
    %v3977 = vld [vmem:[#allocation16 + $0x278] sm:$0xff]
    %v3978 = vld [vmem:[#allocation16 + $0x280] sm:$0xff]
    %v3979 = vld [vmem:[#allocation16 + $0x288] sm:$0xff]
    %v3980 = vld [vmem:[#allocation16 + $0x290] sm:$0xff]
    %v3981 = vld [vmem:[#allocation16 + $0x298] sm:$0xff]
    %v3982 = vld [vmem:[#allocation16 + $0x2a0] sm:$0xff]
    %v3983 = vld [vmem:[#allocation16 + $0x2a8] sm:$0xff]
    %v3984 = vld [vmem:[#allocation16 + $0x2b0] sm:$0xff]
    %v3985 = vld [vmem:[#allocation16 + $0x2b8] sm:$0xff]
    %v3986 = vld [vmem:[#allocation16 + $0x2c0] sm:$0xff]
    %v3987 = vld [vmem:[#allocation16 + $0x2c8] sm:$0xff]
    %v3988 = vld [vmem:[#allocation16 + $0x2d0] sm:$0xff]
    %v3989 = vld [vmem:[#allocation16 + $0x2d8] sm:$0xff]
    %v3990 = vld [vmem:[#allocation16 + $0x2e0] sm:$0xff]
    %v3991 = vld [vmem:[#allocation16 + $0x2e8] sm:$0xff]
    %v3992 = vld [vmem:[#allocation16 + $0x2f0] sm:$0xff]
    %v3993 = vld [vmem:[#allocation16 + $0x2f8] sm:$0xff]
    %v3994 = vld [vmem:[#allocation16 + $0x300] sm:$0xff]
    %v3995 = vld [vmem:[#allocation16 + $0x308] sm:$0xff]
    %v3996 = vld [vmem:[#allocation16 + $0x310] sm:$0xff]
    %v3997 = vld [vmem:[#allocation16 + $0x318] sm:$0xff]
    %v3998 = vld [vmem:[#allocation16 + $0x320] sm:$0xff]
    %v3999 = vld [vmem:[#allocation16 + $0x328] sm:$0xff]
    %v4000 = vld [vmem:[#allocation16 + $0x330] sm:$0xff]
    %v4001 = vld [vmem:[#allocation16 + $0x338] sm:$0xff]
    %v4002 = vld [vmem:[#allocation16 + $0x340] sm:$0xff]
    %v4003 = vld [vmem:[#allocation16 + $0x348] sm:$0xff]
    %v4004 = vld [vmem:[#allocation16 + $0x350] sm:$0xff]
    %v4005 = vld [vmem:[#allocation16 + $0x358] sm:$0xff]
    %v4006 = vld [vmem:[#allocation16 + $0x360] sm:$0xff]
    %v4007 = vld [vmem:[#allocation16 + $0x368] sm:$0xff]
    %v4008 = vld [vmem:[#allocation16 + $0x370] sm:$0xff]
    %v4009 = vld [vmem:[#allocation16 + $0x378] sm:$0xff]
    %v4010 = vld [vmem:[#allocation16 + $0x380] sm:$0xff]
    %v4011 = vld [vmem:[#allocation16 + $0x388] sm:$0xff]
    %v4012 = vld [vmem:[#allocation16 + $0x390] sm:$0xff]
    %v4013 = vld [vmem:[#allocation16 + $0x398] sm:$0xff]
    %v4014 = vld [vmem:[#allocation16 + $0x3a0] sm:$0xff]
    %v4015 = vld [vmem:[#allocation16 + $0x3a8] sm:$0xff]
    %v4016 = vld [vmem:[#allocation16 + $0x3b0] sm:$0xff]
    %v4017 = vld [vmem:[#allocation16 + $0x3b8] sm:$0xff]
    %v4018 = vld [vmem:[#allocation16 + $0x3c0] sm:$0xff]
    %v4019 = vld [vmem:[#allocation16 + $0x3c8] sm:$0xff]
    %v4020 = vld [vmem:[#allocation16 + $0x3d0] sm:$0xff]
    %v4021 = vld [vmem:[#allocation16 + $0x3d8] sm:$0xff]
    %v4022 = vld [vmem:[#allocation16 + $0x3e0] sm:$0xff]
    %v4023 = vld [vmem:[#allocation16 + $0x3e8] sm:$0xff]
    %v4024 = vld [vmem:[#allocation16 + $0x3f0] sm:$0xff]
    %v4025 = vld [vmem:[#allocation16 + $0x3f8] sm:$0xff]
    %v4090 = vunpack.c.l.b16 %v3962
    %v4091 = vunpack.c.h.b16 %v3962
    %v4092 = vunpack.c.l.b16 %v3963
    %v4093 = vunpack.c.h.b16 %v3963
    %v4094 = vunpack.c.l.b16 %v3964
    %v4095 = vunpack.c.h.b16 %v3964
    %v4096 = vunpack.c.l.b16 %v3965
    %v4097 = vunpack.c.h.b16 %v3965
    %v4098 = vunpack.c.l.b16 %v3966
    %v4099 = vunpack.c.h.b16 %v3966
    %v4100 = vunpack.c.l.b16 %v3967
    %v4101 = vunpack.c.h.b16 %v3967
    %v4102 = vunpack.c.l.b16 %v3968
    %v4103 = vunpack.c.h.b16 %v3968
    %v4104 = vunpack.c.l.b16 %v3969
    %v4105 = vunpack.c.h.b16 %v3969
    %v4106 = vunpack.c.l.b16 %v3970
    %v4107 = vunpack.c.h.b16 %v3970
    %v4108 = vunpack.c.l.b16 %v3971
    %v4109 = vunpack.c.h.b16 %v3971
    %v4110 = vunpack.c.l.b16 %v3972
    %v4111 = vunpack.c.h.b16 %v3972
    %v4112 = vunpack.c.l.b16 %v3973
    %v4113 = vunpack.c.h.b16 %v3973
    %v4114 = vunpack.c.l.b16 %v3974
    %v4115 = vunpack.c.h.b16 %v3974
    %v4116 = vunpack.c.l.b16 %v3975
    %v4117 = vunpack.c.h.b16 %v3975
    %v4118 = vunpack.c.l.b16 %v3976
    %v4119 = vunpack.c.h.b16 %v3976
    %v4120 = vunpack.c.l.b16 %v3977
    %v4121 = vunpack.c.h.b16 %v3977
    %v4122 = vunpack.c.l.b16 %v3978
    %v4123 = vunpack.c.h.b16 %v3978
    %v4124 = vunpack.c.l.b16 %v3979
    %v4125 = vunpack.c.h.b16 %v3979
    %v4126 = vunpack.c.l.b16 %v3980
    %v4127 = vunpack.c.h.b16 %v3980
    %v4128 = vunpack.c.l.b16 %v3981
    %v4129 = vunpack.c.h.b16 %v3981
    %v4130 = vunpack.c.l.b16 %v3982
    %v4131 = vunpack.c.h.b16 %v3982
    %v4132 = vunpack.c.l.b16 %v3983
    %v4133 = vunpack.c.h.b16 %v3983
    %v4134 = vunpack.c.l.b16 %v3984
    %v4135 = vunpack.c.h.b16 %v3984
    %v4136 = vunpack.c.l.b16 %v3985
    %v4137 = vunpack.c.h.b16 %v3985
    %v4138 = vunpack.c.l.b16 %v3986
    %v4139 = vunpack.c.h.b16 %v3986
    %v4140 = vunpack.c.l.b16 %v3987
    %v4141 = vunpack.c.h.b16 %v3987
    %v4142 = vunpack.c.l.b16 %v3988
    %v4143 = vunpack.c.h.b16 %v3988
    %v4144 = vunpack.c.l.b16 %v3989
    %v4145 = vunpack.c.h.b16 %v3989
    %v4146 = vunpack.c.l.b16 %v3990
    %v4147 = vunpack.c.h.b16 %v3990
    %v4148 = vunpack.c.l.b16 %v3991
    %v4149 = vunpack.c.h.b16 %v3991
    %v4150 = vunpack.c.l.b16 %v3992
    %v4151 = vunpack.c.h.b16 %v3992
    %v4152 = vunpack.c.l.b16 %v3993
    %v4153 = vunpack.c.h.b16 %v3993
    %v4154 = vunpack.c.l.b16 %v3994
    %v4155 = vunpack.c.h.b16 %v3994
    %v4156 = vunpack.c.l.b16 %v3995
    %v4157 = vunpack.c.h.b16 %v3995
    %v4158 = vunpack.c.l.b16 %v3996
    %v4159 = vunpack.c.h.b16 %v3996
    %v4160 = vunpack.c.l.b16 %v3997
    %v4161 = vunpack.c.h.b16 %v3997
    %v4162 = vunpack.c.l.b16 %v3998
    %v4163 = vunpack.c.h.b16 %v3998
    %v4164 = vunpack.c.l.b16 %v3999
    %v4165 = vunpack.c.h.b16 %v3999
    %v4166 = vunpack.c.l.b16 %v4000
    %v4167 = vunpack.c.h.b16 %v4000
    %v4168 = vunpack.c.l.b16 %v4001
    %v4169 = vunpack.c.h.b16 %v4001
    %v4170 = vunpack.c.l.b16 %v4002
    %v4171 = vunpack.c.h.b16 %v4002
    %v4172 = vunpack.c.l.b16 %v4003
    %v4173 = vunpack.c.h.b16 %v4003
    %v4174 = vunpack.c.l.b16 %v4004
    %v4175 = vunpack.c.h.b16 %v4004
    %v4176 = vunpack.c.l.b16 %v4005
    %v4177 = vunpack.c.h.b16 %v4005
    %v4178 = vunpack.c.l.b16 %v4006
    %v4179 = vunpack.c.h.b16 %v4006
    %v4180 = vunpack.c.l.b16 %v4007
    %v4181 = vunpack.c.h.b16 %v4007
    %v4182 = vunpack.c.l.b16 %v4008
    %v4183 = vunpack.c.h.b16 %v4008
    %v4184 = vunpack.c.l.b16 %v4009
    %v4185 = vunpack.c.h.b16 %v4009
    %v4186 = vunpack.c.l.b16 %v4010
    %v4187 = vunpack.c.h.b16 %v4010
    %v4188 = vunpack.c.l.b16 %v4011
    %v4189 = vunpack.c.h.b16 %v4011
    %v4190 = vunpack.c.l.b16 %v4012
    %v4191 = vunpack.c.h.b16 %v4012
    %v4192 = vunpack.c.l.b16 %v4013
    %v4193 = vunpack.c.h.b16 %v4013
    %v4194 = vunpack.c.l.b16 %v4014
    %v4195 = vunpack.c.h.b16 %v4014
    %v4196 = vunpack.c.l.b16 %v4015
    %v4197 = vunpack.c.h.b16 %v4015
    %v4198 = vunpack.c.l.b16 %v4016
    %v4199 = vunpack.c.h.b16 %v4016
    %v4200 = vunpack.c.l.b16 %v4017
    %v4201 = vunpack.c.h.b16 %v4017
    %v4202 = vunpack.c.l.b16 %v4018
    %v4203 = vunpack.c.h.b16 %v4018
    %v4204 = vunpack.c.l.b16 %v4019
    %v4205 = vunpack.c.h.b16 %v4019
    %v4206 = vunpack.c.l.b16 %v4020
    %v4207 = vunpack.c.h.b16 %v4020
    %v4208 = vunpack.c.l.b16 %v4021
    %v4209 = vunpack.c.h.b16 %v4021
    %v4210 = vunpack.c.l.b16 %v4022
    %v4211 = vunpack.c.h.b16 %v4022
    %v4212 = vunpack.c.l.b16 %v4023
    %v4213 = vunpack.c.h.b16 %v4023
    %v4214 = vunpack.c.l.b16 %v4024
    %v4215 = vunpack.c.h.b16 %v4024
    %v4216 = vunpack.c.l.b16 %v4025
    %v4217 = vunpack.c.h.b16 %v4025
    %v4218 = vpack.c.b16 %v4092, %v4090
    %v4219 = vpack.c.b16 %v4093, %v4091
    %v4220 = vpack.c.b16 %v4096, %v4094
    %v4221 = vpack.c.b16 %v4097, %v4095
    %v4222 = vpack.c.b16 %v4100, %v4098
    %v4223 = vpack.c.b16 %v4101, %v4099
    %v4224 = vpack.c.b16 %v4104, %v4102
    %v4225 = vpack.c.b16 %v4105, %v4103
    %v4226 = vpack.c.b16 %v4108, %v4106
    %v4227 = vpack.c.b16 %v4109, %v4107
    %v4228 = vpack.c.b16 %v4112, %v4110
    %v4229 = vpack.c.b16 %v4113, %v4111
    %v4230 = vpack.c.b16 %v4116, %v4114
    %v4231 = vpack.c.b16 %v4117, %v4115
    %v4232 = vpack.c.b16 %v4120, %v4118
    %v4233 = vpack.c.b16 %v4121, %v4119
    %v4234 = vpack.c.b16 %v4124, %v4122
    %v4235 = vpack.c.b16 %v4125, %v4123
    %v4236 = vpack.c.b16 %v4128, %v4126
    %v4237 = vpack.c.b16 %v4129, %v4127
    %v4238 = vpack.c.b16 %v4132, %v4130
    %v4239 = vpack.c.b16 %v4133, %v4131
    %v4240 = vpack.c.b16 %v4136, %v4134
    %v4241 = vpack.c.b16 %v4137, %v4135
    %v4242 = vpack.c.b16 %v4140, %v4138
    %v4243 = vpack.c.b16 %v4141, %v4139
    %v4244 = vpack.c.b16 %v4144, %v4142
    %v4245 = vpack.c.b16 %v4145, %v4143
    %v4246 = vpack.c.b16 %v4148, %v4146
    %v4247 = vpack.c.b16 %v4149, %v4147
    %v4248 = vpack.c.b16 %v4152, %v4150
    %v4249 = vpack.c.b16 %v4153, %v4151
    %v4250 = vpack.c.b16 %v4156, %v4154
    %v4251 = vpack.c.b16 %v4157, %v4155
    %v4252 = vpack.c.b16 %v4160, %v4158
    %v4253 = vpack.c.b16 %v4161, %v4159
    %v4254 = vpack.c.b16 %v4164, %v4162
    %v4255 = vpack.c.b16 %v4165, %v4163
    %v4256 = vpack.c.b16 %v4168, %v4166
    %v4257 = vpack.c.b16 %v4169, %v4167
    %v4258 = vpack.c.b16 %v4172, %v4170
    %v4259 = vpack.c.b16 %v4173, %v4171
    %v4260 = vpack.c.b16 %v4176, %v4174
    %v4261 = vpack.c.b16 %v4177, %v4175
    %v4262 = vpack.c.b16 %v4180, %v4178
    %v4263 = vpack.c.b16 %v4181, %v4179
    %v4264 = vpack.c.b16 %v4184, %v4182
    %v4265 = vpack.c.b16 %v4185, %v4183
    %v4266 = vpack.c.b16 %v4188, %v4186
    %v4267 = vpack.c.b16 %v4189, %v4187
    %v4268 = vpack.c.b16 %v4192, %v4190
    %v4269 = vpack.c.b16 %v4193, %v4191
    %v4270 = vpack.c.b16 %v4196, %v4194
    %v4271 = vpack.c.b16 %v4197, %v4195
    %v4272 = vpack.c.b16 %v4200, %v4198
    %v4273 = vpack.c.b16 %v4201, %v4199
    %v4274 = vpack.c.b16 %v4204, %v4202
    %v4275 = vpack.c.b16 %v4205, %v4203
    %v4276 = vpack.c.b16 %v4208, %v4206
    %v4277 = vpack.c.b16 %v4209, %v4207
    %v4278 = vpack.c.b16 %v4212, %v4210
    %v4279 = vpack.c.b16 %v4213, %v4211
    %v4280 = vpack.c.b16 %v4216, %v4214
    %v4281 = vpack.c.b16 %v4217, %v4215
    %4346 = vmatprep.subr.bf16.mxu0 %v4219
    %4347 = vmatpush1.bf16.msra.mxu0 %v4218
    %4348 = vmatprep.subr.bf16.mxu0 %v4221
    %4349 = vmatpush1.bf16.msra.mxu0 %v4220
    %4350 = vmatprep.subr.bf16.mxu0 %v4223
    %4351 = vmatpush1.bf16.msra.mxu0 %v4222
    %4352 = vmatprep.subr.bf16.mxu0 %v4225
    %4353 = vmatpush1.bf16.msra.mxu0 %v4224
    %4354 = vmatprep.subr.bf16.mxu0 %v4227
    %4355 = vmatpush1.bf16.msra.mxu0 %v4226
    %4356 = vmatprep.subr.bf16.mxu0 %v4229
    %4357 = vmatpush1.bf16.msra.mxu0 %v4228
    %4358 = vmatprep.subr.bf16.mxu0 %v4231
    %4359 = vmatpush1.bf16.msra.mxu0 %v4230
    %4360 = vmatprep.subr.bf16.mxu0 %v4233
    %4361 = vmatpush1.bf16.msra.mxu0 %v4232
    %4362 = vmatprep.subr.bf16.mxu0 %v4235
    %4363 = vmatpush1.bf16.msra.mxu0 %v4234
    %4364 = vmatprep.subr.bf16.mxu0 %v4237
    %4365 = vmatpush1.bf16.msra.mxu0 %v4236
    %4366 = vmatprep.subr.bf16.mxu0 %v4239
    %4367 = vmatpush1.bf16.msra.mxu0 %v4238
    %4368 = vmatprep.subr.bf16.mxu0 %v4241
    %4369 = vmatpush1.bf16.msra.mxu0 %v4240
    %4370 = vmatprep.subr.bf16.mxu0 %v4243
    %4371 = vmatpush1.bf16.msra.mxu0 %v4242
    %4372 = vmatprep.subr.bf16.mxu0 %v4245
    %4373 = vmatpush1.bf16.msra.mxu0 %v4244
    %4374 = vmatprep.subr.bf16.mxu0 %v4247
    %4375 = vmatpush1.bf16.msra.mxu0 %v4246
    %4376 = vmatprep.subr.bf16.mxu0 %v4249
    %4377 = vmatpush1.bf16.msra.mxu0 %v4248
    %4378 = vmatprep.mubr.bf16.mxu0 %v3955
    %4379 = vmatmul.mubr.bf16.gmra.mrb[0].mxu0 %v3954
    %v4380 = vpop.f32.mrb[0].mxu0
    %v4381 = vadd.f32 0.0, %v4380
    %v4382 = vpop.f32.mrb[0].mxu0
    %v4383 = vadd.f32 0.0, %v4382
    %v4384 = vpop.f32.mrb[0].mxu0
    %v4385 = vadd.f32 0.0, %v4384
    %v4386 = vpop.f32.mrb[0].mxu0
    %v4387 = vadd.f32 0.0, %v4386
    %4388 = vmatprep.mubr.bf16.mxu0 %v3959
    %4389 = vmatmul.mubr.bf16.gmra.mrb[0].mxu0 %v3958
    %v4390 = vpop.f32.mrb[0].mxu0
    %v4391 = vadd.f32 0.0, %v4390
    %v4392 = vpop.f32.mrb[0].mxu0
    %v4393 = vadd.f32 0.0, %v4392
    %v4394 = vpop.f32.mrb[0].mxu0
    %v4395 = vadd.f32 0.0, %v4394
    %v4396 = vpop.f32.mrb[0].mxu0
    %v4397 = vadd.f32 0.0, %v4396
    %4398 = vdwg.mxu0
    %4399 = vmatprep.subr.bf16.mxu0 %v4251
    %4400 = vmatpush1.bf16.msra.mxu0 %v4250
    %4401 = vmatprep.subr.bf16.mxu0 %v4253
    %4402 = vmatpush1.bf16.msra.mxu0 %v4252
    %4403 = vmatprep.subr.bf16.mxu0 %v4255
    %4404 = vmatpush1.bf16.msra.mxu0 %v4254
    %4405 = vmatprep.subr.bf16.mxu0 %v4257
    %4406 = vmatpush1.bf16.msra.mxu0 %v4256
    %4407 = vmatprep.subr.bf16.mxu0 %v4259
    %4408 = vmatpush1.bf16.msra.mxu0 %v4258
    %4409 = vmatprep.subr.bf16.mxu0 %v4261
    %4410 = vmatpush1.bf16.msra.mxu0 %v4260
    %4411 = vmatprep.subr.bf16.mxu0 %v4263
    %4412 = vmatpush1.bf16.msra.mxu0 %v4262
    %4413 = vmatprep.subr.bf16.mxu0 %v4265
    %4414 = vmatpush1.bf16.msra.mxu0 %v4264
    %4415 = vmatprep.subr.bf16.mxu0 %v4267
    %4416 = vmatpush1.bf16.msra.mxu0 %v4266
    %4417 = vmatprep.subr.bf16.mxu0 %v4269
    %4418 = vmatpush1.bf16.msra.mxu0 %v4268
    %4419 = vmatprep.subr.bf16.mxu0 %v4271
    %4420 = vmatpush1.bf16.msra.mxu0 %v4270
    %4421 = vmatprep.subr.bf16.mxu0 %v4273
    %4422 = vmatpush1.bf16.msra.mxu0 %v4272
    %4423 = vmatprep.subr.bf16.mxu0 %v4275
    %4424 = vmatpush1.bf16.msra.mxu0 %v4274
    %4425 = vmatprep.subr.bf16.mxu0 %v4277
    %4426 = vmatpush1.bf16.msra.mxu0 %v4276
    %4427 = vmatprep.subr.bf16.mxu0 %v4279
    %4428 = vmatpush1.bf16.msra.mxu0 %v4278
    %4429 = vmatprep.subr.bf16.mxu0 %v4281
    %4430 = vmatpush1.bf16.msra.mxu0 %v4280
    %4431 = vmatprep.mubr.bf16.mxu0 %v3957
    %4432 = vmatmul.mubr.bf16.gmra.mrb[0].mxu0 %v3956
    %v4433 = vpop.f32.mrb[0].mxu0
    %v4434 = vadd.f32 %v4381, %v4433
    %v4435 = vpop.f32.mrb[0].mxu0
    %v4436 = vadd.f32 %v4383, %v4435
    %v4437 = vpop.f32.mrb[0].mxu0
    %v4438 = vadd.f32 %v4385, %v4437
    %v4439 = vpop.f32.mrb[0].mxu0
    %v4440 = vadd.f32 %v4387, %v4439
    %4441 = vmatprep.mubr.bf16.mxu0 %v3961
    %4442 = vmatmul.mubr.bf16.gmra.mrb[0].mxu0 %v3960
    %v4443 = vpop.f32.mrb[0].mxu0
    %v4444 = vadd.f32 %v4391, %v4443
    %v4445 = vpop.f32.mrb[0].mxu0
    %v4446 = vadd.f32 %v4393, %v4445
    %v4447 = vpop.f32.mrb[0].mxu0
    %v4448 = vadd.f32 %v4395, %v4447
    %v4449 = vpop.f32.mrb[0].mxu0
    %v4450 = vadd.f32 %v4397, %v4449
    %4451 = vdwg.mxu0
    %v4516 = vunpack.c.l.b16 %v3250
    %v4517 = vunpack.c.h.b16 %v3250
    %v4518 = vunpack.c.l.b16 %v3251
    %v4519 = vunpack.c.h.b16 %v3251
    %v4520 = vunpack.c.l.b16 %v3252
    %v4521 = vunpack.c.h.b16 %v3252
    %v4522 = vunpack.c.l.b16 %v3253
    %v4523 = vunpack.c.h.b16 %v3253
    %v4524 = vunpack.c.l.b16 %v3254
    %v4525 = vunpack.c.h.b16 %v3254
    %v4526 = vunpack.c.l.b16 %v3255
    %v4527 = vunpack.c.h.b16 %v3255
    %v4528 = vunpack.c.l.b16 %v3256
    %v4529 = vunpack.c.h.b16 %v3256
    %v4530 = vunpack.c.l.b16 %v3257
    %v4531 = vunpack.c.h.b16 %v3257
    %v4532 = vunpack.c.l.b16 %v3258
    %v4533 = vunpack.c.h.b16 %v3258
    %v4534 = vunpack.c.l.b16 %v3259
    %v4535 = vunpack.c.h.b16 %v3259
    %v4536 = vunpack.c.l.b16 %v3260
    %v4537 = vunpack.c.h.b16 %v3260
    %v4538 = vunpack.c.l.b16 %v3261
    %v4539 = vunpack.c.h.b16 %v3261
    %v4540 = vunpack.c.l.b16 %v3262
    %v4541 = vunpack.c.h.b16 %v3262
    %v4542 = vunpack.c.l.b16 %v3263
    %v4543 = vunpack.c.h.b16 %v3263
    %v4544 = vunpack.c.l.b16 %v3264
    %v4545 = vunpack.c.h.b16 %v3264
    %v4546 = vunpack.c.l.b16 %v3265
    %v4547 = vunpack.c.h.b16 %v3265
    %v4548 = vunpack.c.l.b16 %v3266
    %v4549 = vunpack.c.h.b16 %v3266
    %v4550 = vunpack.c.l.b16 %v3267
    %v4551 = vunpack.c.h.b16 %v3267
    %v4552 = vunpack.c.l.b16 %v3268
    %v4553 = vunpack.c.h.b16 %v3268
    %v4554 = vunpack.c.l.b16 %v3269
    %v4555 = vunpack.c.h.b16 %v3269
    %v4556 = vunpack.c.l.b16 %v3270
    %v4557 = vunpack.c.h.b16 %v3270
    %v4558 = vunpack.c.l.b16 %v3271
    %v4559 = vunpack.c.h.b16 %v3271
    %v4560 = vunpack.c.l.b16 %v3272
    %v4561 = vunpack.c.h.b16 %v3272
    %v4562 = vunpack.c.l.b16 %v3273
    %v4563 = vunpack.c.h.b16 %v3273
    %v4564 = vunpack.c.l.b16 %v3274
    %v4565 = vunpack.c.h.b16 %v3274
    %v4566 = vunpack.c.l.b16 %v3275
    %v4567 = vunpack.c.h.b16 %v3275
    %v4568 = vunpack.c.l.b16 %v3276
    %v4569 = vunpack.c.h.b16 %v3276
    %v4570 = vunpack.c.l.b16 %v3277
    %v4571 = vunpack.c.h.b16 %v3277
    %v4572 = vunpack.c.l.b16 %v3278
    %v4573 = vunpack.c.h.b16 %v3278
    %v4574 = vunpack.c.l.b16 %v3279
    %v4575 = vunpack.c.h.b16 %v3279
    %v4576 = vunpack.c.l.b16 %v3280
    %v4577 = vunpack.c.h.b16 %v3280
    %v4578 = vunpack.c.l.b16 %v3281
    %v4579 = vunpack.c.h.b16 %v3281
    %v4580 = vunpack.c.l.b16 %v3282
    %v4581 = vunpack.c.h.b16 %v3282
    %v4582 = vunpack.c.l.b16 %v3283
    %v4583 = vunpack.c.h.b16 %v3283
    %v4584 = vunpack.c.l.b16 %v3284
    %v4585 = vunpack.c.h.b16 %v3284
    %v4586 = vunpack.c.l.b16 %v3285
    %v4587 = vunpack.c.h.b16 %v3285
    %v4588 = vunpack.c.l.b16 %v3286
    %v4589 = vunpack.c.h.b16 %v3286
    %v4590 = vunpack.c.l.b16 %v3287
    %v4591 = vunpack.c.h.b16 %v3287
    %v4592 = vunpack.c.l.b16 %v3288
    %v4593 = vunpack.c.h.b16 %v3288
    %v4594 = vunpack.c.l.b16 %v3289
    %v4595 = vunpack.c.h.b16 %v3289
    %v4596 = vunpack.c.l.b16 %v3290
    %v4597 = vunpack.c.h.b16 %v3290
    %v4598 = vunpack.c.l.b16 %v3291
    %v4599 = vunpack.c.h.b16 %v3291
    %v4600 = vunpack.c.l.b16 %v3292
    %v4601 = vunpack.c.h.b16 %v3292
    %v4602 = vunpack.c.l.b16 %v3293
    %v4603 = vunpack.c.h.b16 %v3293
    %v4604 = vunpack.c.l.b16 %v3294
    %v4605 = vunpack.c.h.b16 %v3294
    %v4606 = vunpack.c.l.b16 %v3295
    %v4607 = vunpack.c.h.b16 %v3295
    %v4608 = vunpack.c.l.b16 %v3296
    %v4609 = vunpack.c.h.b16 %v3296
    %v4610 = vunpack.c.l.b16 %v3297
    %v4611 = vunpack.c.h.b16 %v3297
    %v4612 = vunpack.c.l.b16 %v3298
    %v4613 = vunpack.c.h.b16 %v3298
    %v4614 = vunpack.c.l.b16 %v3299
    %v4615 = vunpack.c.h.b16 %v3299
    %v4616 = vunpack.c.l.b16 %v3300
    %v4617 = vunpack.c.h.b16 %v3300
    %v4618 = vunpack.c.l.b16 %v3301
    %v4619 = vunpack.c.h.b16 %v3301
    %v4620 = vunpack.c.l.b16 %v3302
    %v4621 = vunpack.c.h.b16 %v3302
    %v4622 = vunpack.c.l.b16 %v3303
    %v4623 = vunpack.c.h.b16 %v3303
    %v4624 = vunpack.c.l.b16 %v3304
    %v4625 = vunpack.c.h.b16 %v3304
    %v4626 = vunpack.c.l.b16 %v3305
    %v4627 = vunpack.c.h.b16 %v3305
    %v4628 = vunpack.c.l.b16 %v3306
    %v4629 = vunpack.c.h.b16 %v3306
    %v4630 = vunpack.c.l.b16 %v3307
    %v4631 = vunpack.c.h.b16 %v3307
    %v4632 = vunpack.c.l.b16 %v3308
    %v4633 = vunpack.c.h.b16 %v3308
    %v4634 = vunpack.c.l.b16 %v3309
    %v4635 = vunpack.c.h.b16 %v3309
    %v4636 = vunpack.c.l.b16 %v3310
    %v4637 = vunpack.c.h.b16 %v3310
    %v4638 = vunpack.c.l.b16 %v3311
    %v4639 = vunpack.c.h.b16 %v3311
    %v4640 = vunpack.c.l.b16 %v3312
    %v4641 = vunpack.c.h.b16 %v3312
    %v4642 = vunpack.c.l.b16 %v3313
    %v4643 = vunpack.c.h.b16 %v3313
    %v4644 = vpack.c.b16 %v4518, %v4516
    %v4645 = vpack.c.b16 %v4519, %v4517
    %v4646 = vpack.c.b16 %v4522, %v4520
    %v4647 = vpack.c.b16 %v4523, %v4521
    %v4648 = vpack.c.b16 %v4526, %v4524
    %v4649 = vpack.c.b16 %v4527, %v4525
    %v4650 = vpack.c.b16 %v4530, %v4528
    %v4651 = vpack.c.b16 %v4531, %v4529
    %v4652 = vpack.c.b16 %v4534, %v4532
    %v4653 = vpack.c.b16 %v4535, %v4533
    %v4654 = vpack.c.b16 %v4538, %v4536
    %v4655 = vpack.c.b16 %v4539, %v4537
    %v4656 = vpack.c.b16 %v4542, %v4540
    %v4657 = vpack.c.b16 %v4543, %v4541
    %v4658 = vpack.c.b16 %v4546, %v4544
    %v4659 = vpack.c.b16 %v4547, %v4545
    %v4660 = vpack.c.b16 %v4550, %v4548
    %v4661 = vpack.c.b16 %v4551, %v4549
    %v4662 = vpack.c.b16 %v4554, %v4552
    %v4663 = vpack.c.b16 %v4555, %v4553
    %v4664 = vpack.c.b16 %v4558, %v4556
    %v4665 = vpack.c.b16 %v4559, %v4557
    %v4666 = vpack.c.b16 %v4562, %v4560
    %v4667 = vpack.c.b16 %v4563, %v4561
    %v4668 = vpack.c.b16 %v4566, %v4564
    %v4669 = vpack.c.b16 %v4567, %v4565
    %v4670 = vpack.c.b16 %v4570, %v4568
    %v4671 = vpack.c.b16 %v4571, %v4569
    %v4672 = vpack.c.b16 %v4574, %v4572
    %v4673 = vpack.c.b16 %v4575, %v4573
    %v4674 = vpack.c.b16 %v4578, %v4576
    %v4675 = vpack.c.b16 %v4579, %v4577
    %v4676 = vpack.c.b16 %v4582, %v4580
    %v4677 = vpack.c.b16 %v4583, %v4581
    %v4678 = vpack.c.b16 %v4586, %v4584
    %v4679 = vpack.c.b16 %v4587, %v4585
    %v4680 = vpack.c.b16 %v4590, %v4588
    %v4681 = vpack.c.b16 %v4591, %v4589
    %v4682 = vpack.c.b16 %v4594, %v4592
    %v4683 = vpack.c.b16 %v4595, %v4593
    %v4684 = vpack.c.b16 %v4598, %v4596
    %v4685 = vpack.c.b16 %v4599, %v4597
    %v4686 = vpack.c.b16 %v4602, %v4600
    %v4687 = vpack.c.b16 %v4603, %v4601
    %v4688 = vpack.c.b16 %v4606, %v4604
    %v4689 = vpack.c.b16 %v4607, %v4605
    %v4690 = vpack.c.b16 %v4610, %v4608
    %v4691 = vpack.c.b16 %v4611, %v4609
    %v4692 = vpack.c.b16 %v4614, %v4612
    %v4693 = vpack.c.b16 %v4615, %v4613
    %v4694 = vpack.c.b16 %v4618, %v4616
    %v4695 = vpack.c.b16 %v4619, %v4617
    %v4696 = vpack.c.b16 %v4622, %v4620
    %v4697 = vpack.c.b16 %v4623, %v4621
    %v4698 = vpack.c.b16 %v4626, %v4624
    %v4699 = vpack.c.b16 %v4627, %v4625
    %v4700 = vpack.c.b16 %v4630, %v4628
    %v4701 = vpack.c.b16 %v4631, %v4629
    %v4702 = vpack.c.b16 %v4634, %v4632
    %v4703 = vpack.c.b16 %v4635, %v4633
    %v4704 = vpack.c.b16 %v4638, %v4636
    %v4705 = vpack.c.b16 %v4639, %v4637
    %v4706 = vpack.c.b16 %v4642, %v4640
    %v4707 = vpack.c.b16 %v4643, %v4641
    %4772 = vmatprep.subr.bf16.mxu0 %v4645
    %4773 = vmatpush1.bf16.msra.mxu0 %v4644
    %4774 = vmatprep.subr.bf16.mxu0 %v4647
    %4775 = vmatpush1.bf16.msra.mxu0 %v4646
    %4776 = vmatprep.subr.bf16.mxu0 %v4649
    %4777 = vmatpush1.bf16.msra.mxu0 %v4648
    %4778 = vmatprep.subr.bf16.mxu0 %v4651
    %4779 = vmatpush1.bf16.msra.mxu0 %v4650
    %4780 = vmatprep.subr.bf16.mxu0 %v4653
    %4781 = vmatpush1.bf16.msra.mxu0 %v4652
    %4782 = vmatprep.subr.bf16.mxu0 %v4655
    %4783 = vmatpush1.bf16.msra.mxu0 %v4654
    %4784 = vmatprep.subr.bf16.mxu0 %v4657
    %4785 = vmatpush1.bf16.msra.mxu0 %v4656
    %4786 = vmatprep.subr.bf16.mxu0 %v4659
    %4787 = vmatpush1.bf16.msra.mxu0 %v4658
    %4788 = vmatprep.subr.bf16.mxu0 %v4661
    %4789 = vmatpush1.bf16.msra.mxu0 %v4660
    %4790 = vmatprep.subr.bf16.mxu0 %v4663
    %4791 = vmatpush1.bf16.msra.mxu0 %v4662
    %4792 = vmatprep.subr.bf16.mxu0 %v4665
    %4793 = vmatpush1.bf16.msra.mxu0 %v4664
    %4794 = vmatprep.subr.bf16.mxu0 %v4667
    %4795 = vmatpush1.bf16.msra.mxu0 %v4666
    %4796 = vmatprep.subr.bf16.mxu0 %v4669
    %4797 = vmatpush1.bf16.msra.mxu0 %v4668
    %4798 = vmatprep.subr.bf16.mxu0 %v4671
    %4799 = vmatpush1.bf16.msra.mxu0 %v4670
    %4800 = vmatprep.subr.bf16.mxu0 %v4673
    %4801 = vmatpush1.bf16.msra.mxu0 %v4672
    %4802 = vmatprep.subr.bf16.mxu0 %v4675
    %4803 = vmatpush1.bf16.msra.mxu0 %v4674
    %4804 = vmatprep.mubr.bf16.mxu0 %v3243
    %4805 = vmatmul.mubr.bf16.gmra.mrb[0].mxu0 %v3242
    %v4806 = vpop.f32.mrb[0].mxu0
    %v4807 = vadd.f32 %v4434, %v4806
    %v4808 = vpop.f32.mrb[0].mxu0
    %v4809 = vadd.f32 %v4436, %v4808
    %v4810 = vpop.f32.mrb[0].mxu0
    %v4811 = vadd.f32 %v4438, %v4810
    %v4812 = vpop.f32.mrb[0].mxu0
    %v4813 = vadd.f32 %v4440, %v4812
    %4814 = vmatprep.mubr.bf16.mxu0 %v3247
    %4815 = vmatmul.mubr.bf16.gmra.mrb[0].mxu0 %v3246
    %v4816 = vpop.f32.mrb[0].mxu0
    %v4817 = vadd.f32 %v4444, %v4816
    %v4818 = vpop.f32.mrb[0].mxu0
    %v4819 = vadd.f32 %v4446, %v4818
    %v4820 = vpop.f32.mrb[0].mxu0
    %v4821 = vadd.f32 %v4448, %v4820
    %v4822 = vpop.f32.mrb[0].mxu0
    %v4823 = vadd.f32 %v4450, %v4822
    %4824 = vdwg.mxu0
    %4825 = vmatprep.subr.bf16.mxu0 %v4677
    %4826 = vmatpush1.bf16.msra.mxu0 %v4676
    %4827 = vmatprep.subr.bf16.mxu0 %v4679
    %4828 = vmatpush1.bf16.msra.mxu0 %v4678
    %4829 = vmatprep.subr.bf16.mxu0 %v4681
    %4830 = vmatpush1.bf16.msra.mxu0 %v4680
    %4831 = vmatprep.subr.bf16.mxu0 %v4683
    %4832 = vmatpush1.bf16.msra.mxu0 %v4682
    %4833 = vmatprep.subr.bf16.mxu0 %v4685
    %4834 = vmatpush1.bf16.msra.mxu0 %v4684
    %4835 = vmatprep.subr.bf16.mxu0 %v4687
    %4836 = vmatpush1.bf16.msra.mxu0 %v4686
    %4837 = vmatprep.subr.bf16.mxu0 %v4689
    %4838 = vmatpush1.bf16.msra.mxu0 %v4688
    %4839 = vmatprep.subr.bf16.mxu0 %v4691
    %4840 = vmatpush1.bf16.msra.mxu0 %v4690
    %4841 = vmatprep.subr.bf16.mxu0 %v4693
    %4842 = vmatpush1.bf16.msra.mxu0 %v4692
    %4843 = vmatprep.subr.bf16.mxu0 %v4695
    %4844 = vmatpush1.bf16.msra.mxu0 %v4694
    %4845 = vmatprep.subr.bf16.mxu0 %v4697
    %4846 = vmatpush1.bf16.msra.mxu0 %v4696
    %4847 = vmatprep.subr.bf16.mxu0 %v4699
    %4848 = vmatpush1.bf16.msra.mxu0 %v4698
    %4849 = vmatprep.subr.bf16.mxu0 %v4701
    %4850 = vmatpush1.bf16.msra.mxu0 %v4700
    %4851 = vmatprep.subr.bf16.mxu0 %v4703
    %4852 = vmatpush1.bf16.msra.mxu0 %v4702
    %4853 = vmatprep.subr.bf16.mxu0 %v4705
    %4854 = vmatpush1.bf16.msra.mxu0 %v4704
    %4855 = vmatprep.subr.bf16.mxu0 %v4707
    %4856 = vmatpush1.bf16.msra.mxu0 %v4706
    %4857 = vmatprep.mubr.bf16.mxu0 %v3245
    %4858 = vmatmul.mubr.bf16.gmra.mrb[0].mxu0 %v3244
    %v4859 = vpop.f32.mrb[0].mxu0
    %v4860 = vadd.f32 %v4807, %v4859
    %v4861 = vpop.f32.mrb[0].mxu0
    %v4862 = vadd.f32 %v4809, %v4861
    %v4863 = vpop.f32.mrb[0].mxu0
    %v4864 = vadd.f32 %v4811, %v4863
    %v4865 = vpop.f32.mrb[0].mxu0
    %v4866 = vadd.f32 %v4813, %v4865
    %4867 = vmatprep.mubr.bf16.mxu0 %v3249
    %4868 = vmatmul.mubr.bf16.gmra.mrb[0].mxu0 %v3248
    %v4869 = vpop.f32.mrb[0].mxu0
    %v4870 = vadd.f32 %v4817, %v4869
    %v4871 = vpop.f32.mrb[0].mxu0
    %v4872 = vadd.f32 %v4819, %v4871
    %v4873 = vpop.f32.mrb[0].mxu0
    %v4874 = vadd.f32 %v4821, %v4873
    %v4875 = vpop.f32.mrb[0].mxu0
    %v4876 = vadd.f32 %v4823, %v4875
    %4877 = vdwg.mxu0
    %v4878 = vadd.f32 %v2486, %v4860
    %v4879 = vadd.f32 %v2487, %v4862
    %v4880 = vadd.f32 %v2488, %v4864
    %v4881 = vadd.f32 %v2489, %v4866
    %v4882 = vadd.f32 %v2490, %v4870
    %v4883 = vadd.f32 %v2491, %v4872
    %v4884 = vadd.f32 %v2492, %v4874
    %v4885 = vadd.f32 %v2493, %v4876
    %v4887 = vlaneseq
    %v4888 = vshrl.u32 %v4887, 7
    %v4889 = vsub.s32 0, %v4888
    %v4890 = vrot.slane %v170, %v4889
    %v4891 = vlaneseq
    %v4892 = vshrl.u32 %v4891, 7
    %v4893 = vsub.s32 1, %v4892
    %v4894 = vrot.slane %v170, %v4893
    %v4897 = vadd.f32 %v4878, %v4890
    %v4898 = vadd.f32 %v4879, %v4894
    %v4899 = vadd.f32 %v4880, %v4890
    %v4900 = vadd.f32 %v4881, %v4894
    %v4901 = vadd.f32 %v4882, %v4890
    %v4902 = vadd.f32 %v4883, %v4894
    %v4903 = vadd.f32 %v4884, %v4890
    %v4904 = vadd.f32 %v4885, %v4894
    %4905 = vst [vmem:[#allocation17] sm:$0xff] %v4897
    %4906 = vst [vmem:[#allocation17 + $0x8] sm:$0xff] %v4898
    %4907 = vst [vmem:[#allocation17 + $0x10] sm:$0xff] %v4899
    %4908 = vst [vmem:[#allocation17 + $0x18] sm:$0xff] %v4900
    %4909 = vst [vmem:[#allocation17 + $0x20] sm:$0xff] %v4901
    %4910 = vst [vmem:[#allocation17 + $0x28] sm:$0xff] %v4902
    %4911 = vst [vmem:[#allocation17 + $0x30] sm:$0xff] %v4903
    %4912 = vst [vmem:[#allocation17 + $0x38] sm:$0xff] %v4904
    // Predicated region
    $region90: #{tpu_custom_call.1} parent=1 // pred_check
      _
    $region91: #{tpu_custom_call.1} parent=1 // pred_check_branch
      %4914 = sbr.rel (0) target = $region93
    $region92: #{tpu_custom_call.1} parent=1 // pred_region
      %s4916 = ssub.s32 1024, 1024
      %4917 = vsyncadd [#allocation4], %s4916
      %s4918 = sshll.u32 [#allocation17], 4
      %s4919 = int_to_ptr.vmem [resolvable:$true] %s4918
      %4924 = dma.vmem_to_hbm [thread:$0]  %s4919, 1024, %s13, [#allocation4], 256, 256, 16
    $region93: #{tpu_custom_call.1} parent=1 // pred_fallthru
      _
    // Predicated region
    $region94: #{tpu_custom_call.1} parent=1 // pred_check
      _
    $region95: #{tpu_custom_call.1} parent=1 // pred_check_branch
      %4926 = sbr.rel (0) target = $region97
    $region96: #{tpu_custom_call.1} parent=1 // pred_region
      %4927 = dma.done [#allocation4], 1024
    $region97: #{tpu_custom_call.1} parent=1 // pred_fallthru
      _
    %4928 = vsyncpa [#allocation3], 1
    %4929 = vsyncpa [#allocation6], 1
    %4930 = vsyncpa [#allocation9], 1
    %4931 = vsyncpa [#allocation12], 1
    %4932 = vsyncpa [#allocation15], 1
    %4933 = vsyncpa [#allocation4], 1

</llo_original>
